<compile_context>
chip_gen: v5e
topology: v5e:2x2
jax: 0.10.0
libtpu: 0.0.40
codegen_flags: <defaults>
</compile_context>

<pallas_src>
import functools

import jax
import jax.numpy as jnp
from jax.experimental import pallas as pl
from jax.experimental.pallas import tpu as pltpu


def _round_up(x, m):
    return ((x + m - 1) // m) * m


def _cdiv(a, b):
    return -(-a // b)


def _tpu_generation_info():
    """(tensorcores_per_chip, vmem_bytes_per_core), defensively queried."""
    num_tc = 1
    vmem = 128 * 1024 * 1024  # v5e / v6e physical VMEM per TC
    try:
        dev = jax.devices()[0]
        kind = (getattr(dev, "device_kind", "") or "").lower()
        if "v7" in kind or "7x" in kind:
            num_tc, vmem = 2, 64 * 1024 * 1024  # v7x: 2 TCs, 64 MiB VMEM each
    except Exception:
        pass
    try:
        info = pltpu.get_tpu_info()
        vmem = int(getattr(info, "vmem_capacity_bytes", vmem))
    except Exception:
        pass
    return num_tc, vmem


def _policy_kernel(min_log, max_log, num_actions, compute_dtype,
                   x_ref,
                   w1_ref, b1_ref,
                   w2_ref, b2_ref,
                   w3_ref, b3_ref,
                   wh_ref, bh_ref,
                   out_ref):
    # In-kernel cast of the (f32) x block to the compute dtype: keeps HBM
    # traffic for x at 4 B/elem (no separate XLA cast pass in the wrapper).
    x = x_ref[...].astype(compute_dtype)
    # h1 = relu(x @ W1 + b1)   (MXU matmul, f32 accumulation; bias+ReLU on VPU)
    h = jnp.dot(x, w1_ref[...], preferred_element_type=jnp.float32)
    h = jnp.maximum(h + b1_ref[...], 0.0).astype(compute_dtype)
    # h2 = relu(h1 @ W2 + b2)
    h = jnp.dot(h, w2_ref[...], preferred_element_type=jnp.float32)
    h = jnp.maximum(h + b2_ref[...], 0.0).astype(compute_dtype)
    # h3 = relu(h2 @ W3 + b3)
    h = jnp.dot(h, w3_ref[...], preferred_element_type=jnp.float32)
    h = jnp.maximum(h + b3_ref[...], 0.0).astype(compute_dtype)
    # Fused heads: one matmul producing [mean | log_std] in a single lane-wider
    # (tile, 2A) block.  Columns >= num_actions get clamp+exp (std, on the EUP);
    # the rest pass through (mean).  Lane-mask select avoids sub-128 slicing.
    y = jnp.dot(h, wh_ref[...], preferred_element_type=jnp.float32) + bh_ref[...]
    col = jax.lax.broadcasted_iota(jnp.int32, y.shape, 1)
    std = jnp.exp(jnp.clip(y, min_log, max_log))
    out_ref[...] = jnp.where(col < num_actions, y, std).astype(out_ref.dtype)


def fuse_params(params, use_bf16=True):
    """One-time prep: transpose-free fused head weight/bias + compute-dtype cast.

    Input params: w1,b1,w2,b2,w3,b3,w_mean,b_mean,w_log_std,b_log_std with
    weights already (in, out) and biases (1, out).  Do this OUTSIDE the hot
    loop so the per-call path is just the pallas_call.
    """
    cd = jnp.bfloat16 if use_bf16 else jnp.float32
    wh = jnp.concatenate([params["w_mean"], params["w_log_std"]], axis=1)
    bh = jnp.concatenate([params["b_mean"], params["b_log_std"]], axis=1)
    return {
        "w1": params["w1"].astype(cd), "b1": params["b1"].astype(jnp.float32),
        "w2": params["w2"].astype(cd), "b2": params["b2"].astype(jnp.float32),
        "w3": params["w3"].astype(cd), "b3": params["b3"].astype(jnp.float32),
        "wh": wh.astype(cd), "bh": bh.astype(jnp.float32),
    }


def policy_forward(x, fp, *, min_log=-20.0, max_log=2.0, batch_tile=None):
    """Pallas implementation of PolicyNN.forward.

    x:  (B, obs_size) float32 (fed to the kernel as-is; cast happens in-kernel)
    fp: output of fuse_params() (dtype of fp['w1'] selects bf16/f32 compute)
    Returns (mean, std): each (B, num_actions) float32.
    batch_tile=None -> auto (grid=1 on single-TC chips, even grid on v7x);
    pass an int to sweep manually.
    """
    B, obs_size = x.shape
    compute_dtype = fp["w1"].dtype
    itemsize = jnp.dtype(compute_dtype).itemsize
    h1, h2, h3 = fp["w1"].shape[1], fp["w2"].shape[1], fp["w3"].shape[1]
    A = fp["wh"].shape[1] // 2

    num_tc, vmem_per_core = _tpu_generation_info()

    # Per-row VMEM footprint: double-buffered f32 x + out blocks, in-kernel
    # compute-dtype x copy, per-layer f32 matmul result + compute-dtype cast,
    # f32 head accumulator.  ~1.2 KB/row for obs=32 / hidden 64-64-32 / A=4.
    row_bytes = (obs_size * 4 * 2
                 + 2 * A * 4 * 2
                 + obs_size * itemsize
                 + (h1 + h2 + h3) * (4 + itemsize)
                 + 2 * A * 4)
    weight_bytes = 2 * sum(int(v.size) * v.dtype.itemsize for v in fp.values())
    budget = int(0.75 * vmem_per_core) - weight_bytes
    max_rows = max(8, budget // max(row_bytes, 1))

    # Batch tile: sublane-aligned (8 rows, f32 blocks).  Single grid step on
    # single-TC chips (every extra step is pure serial overhead); a multiple of
    # the core count on v7x so the "parallel" axis feeds both TensorCores.
    sub = 8
    if batch_tile is not None:
        tile = _round_up(max(sub, min(int(batch_tile), _round_up(B, sub))), sub)
    else:
        step_quantum = 1 if num_tc <= 1 else num_tc
        n_steps = step_quantum
        while _cdiv(B, n_steps) > max_rows:
            n_steps += step_quantum
        tile = _round_up(_cdiv(B, n_steps), sub)
    Bp = _round_up(B, tile)
    if Bp != B:
        x = jnp.pad(x, ((0, Bp - B), (0, 0)))
    grid = (Bp // tile,)

    # Only raise the scoped VMEM limit if the estimate could exceed the
    # smallest default (v5e 16 MiB); never ask for more than 0.75x the chip's
    # per-core physical VMEM (64 MiB on v7x, 128 MiB on v5e/v6e).
    vmem_est = tile * row_bytes + weight_bytes
    cp_kwargs = dict(dimension_semantics=("parallel",))
    if vmem_est > 12 * 1024 * 1024:
        cp_kwargs["vmem_limit_bytes"] = int(
            min(max(2 * vmem_est, 16 * 1024 * 1024), 0.75 * vmem_per_core))
    compiler_params = pltpu.CompilerParams(**cp_kwargs)

    kernel = functools.partial(_policy_kernel, float(min_log), float(max_log),
                               A, compute_dtype)

    def const_spec(arr):
        # Constant block index -> weights/biases stay resident in VMEM across
        # grid steps (no per-step re-DMA).
        return pl.BlockSpec(arr.shape, lambda i: (0, 0))

    out = pl.pallas_call(
        kernel,
        out_shape=jax.ShapeDtypeStruct((Bp, 2 * A), jnp.float32),
        grid=grid,
        in_specs=[
            pl.BlockSpec((tile, obs_size), lambda i: (i, 0)),
            const_spec(fp["w1"]), const_spec(fp["b1"]),
            const_spec(fp["w2"]), const_spec(fp["b2"]),
            const_spec(fp["w3"]), const_spec(fp["b3"]),
            const_spec(fp["wh"]), const_spec(fp["bh"]),
        ],
        out_specs=pl.BlockSpec((tile, 2 * A), lambda i: (i, 0)),
        compiler_params=compiler_params,
    )(x, fp["w1"], fp["b1"], fp["w2"], fp["b2"], fp["w3"], fp["b3"],
      fp["wh"], fp["bh"])

    # Split inside the same jit as the kernel so XLA fuses it with downstream
    # consumers (no standalone copy passes).  At very large B, prefer returning
    # the packed (B, 2A) array and splitting at the consumer.
    mean = out[:B, :A]
    std = out[:B, A:]
    return mean, std


def init_params(key, obs_size, hidden, num_actions):
    """Deterministic init mirroring the PyTorch module's __init__ distributions."""
    h1, h2, h3 = hidden
    keys = jax.random.split(key, 10)

    def linear(kw, kb, fan_in, fan_out, bound=None):
        # PyTorch default: U(-1/sqrt(fan_in), 1/sqrt(fan_in)) for W and b.
        wb = (1.0 / jnp.sqrt(fan_in)) if bound is None else bound
        bb = 1.0 / jnp.sqrt(fan_in)
        w = jax.random.uniform(kw, (fan_in, fan_out), jnp.float32, -wb, wb)
        b = jax.random.uniform(kb, (1, fan_out), jnp.float32, -bb, bb)
        return w, b

    w1, b1 = linear(keys[0], keys[1], obs_size, h1)
    w2, b2 = linear(keys[2], keys[3], h1, h2)
    w3, b3 = linear(keys[4], keys[5], h2, h3)
    # mean / log_std weights: nn.init.uniform_(-0.003, 0.003); biases default.
    wm, bm = linear(keys[6], keys[7], h3, num_actions, bound=0.003)
    ws, bs = linear(keys[8], keys[9], h3, num_actions, bound=0.003)
    return {"w1": w1, "b1": b1, "w2": w2, "b2": b2, "w3": w3, "b3": b3,
            "w_mean": wm, "b_mean": bm, "w_log_std": ws, "b_log_std": bs}


def policy_forward_ref(x, params, *, min_log=-20.0, max_log=2.0):
    """Pure-JAX f32 reference for correctness check."""
    h = jnp.maximum(x @ params["w1"] + params["b1"], 0.0)
    h = jnp.maximum(h @ params["w2"] + params["b2"], 0.0)
    h = jnp.maximum(h @ params["w3"] + params["b3"], 0.0)
    mean = h @ params["w_mean"] + params["b_mean"]
    std = jnp.exp(jnp.clip(h @ params["w_log_std"] + params["b_log_std"],
                           min_log, max_log))
    return mean, std


if __name__ == "__main__":
    # Shapes consistent with the module: obs_size=32, hidden=(64,64,32),
    # num_actions=4, batch=1024.  Auto tile -> grid=(1,) on v5e/v6e (single TC),
    # grid=(2,) on dual-TC v7x.
    obs_size = 32
    hidden = (64, 64, 32)
    num_actions = 4
    batch = 1024

    key = jax.random.PRNGKey(0)
    kx, kp = jax.random.split(key)
    x = jax.random.normal(kx, (batch, obs_size), jnp.float32)
    params = init_params(kp, obs_size, hidden, num_actions)

    mean_ref, std_ref = policy_forward_ref(x, params)

    fwd = jax.jit(policy_forward,
                  static_argnames=("min_log", "max_log", "batch_tile"))

    # Exact-precision path (f32 operands): tight check against the reference.
    fused32 = fuse_params(params, use_bf16=False)
    mean32, std32 = fwd(x, fused32)
    jax.block_until_ready((mean32, std32))
    assert jnp.allclose(mean32, mean_ref, atol=1e-5, rtol=1e-5)
    assert jnp.allclose(std32, std_ref, atol=1e-5, rtol=1e-5)

    # Fast path (bf16 operands, f32 accumulation, in-kernel x cast).
    # Note: std is the noisier output in bf16 (exp amplifies the compounded
    # activation error near the clamp ceiling); 2e-2 tolerances cover it.
    fused = fuse_params(params, use_bf16=True)
    mean, std = fwd(x, fused)
    jax.block_until_ready((mean, std))
    assert mean.shape == (batch, num_actions) and std.shape == (batch, num_actions)
    assert jnp.all(std > 0.0)
    assert jnp.allclose(mean, mean_ref, atol=2e-2, rtol=2e-2)
    assert jnp.allclose(std, std_ref, atol=2e-2, rtol=2e-2)

    # Manual-tile override path still works (for sweeps on real workloads).
    mean_t, std_t = fwd(x, fused, batch_tile=256)
    jax.block_until_ready((mean_t, std_t))
    assert jnp.allclose(mean_t, mean_ref, atol=2e-2, rtol=2e-2)

    # TODO(synk): sample_action / scale_action (Normal rsample, tanh squash,
    # log_prob) are stochastic sampling glue, not part of forward(); left
    # outside the kernel.

    print("KERNEL_OK")
</pallas_src>

<mosaic_0001>
module attributes {stable_mosaic.version = 11 : i64} {
  func.func @_policy_kernel(%arg0: i32, %arg1: memref<1024x32xf32, #tpu.memory_space<vmem>>, %arg2: memref<32x64xf32, #tpu.memory_space<vmem>>, %arg3: memref<1x64xf32, #tpu.memory_space<vmem>>, %arg4: memref<64x64xf32, #tpu.memory_space<vmem>>, %arg5: memref<1x64xf32, #tpu.memory_space<vmem>>, %arg6: memref<64x32xf32, #tpu.memory_space<vmem>>, %arg7: memref<1x32xf32, #tpu.memory_space<vmem>>, %arg8: memref<32x8xf32, #tpu.memory_space<vmem>>, %arg9: memref<1x8xf32, #tpu.memory_space<vmem>>, %arg10: memref<1024x8xf32, #tpu.memory_space<vmem>>) attributes {dimension_semantics = [#tpu.dimension_semantics<parallel>], iteration_bounds = array<i64: 1>, scalar_prefetch = 0 : i64, scratch_operands = 0 : i64, tpu.core_type = #tpu.core_type<tc>, window_params = [{transform_indices = @transform_0, window_bounds = array<i64: 1024, 32>}, {pipeline_mode = #tpu.pipeline_mode<synchronous>, transform_indices = @transform_1, window_bounds = array<i64: 32, 64>}, {pipeline_mode = #tpu.pipeline_mode<synchronous>, transform_indices = @transform_2, window_bounds = array<i64: 1, 64>}, {pipeline_mode = #tpu.pipeline_mode<synchronous>, transform_indices = @transform_3, window_bounds = array<i64: 64, 64>}, {pipeline_mode = #tpu.pipeline_mode<synchronous>, transform_indices = @transform_4, window_bounds = array<i64: 1, 64>}, {pipeline_mode = #tpu.pipeline_mode<synchronous>, transform_indices = @transform_5, window_bounds = array<i64: 64, 32>}, {pipeline_mode = #tpu.pipeline_mode<synchronous>, transform_indices = @transform_6, window_bounds = array<i64: 1, 32>}, {pipeline_mode = #tpu.pipeline_mode<synchronous>, transform_indices = @transform_7, window_bounds = array<i64: 32, 8>}, {pipeline_mode = #tpu.pipeline_mode<synchronous>, transform_indices = @transform_8, window_bounds = array<i64: 1, 8>}, {transform_indices = @transform_9, window_bounds = array<i64: 1024, 8>}]} {
    %c0 = arith.constant 0 : index
    %c0_0 = arith.constant 0 : index
    %0 = vector.load %arg1[%c0, %c0_0] : memref<1024x32xf32, #tpu.memory_space<vmem>>, vector<1024x32xf32>
    %c0_1 = arith.constant 0 : index
    %c0_2 = arith.constant 0 : index
    %1 = vector.load %arg2[%c0_1, %c0_2] : memref<32x64xf32, #tpu.memory_space<vmem>>, vector<32x64xf32>
    %cst = arith.constant dense<0.000000e+00> : vector<1024x64xf32>
    %2 = tpu.matmul %0, %1, %cst {dimension_numbers = #tpu.dot_dimension_numbers<[1], [0], [0], [1], [0, 0, 1, 1], [], []>} : vector<1024x32xf32>, vector<32x64xf32>, vector<1024x64xf32> -> vector<1024x64xf32>
    %c0_3 = arith.constant 0 : index
    %c0_4 = arith.constant 0 : index
    %3 = vector.load %arg3[%c0_3, %c0_4] : memref<1x64xf32, #tpu.memory_space<vmem>>, vector<1x64xf32>
    %4 = vector.broadcast %3 : vector<1x64xf32> to vector<1024x64xf32>
    %5 = arith.addf %2, %4 : vector<1024x64xf32>
    %cst_5 = arith.constant 0.000000e+00 : f32
    %6 = vector.broadcast %cst_5 : f32 to vector<1024x64xf32>
    %7 = arith.maximumf %5, %6 : vector<1024x64xf32>
    %c0_6 = arith.constant 0 : index
    %c0_7 = arith.constant 0 : index
    %8 = vector.load %arg4[%c0_6, %c0_7] : memref<64x64xf32, #tpu.memory_space<vmem>>, vector<64x64xf32>
    %cst_8 = arith.constant dense<0.000000e+00> : vector<1024x64xf32>
    %9 = tpu.matmul %7, %8, %cst_8 {dimension_numbers = #tpu.dot_dimension_numbers<[1], [0], [0], [1], [0, 0, 1, 1], [], []>} : vector<1024x64xf32>, vector<64x64xf32>, vector<1024x64xf32> -> vector<1024x64xf32>
    %c0_9 = arith.constant 0 : index
    %c0_10 = arith.constant 0 : index
    %10 = vector.load %arg5[%c0_9, %c0_10] : memref<1x64xf32, #tpu.memory_space<vmem>>, vector<1x64xf32>
    %11 = vector.broadcast %10 : vector<1x64xf32> to vector<1024x64xf32>
    %12 = arith.addf %9, %11 : vector<1024x64xf32>
    %cst_11 = arith.constant 0.000000e+00 : f32
    %13 = vector.broadcast %cst_11 : f32 to vector<1024x64xf32>
    %14 = arith.maximumf %12, %13 : vector<1024x64xf32>
    %c0_12 = arith.constant 0 : index
    %c0_13 = arith.constant 0 : index
    %15 = vector.load %arg6[%c0_12, %c0_13] : memref<64x32xf32, #tpu.memory_space<vmem>>, vector<64x32xf32>
    %cst_14 = arith.constant dense<0.000000e+00> : vector<1024x32xf32>
    %16 = tpu.matmul %14, %15, %cst_14 {dimension_numbers = #tpu.dot_dimension_numbers<[1], [0], [0], [1], [0, 0, 1, 1], [], []>} : vector<1024x64xf32>, vector<64x32xf32>, vector<1024x32xf32> -> vector<1024x32xf32>
    %c0_15 = arith.constant 0 : index
    %c0_16 = arith.constant 0 : index
    %17 = vector.load %arg7[%c0_15, %c0_16] : memref<1x32xf32, #tpu.memory_space<vmem>>, vector<1x32xf32>
    %18 = vector.broadcast %17 : vector<1x32xf32> to vector<1024x32xf32>
    %19 = arith.addf %16, %18 : vector<1024x32xf32>
    %cst_17 = arith.constant 0.000000e+00 : f32
    %20 = vector.broadcast %cst_17 : f32 to vector<1024x32xf32>
    %21 = arith.maximumf %19, %20 : vector<1024x32xf32>
    %c0_18 = arith.constant 0 : index
    %c0_19 = arith.constant 0 : index
    %22 = vector.load %arg8[%c0_18, %c0_19] : memref<32x8xf32, #tpu.memory_space<vmem>>, vector<32x8xf32>
    %cst_20 = arith.constant dense<0.000000e+00> : vector<1024x8xf32>
    %23 = tpu.matmul %21, %22, %cst_20 {dimension_numbers = #tpu.dot_dimension_numbers<[1], [0], [0], [1], [0, 0, 1, 1], [], []>} : vector<1024x32xf32>, vector<32x8xf32>, vector<1024x8xf32> -> vector<1024x8xf32>
    %c0_21 = arith.constant 0 : index
    %c0_22 = arith.constant 0 : index
    %24 = vector.load %arg9[%c0_21, %c0_22] : memref<1x8xf32, #tpu.memory_space<vmem>>, vector<1x8xf32>
    %25 = vector.broadcast %24 : vector<1x8xf32> to vector<1024x8xf32>
    %26 = arith.addf %23, %25 : vector<1024x8xf32>
    %27 = tpu.iota {dimensions = array<i32: 1>} : vector<1024x8xi32>
    %cst_23 = arith.constant -2.000000e+01 : f32
    %cst_24 = arith.constant 2.000000e+00 : f32
    %28 = vector.broadcast %cst_23 : f32 to vector<1024x8xf32>
    %29 = arith.maximumf %28, %26 : vector<1024x8xf32>
    %30 = vector.broadcast %cst_24 : f32 to vector<1024x8xf32>
    %31 = arith.minimumf %30, %29 : vector<1024x8xf32>
    %32 = math.exp %31 : vector<1024x8xf32>
    %c4_i32 = arith.constant 4 : i32
    %33 = vector.broadcast %c4_i32 : i32 to vector<1024x8xi32>
    %34 = arith.cmpi slt, %27, %33 : vector<1024x8xi32>
    %35 = arith.select %34, %26, %32 : vector<1024x8xi1>, vector<1024x8xf32>
    %c0_25 = arith.constant 0 : index
    %c0_26 = arith.constant 0 : index
    %36 = vector.load %arg10[%c0_25, %c0_26] : memref<1024x8xf32, #tpu.memory_space<vmem>>, vector<1024x8xf32>
    tpu.vector_store %arg10[%c0_25, %c0_26], %35 {strides = array<i32>} : memref<1024x8xf32, #tpu.memory_space<vmem>>, vector<1024x8xf32>,
    return
  }
  func.func @transform_0(%arg0: i32) -> (i32, i32) {
    %c0_i32 = arith.constant 0 : i32
    %c0_i32_0 = arith.constant 0 : i32
    return %arg0, %c0_i32 : i32, i32
  }
  func.func @transform_1(%arg0: i32) -> (i32, i32) {
    %c0_i32 = arith.constant 0 : i32
    %c0_i32_0 = arith.constant 0 : i32
    %c0_i32_1 = arith.constant 0 : i32
    return %c0_i32, %c0_i32_0 : i32, i32
  }
  func.func @transform_2(%arg0: i32) -> (i32, i32) {
    %c0_i32 = arith.constant 0 : i32
    %c0_i32_0 = arith.constant 0 : i32
    %c0_i32_1 = arith.constant 0 : i32
    return %c0_i32, %c0_i32_0 : i32, i32
  }
  func.func @transform_3(%arg0: i32) -> (i32, i32) {
    %c0_i32 = arith.constant 0 : i32
    %c0_i32_0 = arith.constant 0 : i32
    %c0_i32_1 = arith.constant 0 : i32
    return %c0_i32, %c0_i32_0 : i32, i32
  }
  func.func @transform_4(%arg0: i32) -> (i32, i32) {
    %c0_i32 = arith.constant 0 : i32
    %c0_i32_0 = arith.constant 0 : i32
    %c0_i32_1 = arith.constant 0 : i32
    return %c0_i32, %c0_i32_0 : i32, i32
  }
  func.func @transform_5(%arg0: i32) -> (i32, i32) {
    %c0_i32 = arith.constant 0 : i32
    %c0_i32_0 = arith.constant 0 : i32
    %c0_i32_1 = arith.constant 0 : i32
    return %c0_i32, %c0_i32_0 : i32, i32
  }
  func.func @transform_6(%arg0: i32) -> (i32, i32) {
    %c0_i32 = arith.constant 0 : i32
    %c0_i32_0 = arith.constant 0 : i32
    %c0_i32_1 = arith.constant 0 : i32
    return %c0_i32, %c0_i32_0 : i32, i32
  }
  func.func @transform_7(%arg0: i32) -> (i32, i32) {
    %c0_i32 = arith.constant 0 : i32
    %c0_i32_0 = arith.constant 0 : i32
    %c0_i32_1 = arith.constant 0 : i32
    return %c0_i32, %c0_i32_0 : i32, i32
  }
  func.func @transform_8(%arg0: i32) -> (i32, i32) {
    %c0_i32 = arith.constant 0 : i32
    %c0_i32_0 = arith.constant 0 : i32
    %c0_i32_1 = arith.constant 0 : i32
    return %c0_i32, %c0_i32_0 : i32, i32
  }
  func.func @transform_9(%arg0: i32) -> (i32, i32) {
    %c0_i32 = arith.constant 0 : i32
    %c0_i32_0 = arith.constant 0 : i32
    return %arg0, %c0_i32 : i32, i32
  }
}

</mosaic_0001>

<llo_original>
// kernel: policy_forward.1
$region0: #{policy_forward.1}
  #allocation0 [shape = 'u32[]', space=smem, size = 0x4, offset = 0x4, fixed_abs, tag = 'smem constant byte address 0x4 - core index']
  #allocation1 [shape = 'u32[72,128]{1,0:T(1,128)}', space=vmem, size = 0x9000, scoped, tag = 'internal scratch']
  %s0 = inlined_call_operand.vmem [shape: f32[1024,32], index: 0, kind: input, shape index: {}]
  %s1 = inlined_call_operand.vmem [shape: f32[32,64], index: 1, kind: input, shape index: {}]
  %s2 = inlined_call_operand.vmem [shape: f32[1,64], index: 2, kind: input, shape index: {}]
  %s3 = inlined_call_operand.vmem [shape: f32[64,64], index: 3, kind: input, shape index: {}]
  %s4 = inlined_call_operand.vmem [shape: f32[1,64], index: 4, kind: input, shape index: {}]
  %s5 = inlined_call_operand.vmem [shape: f32[64,32], index: 5, kind: input, shape index: {}]
  %s6 = inlined_call_operand.vmem [shape: f32[1,32], index: 6, kind: input, shape index: {}]
  %s7 = inlined_call_operand.vmem [shape: f32[32,8], index: 7, kind: input, shape index: {}]
  %s8 = inlined_call_operand.vmem [shape: f32[1,8], index: 8, kind: input, shape index: {}]
  %s9 = inlined_call_operand.vmem [shape: f32[1024,8], index: 9, kind: output, shape index: {}]
  %s10 = sld [smem:[#allocation0]]
  $region46: #{policy_forward.1} parent=0
    _
  %s12 = ssub.s32 1, %s10
  %s13 = scalar_select 0, %s12, %s10
  // Predicated region
  $region2: #{policy_forward.1} parent=0 // pred_check
    _
  $region3: #{policy_forward.1} parent=0 // pred_check_branch
    %15 = sbr.rel (0) target = $region5
  $region4: #{policy_forward.1} parent=0 // pred_region
    _
  $region5: #{policy_forward.1} parent=0 // pred_fallthru
    _
  // Predicated region
  $region6: #{policy_forward.1} parent=0 // pred_check
    _
  $region7: #{policy_forward.1} parent=0 // pred_check_branch
    %17 = sbr.rel (0) target = $region9
  $region8: #{policy_forward.1} parent=0 // pred_region
    _
  $region9: #{policy_forward.1} parent=0 // pred_fallthru
    _
  // Predicated region
  $region10: #{policy_forward.1} parent=0 // pred_check
    _
  $region11: #{policy_forward.1} parent=0 // pred_check_branch
    %19 = sbr.rel (0) target = $region13
  $region12: #{policy_forward.1} parent=0 // pred_region
    _
  $region13: #{policy_forward.1} parent=0 // pred_fallthru
    _
  // Predicated region
  $region14: #{policy_forward.1} parent=0 // pred_check
    _
  $region15: #{policy_forward.1} parent=0 // pred_check_branch
    %21 = sbr.rel (0) target = $region17
  $region16: #{policy_forward.1} parent=0 // pred_region
    _
  $region17: #{policy_forward.1} parent=0 // pred_fallthru
    _
  // Predicated region
  $region18: #{policy_forward.1} parent=0 // pred_check
    _
  $region19: #{policy_forward.1} parent=0 // pred_check_branch
    %23 = sbr.rel (0) target = $region21
  $region20: #{policy_forward.1} parent=0 // pred_region
    _
  $region21: #{policy_forward.1} parent=0 // pred_fallthru
    _
  // Predicated region
  $region22: #{policy_forward.1} parent=0 // pred_check
    _
  $region23: #{policy_forward.1} parent=0 // pred_check_branch
    %25 = sbr.rel (0) target = $region25
  $region24: #{policy_forward.1} parent=0 // pred_region
    _
  $region25: #{policy_forward.1} parent=0 // pred_fallthru
    _
  // Predicated region
  $region26: #{policy_forward.1} parent=0 // pred_check
    _
  $region27: #{policy_forward.1} parent=0 // pred_check_branch
    %27 = sbr.rel (0) target = $region29
  $region28: #{policy_forward.1} parent=0 // pred_region
    _
  $region29: #{policy_forward.1} parent=0 // pred_fallthru
    _
  // Predicated region
  $region30: #{policy_forward.1} parent=0 // pred_check
    _
  $region31: #{policy_forward.1} parent=0 // pred_check_branch
    %29 = sbr.rel (0) target = $region33
  $region32: #{policy_forward.1} parent=0 // pred_region
    _
  $region33: #{policy_forward.1} parent=0 // pred_fallthru
    _
  // Predicated region
  $region34: #{policy_forward.1} parent=0 // pred_check
    _
  $region35: #{policy_forward.1} parent=0 // pred_check_branch
    %31 = sbr.rel (0) target = $region37
  $region36: #{policy_forward.1} parent=0 // pred_region
    _
  $region37: #{policy_forward.1} parent=0 // pred_fallthru
    _
  %v32 = vld [vmem:[%s0] sm:$0xff]
  %v33 = vld [vmem:[%s0 + $0x8] sm:$0xff]
  %v34 = vld [vmem:[%s0 + $0x10] sm:$0xff]
  %v35 = vld [vmem:[%s0 + $0x18] sm:$0xff]
  %v36 = vld [vmem:[%s0 + $0x20] sm:$0xff]
  %v37 = vld [vmem:[%s0 + $0x28] sm:$0xff]
  %v38 = vld [vmem:[%s0 + $0x30] sm:$0xff]
  %v39 = vld [vmem:[%s0 + $0x38] sm:$0xff]
  %v40 = vld [vmem:[%s0 + $0x40] sm:$0xff]
  %v41 = vld [vmem:[%s0 + $0x48] sm:$0xff]
  %v42 = vld [vmem:[%s0 + $0x50] sm:$0xff]
  %v43 = vld [vmem:[%s0 + $0x58] sm:$0xff]
  %v44 = vld [vmem:[%s0 + $0x60] sm:$0xff]
  %v45 = vld [vmem:[%s0 + $0x68] sm:$0xff]
  %v46 = vld [vmem:[%s0 + $0x70] sm:$0xff]
  %v47 = vld [vmem:[%s0 + $0x78] sm:$0xff]
  %v48 = vld [vmem:[%s0 + $0x80] sm:$0xff]
  %v49 = vld [vmem:[%s0 + $0x88] sm:$0xff]
  %v50 = vld [vmem:[%s0 + $0x90] sm:$0xff]
  %v51 = vld [vmem:[%s0 + $0x98] sm:$0xff]
  %v52 = vld [vmem:[%s0 + $0xa0] sm:$0xff]
  %v53 = vld [vmem:[%s0 + $0xa8] sm:$0xff]
  %v54 = vld [vmem:[%s0 + $0xb0] sm:$0xff]
  %v55 = vld [vmem:[%s0 + $0xb8] sm:$0xff]
  %v56 = vld [vmem:[%s0 + $0xc0] sm:$0xff]
  %v57 = vld [vmem:[%s0 + $0xc8] sm:$0xff]
  %v58 = vld [vmem:[%s0 + $0xd0] sm:$0xff]
  %v59 = vld [vmem:[%s0 + $0xd8] sm:$0xff]
  %v60 = vld [vmem:[%s0 + $0xe0] sm:$0xff]
  %v61 = vld [vmem:[%s0 + $0xe8] sm:$0xff]
  %v62 = vld [vmem:[%s0 + $0xf0] sm:$0xff]
  %v63 = vld [vmem:[%s0 + $0xf8] sm:$0xff]
  %v64 = vld [vmem:[%s0 + $0x100] sm:$0xff]
  %v65 = vld [vmem:[%s0 + $0x108] sm:$0xff]
  %v66 = vld [vmem:[%s0 + $0x110] sm:$0xff]
  %v67 = vld [vmem:[%s0 + $0x118] sm:$0xff]
  %v68 = vld [vmem:[%s0 + $0x120] sm:$0xff]
  %v69 = vld [vmem:[%s0 + $0x128] sm:$0xff]
  %v70 = vld [vmem:[%s0 + $0x130] sm:$0xff]
  %v71 = vld [vmem:[%s0 + $0x138] sm:$0xff]
  %v72 = vld [vmem:[%s0 + $0x140] sm:$0xff]
  %v73 = vld [vmem:[%s0 + $0x148] sm:$0xff]
  %v74 = vld [vmem:[%s0 + $0x150] sm:$0xff]
  %v75 = vld [vmem:[%s0 + $0x158] sm:$0xff]
  %v76 = vld [vmem:[%s0 + $0x160] sm:$0xff]
  %v77 = vld [vmem:[%s0 + $0x168] sm:$0xff]
  %v78 = vld [vmem:[%s0 + $0x170] sm:$0xff]
  %v79 = vld [vmem:[%s0 + $0x178] sm:$0xff]
  %v80 = vld [vmem:[%s0 + $0x180] sm:$0xff]
  %v81 = vld [vmem:[%s0 + $0x188] sm:$0xff]
  %v82 = vld [vmem:[%s0 + $0x190] sm:$0xff]
  %v83 = vld [vmem:[%s0 + $0x198] sm:$0xff]
  %v84 = vld [vmem:[%s0 + $0x1a0] sm:$0xff]
  %v85 = vld [vmem:[%s0 + $0x1a8] sm:$0xff]
  %v86 = vld [vmem:[%s0 + $0x1b0] sm:$0xff]
  %v87 = vld [vmem:[%s0 + $0x1b8] sm:$0xff]
  %v88 = vld [vmem:[%s0 + $0x1c0] sm:$0xff]
  %v89 = vld [vmem:[%s0 + $0x1c8] sm:$0xff]
  %v90 = vld [vmem:[%s0 + $0x1d0] sm:$0xff]
  %v91 = vld [vmem:[%s0 + $0x1d8] sm:$0xff]
  %v92 = vld [vmem:[%s0 + $0x1e0] sm:$0xff]
  %v93 = vld [vmem:[%s0 + $0x1e8] sm:$0xff]
  %v94 = vld [vmem:[%s0 + $0x1f0] sm:$0xff]
  %v95 = vld [vmem:[%s0 + $0x1f8] sm:$0xff]
  %v96 = vld [vmem:[%s0 + $0x200] sm:$0xff]
  %v97 = vld [vmem:[%s0 + $0x208] sm:$0xff]
  %v98 = vld [vmem:[%s0 + $0x210] sm:$0xff]
  %v99 = vld [vmem:[%s0 + $0x218] sm:$0xff]
  %v100 = vld [vmem:[%s0 + $0x220] sm:$0xff]
  %v101 = vld [vmem:[%s0 + $0x228] sm:$0xff]
  %v102 = vld [vmem:[%s0 + $0x230] sm:$0xff]
  %v103 = vld [vmem:[%s0 + $0x238] sm:$0xff]
  %v104 = vld [vmem:[%s0 + $0x240] sm:$0xff]
  %v105 = vld [vmem:[%s0 + $0x248] sm:$0xff]
  %v106 = vld [vmem:[%s0 + $0x250] sm:$0xff]
  %v107 = vld [vmem:[%s0 + $0x258] sm:$0xff]
  %v108 = vld [vmem:[%s0 + $0x260] sm:$0xff]
  %v109 = vld [vmem:[%s0 + $0x268] sm:$0xff]
  %v110 = vld [vmem:[%s0 + $0x270] sm:$0xff]
  %v111 = vld [vmem:[%s0 + $0x278] sm:$0xff]
  %v112 = vld [vmem:[%s0 + $0x280] sm:$0xff]
  %v113 = vld [vmem:[%s0 + $0x288] sm:$0xff]
  %v114 = vld [vmem:[%s0 + $0x290] sm:$0xff]
  %v115 = vld [vmem:[%s0 + $0x298] sm:$0xff]
  %v116 = vld [vmem:[%s0 + $0x2a0] sm:$0xff]
  %v117 = vld [vmem:[%s0 + $0x2a8] sm:$0xff]
  %v118 = vld [vmem:[%s0 + $0x2b0] sm:$0xff]
  %v119 = vld [vmem:[%s0 + $0x2b8] sm:$0xff]
  %v120 = vld [vmem:[%s0 + $0x2c0] sm:$0xff]
  %v121 = vld [vmem:[%s0 + $0x2c8] sm:$0xff]
  %v122 = vld [vmem:[%s0 + $0x2d0] sm:$0xff]
  %v123 = vld [vmem:[%s0 + $0x2d8] sm:$0xff]
  %v124 = vld [vmem:[%s0 + $0x2e0] sm:$0xff]
  %v125 = vld [vmem:[%s0 + $0x2e8] sm:$0xff]
  %v126 = vld [vmem:[%s0 + $0x2f0] sm:$0xff]
  %v127 = vld [vmem:[%s0 + $0x2f8] sm:$0xff]
  %v128 = vld [vmem:[%s0 + $0x300] sm:$0xff]
  %v129 = vld [vmem:[%s0 + $0x308] sm:$0xff]
  %v130 = vld [vmem:[%s0 + $0x310] sm:$0xff]
  %v131 = vld [vmem:[%s0 + $0x318] sm:$0xff]
  %v132 = vld [vmem:[%s0 + $0x320] sm:$0xff]
  %v133 = vld [vmem:[%s0 + $0x328] sm:$0xff]
  %v134 = vld [vmem:[%s0 + $0x330] sm:$0xff]
  %v135 = vld [vmem:[%s0 + $0x338] sm:$0xff]
  %v136 = vld [vmem:[%s0 + $0x340] sm:$0xff]
  %v137 = vld [vmem:[%s0 + $0x348] sm:$0xff]
  %v138 = vld [vmem:[%s0 + $0x350] sm:$0xff]
  %v139 = vld [vmem:[%s0 + $0x358] sm:$0xff]
  %v140 = vld [vmem:[%s0 + $0x360] sm:$0xff]
  %v141 = vld [vmem:[%s0 + $0x368] sm:$0xff]
  %v142 = vld [vmem:[%s0 + $0x370] sm:$0xff]
  %v143 = vld [vmem:[%s0 + $0x378] sm:$0xff]
  %v144 = vld [vmem:[%s0 + $0x380] sm:$0xff]
  %v145 = vld [vmem:[%s0 + $0x388] sm:$0xff]
  %v146 = vld [vmem:[%s0 + $0x390] sm:$0xff]
  %v147 = vld [vmem:[%s0 + $0x398] sm:$0xff]
  %v148 = vld [vmem:[%s0 + $0x3a0] sm:$0xff]
  %v149 = vld [vmem:[%s0 + $0x3a8] sm:$0xff]
  %v150 = vld [vmem:[%s0 + $0x3b0] sm:$0xff]
  %v151 = vld [vmem:[%s0 + $0x3b8] sm:$0xff]
  %v152 = vld [vmem:[%s0 + $0x3c0] sm:$0xff]
  %v153 = vld [vmem:[%s0 + $0x3c8] sm:$0xff]
  %v154 = vld [vmem:[%s0 + $0x3d0] sm:$0xff]
  %v155 = vld [vmem:[%s0 + $0x3d8] sm:$0xff]
  %v156 = vld [vmem:[%s0 + $0x3e0] sm:$0xff]
  %v157 = vld [vmem:[%s0 + $0x3e8] sm:$0xff]
  %v158 = vld [vmem:[%s0 + $0x3f0] sm:$0xff]
  %v159 = vld [vmem:[%s0 + $0x3f8] sm:$0xff]
  %v160 = vld [vmem:[%s1] sm:$0xff]
  %v161 = vld [vmem:[%s1 + $0x8] sm:$0xff]
  %v162 = vld [vmem:[%s1 + $0x10] sm:$0xff]
  %v163 = vld [vmem:[%s1 + $0x18] sm:$0xff]
  %v164 = vld [vmem:[%s2] sm:$0x1]
  %v166 = vperm.slane %v164, 0
  %vm168 = vcmask 261120
  %v170 = vsel %vm168, %v32, 0
  %v173 = vsel %vm168, %v33, 0
  %v176 = vsel %vm168, %v34, 0
  %v179 = vsel %vm168, %v35, 0
  %v182 = vsel %vm168, %v36, 0
  %v185 = vsel %vm168, %v37, 0
  %v188 = vsel %vm168, %v38, 0
  %v191 = vsel %vm168, %v39, 0
  %v194 = vsel %vm168, %v40, 0
  %v197 = vsel %vm168, %v41, 0
  %v200 = vsel %vm168, %v42, 0
  %v203 = vsel %vm168, %v43, 0
  %v206 = vsel %vm168, %v44, 0
  %v209 = vsel %vm168, %v45, 0
  %v212 = vsel %vm168, %v46, 0
  %v215 = vsel %vm168, %v47, 0
  %v218 = vsel %vm168, %v48, 0
  %v221 = vsel %vm168, %v49, 0
  %v224 = vsel %vm168, %v50, 0
  %v227 = vsel %vm168, %v51, 0
  %v230 = vsel %vm168, %v52, 0
  %v233 = vsel %vm168, %v53, 0
  %v236 = vsel %vm168, %v54, 0
  %v239 = vsel %vm168, %v55, 0
  %v242 = vsel %vm168, %v56, 0
  %v245 = vsel %vm168, %v57, 0
  %v248 = vsel %vm168, %v58, 0
  %v251 = vsel %vm168, %v59, 0
  %v254 = vsel %vm168, %v60, 0
  %v257 = vsel %vm168, %v61, 0
  %v260 = vsel %vm168, %v62, 0
  %v263 = vsel %vm168, %v63, 0
  %v266 = vsel %vm168, %v64, 0
  %v269 = vsel %vm168, %v65, 0
  %v272 = vsel %vm168, %v66, 0
  %v275 = vsel %vm168, %v67, 0
  %v278 = vsel %vm168, %v68, 0
  %v281 = vsel %vm168, %v69, 0
  %v284 = vsel %vm168, %v70, 0
  %v287 = vsel %vm168, %v71, 0
  %v290 = vsel %vm168, %v72, 0
  %v293 = vsel %vm168, %v73, 0
  %v296 = vsel %vm168, %v74, 0
  %v299 = vsel %vm168, %v75, 0
  %v302 = vsel %vm168, %v76, 0
  %v305 = vsel %vm168, %v77, 0
  %v308 = vsel %vm168, %v78, 0
  %v311 = vsel %vm168, %v79, 0
  %v314 = vsel %vm168, %v80, 0
  %v317 = vsel %vm168, %v81, 0
  %v320 = vsel %vm168, %v82, 0
  %v323 = vsel %vm168, %v83, 0
  %v326 = vsel %vm168, %v84, 0
  %v329 = vsel %vm168, %v85, 0
  %v332 = vsel %vm168, %v86, 0
  %v335 = vsel %vm168, %v87, 0
  %v338 = vsel %vm168, %v88, 0
  %v341 = vsel %vm168, %v89, 0
  %v344 = vsel %vm168, %v90, 0
  %v347 = vsel %vm168, %v91, 0
  %v350 = vsel %vm168, %v92, 0
  %v353 = vsel %vm168, %v93, 0
  %v356 = vsel %vm168, %v94, 0
  %v359 = vsel %vm168, %v95, 0
  %v362 = vsel %vm168, %v96, 0
  %v365 = vsel %vm168, %v97, 0
  %v368 = vsel %vm168, %v98, 0
  %v371 = vsel %vm168, %v99, 0
  %v374 = vsel %vm168, %v100, 0
  %v377 = vsel %vm168, %v101, 0
  %v380 = vsel %vm168, %v102, 0
  %v383 = vsel %vm168, %v103, 0
  %v386 = vsel %vm168, %v104, 0
  %v389 = vsel %vm168, %v105, 0
  %v392 = vsel %vm168, %v106, 0
  %v395 = vsel %vm168, %v107, 0
  %v398 = vsel %vm168, %v108, 0
  %v401 = vsel %vm168, %v109, 0
  %v404 = vsel %vm168, %v110, 0
  %v407 = vsel %vm168, %v111, 0
  %v410 = vsel %vm168, %v112, 0
  %v413 = vsel %vm168, %v113, 0
  %v416 = vsel %vm168, %v114, 0
  %v419 = vsel %vm168, %v115, 0
  %v422 = vsel %vm168, %v116, 0
  %v425 = vsel %vm168, %v117, 0
  %v428 = vsel %vm168, %v118, 0
  %v431 = vsel %vm168, %v119, 0
  %v434 = vsel %vm168, %v120, 0
  %v437 = vsel %vm168, %v121, 0
  %v440 = vsel %vm168, %v122, 0
  %v443 = vsel %vm168, %v123, 0
  %v446 = vsel %vm168, %v124, 0
  %v449 = vsel %vm168, %v125, 0
  %v452 = vsel %vm168, %v126, 0
  %v455 = vsel %vm168, %v127, 0
  %v458 = vsel %vm168, %v128, 0
  %v461 = vsel %vm168, %v129, 0
  %v464 = vsel %vm168, %v130, 0
  %v467 = vsel %vm168, %v131, 0
  %v470 = vsel %vm168, %v132, 0
  %v473 = vsel %vm168, %v133, 0
  %v476 = vsel %vm168, %v134, 0
  %v479 = vsel %vm168, %v135, 0
  %v482 = vsel %vm168, %v136, 0
  %v485 = vsel %vm168, %v137, 0
  %v488 = vsel %vm168, %v138, 0
  %v491 = vsel %vm168, %v139, 0
  %v494 = vsel %vm168, %v140, 0
  %v497 = vsel %vm168, %v141, 0
  %v500 = vsel %vm168, %v142, 0
  %v503 = vsel %vm168, %v143, 0
  %v506 = vsel %vm168, %v144, 0
  %v509 = vsel %vm168, %v145, 0
  %v512 = vsel %vm168, %v146, 0
  %v515 = vsel %vm168, %v147, 0
  %v518 = vsel %vm168, %v148, 0
  %v521 = vsel %vm168, %v149, 0
  %v524 = vsel %vm168, %v150, 0
  %v527 = vsel %vm168, %v151, 0
  %v530 = vsel %vm168, %v152, 0
  %v533 = vsel %vm168, %v153, 0
  %v536 = vsel %vm168, %v154, 0
  %v539 = vsel %vm168, %v155, 0
  %v542 = vsel %vm168, %v156, 0
  %v545 = vsel %vm168, %v157, 0
  %v548 = vsel %vm168, %v158, 0
  %v551 = vsel %vm168, %v159, 0
  %553 = vmatpush.msra.mxu0 0.0
  %554 = vmatpush.msra.mxu0 0.0
  %555 = vmatpush.msra.mxu0 0.0
  %556 = vmatpush.msra.mxu0 0.0
  %557 = vmatpush.msra.mxu0 0.0
  %558 = vmatpush.msra.mxu0 0.0
  %559 = vmatpush.msra.mxu0 0.0
  %560 = vmatpush.msra.mxu0 0.0
  %561 = vmatpush.msra.mxu0 0.0
  %562 = vmatpush.msra.mxu0 0.0
  %563 = vmatpush.msra.mxu0 0.0
  %564 = vmatpush.msra.mxu0 0.0
  %565 = vmatpush.msra.mxu0 %v163
  %566 = vmatpush.msra.mxu0 %v162
  %567 = vmatpush.msra.mxu0 %v161
  %568 = vmatpush.msra.mxu0 %v160
  %569 = vmatmul.f32.gmra.mxu0 %v170
  %v570 = vpop.f32.mrf.mxu0
  %v571 = vadd.f32 %v166, %v570
  %572 = vmatmul.f32.gmra.mxu0 %v173
  %v573 = vpop.f32.mrf.mxu0
  %v574 = vadd.f32 %v166, %v573
  %575 = vmatmul.f32.gmra.mxu0 %v176
  %v576 = vpop.f32.mrf.mxu0
  %v577 = vadd.f32 %v166, %v576
  %578 = vmatmul.f32.gmra.mxu0 %v179
  %v579 = vpop.f32.mrf.mxu0
  %v580 = vadd.f32 %v166, %v579
  %581 = vmatmul.f32.gmra.mxu0 %v182
  %v582 = vpop.f32.mrf.mxu0
  %v583 = vadd.f32 %v166, %v582
  %584 = vmatmul.f32.gmra.mxu0 %v185
  %v585 = vpop.f32.mrf.mxu0
  %v586 = vadd.f32 %v166, %v585
  %587 = vmatmul.f32.gmra.mxu0 %v188
  %v588 = vpop.f32.mrf.mxu0
  %v589 = vadd.f32 %v166, %v588
  %590 = vmatmul.f32.gmra.mxu0 %v191
  %v591 = vpop.f32.mrf.mxu0
  %v592 = vadd.f32 %v166, %v591
  %593 = vmatmul.f32.gmra.mxu0 %v194
  %v594 = vpop.f32.mrf.mxu0
  %v595 = vadd.f32 %v166, %v594
  %596 = vmatmul.f32.gmra.mxu0 %v197
  %v597 = vpop.f32.mrf.mxu0
  %v598 = vadd.f32 %v166, %v597
  %599 = vmatmul.f32.gmra.mxu0 %v200
  %v600 = vpop.f32.mrf.mxu0
  %v601 = vadd.f32 %v166, %v600
  %602 = vmatmul.f32.gmra.mxu0 %v203
  %v603 = vpop.f32.mrf.mxu0
  %v604 = vadd.f32 %v166, %v603
  %605 = vmatmul.f32.gmra.mxu0 %v206
  %v606 = vpop.f32.mrf.mxu0
  %v607 = vadd.f32 %v166, %v606
  %608 = vmatmul.f32.gmra.mxu0 %v209
  %v609 = vpop.f32.mrf.mxu0
  %v610 = vadd.f32 %v166, %v609
  %611 = vmatmul.f32.gmra.mxu0 %v212
  %v612 = vpop.f32.mrf.mxu0
  %v613 = vadd.f32 %v166, %v612
  %614 = vmatmul.f32.gmra.mxu0 %v215
  %v615 = vpop.f32.mrf.mxu0
  %v616 = vadd.f32 %v166, %v615
  %617 = vmatmul.f32.gmra.mxu0 %v218
  %v618 = vpop.f32.mrf.mxu0
  %v619 = vadd.f32 %v166, %v618
  %620 = vmatmul.f32.gmra.mxu0 %v221
  %v621 = vpop.f32.mrf.mxu0
  %v622 = vadd.f32 %v166, %v621
  %623 = vmatmul.f32.gmra.mxu0 %v224
  %v624 = vpop.f32.mrf.mxu0
  %v625 = vadd.f32 %v166, %v624
  %626 = vmatmul.f32.gmra.mxu0 %v227
  %v627 = vpop.f32.mrf.mxu0
  %v628 = vadd.f32 %v166, %v627
  %629 = vmatmul.f32.gmra.mxu0 %v230
  %v630 = vpop.f32.mrf.mxu0
  %v631 = vadd.f32 %v166, %v630
  %632 = vmatmul.f32.gmra.mxu0 %v233
  %v633 = vpop.f32.mrf.mxu0
  %v634 = vadd.f32 %v166, %v633
  %635 = vmatmul.f32.gmra.mxu0 %v236
  %v636 = vpop.f32.mrf.mxu0
  %v637 = vadd.f32 %v166, %v636
  %638 = vmatmul.f32.gmra.mxu0 %v239
  %v639 = vpop.f32.mrf.mxu0
  %v640 = vadd.f32 %v166, %v639
  %641 = vmatmul.f32.gmra.mxu0 %v242
  %v642 = vpop.f32.mrf.mxu0
  %v643 = vadd.f32 %v166, %v642
  %644 = vmatmul.f32.gmra.mxu0 %v245
  %v645 = vpop.f32.mrf.mxu0
  %v646 = vadd.f32 %v166, %v645
  %647 = vmatmul.f32.gmra.mxu0 %v248
  %v648 = vpop.f32.mrf.mxu0
  %v649 = vadd.f32 %v166, %v648
  %650 = vmatmul.f32.gmra.mxu0 %v251
  %v651 = vpop.f32.mrf.mxu0
  %v652 = vadd.f32 %v166, %v651
  %653 = vmatmul.f32.gmra.mxu0 %v254
  %v654 = vpop.f32.mrf.mxu0
  %v655 = vadd.f32 %v166, %v654
  %656 = vmatmul.f32.gmra.mxu0 %v257
  %v657 = vpop.f32.mrf.mxu0
  %v658 = vadd.f32 %v166, %v657
  %659 = vmatmul.f32.gmra.mxu0 %v260
  %v660 = vpop.f32.mrf.mxu0
  %v661 = vadd.f32 %v166, %v660
  %662 = vmatmul.f32.gmra.mxu0 %v263
  %v663 = vpop.f32.mrf.mxu0
  %v664 = vadd.f32 %v166, %v663
  %665 = vmatmul.f32.gmra.mxu0 %v266
  %v666 = vpop.f32.mrf.mxu0
  %v667 = vadd.f32 %v166, %v666
  %668 = vmatmul.f32.gmra.mxu0 %v269
  %v669 = vpop.f32.mrf.mxu0
  %v670 = vadd.f32 %v166, %v669
  %671 = vmatmul.f32.gmra.mxu0 %v272
  %v672 = vpop.f32.mrf.mxu0
  %v673 = vadd.f32 %v166, %v672
  %674 = vmatmul.f32.gmra.mxu0 %v275
  %v675 = vpop.f32.mrf.mxu0
  %v676 = vadd.f32 %v166, %v675
  %677 = vmatmul.f32.gmra.mxu0 %v278
  %v678 = vpop.f32.mrf.mxu0
  %v679 = vadd.f32 %v166, %v678
  %680 = vmatmul.f32.gmra.mxu0 %v281
  %v681 = vpop.f32.mrf.mxu0
  %v682 = vadd.f32 %v166, %v681
  %683 = vmatmul.f32.gmra.mxu0 %v284
  %v684 = vpop.f32.mrf.mxu0
  %v685 = vadd.f32 %v166, %v684
  %686 = vmatmul.f32.gmra.mxu0 %v287
  %v687 = vpop.f32.mrf.mxu0
  %v688 = vadd.f32 %v166, %v687
  %689 = vmatmul.f32.gmra.mxu0 %v290
  %v690 = vpop.f32.mrf.mxu0
  %v691 = vadd.f32 %v166, %v690
  %692 = vmatmul.f32.gmra.mxu0 %v293
  %v693 = vpop.f32.mrf.mxu0
  %v694 = vadd.f32 %v166, %v693
  %695 = vmatmul.f32.gmra.mxu0 %v296
  %v696 = vpop.f32.mrf.mxu0
  %v697 = vadd.f32 %v166, %v696
  %698 = vmatmul.f32.gmra.mxu0 %v299
  %v699 = vpop.f32.mrf.mxu0
  %v700 = vadd.f32 %v166, %v699
  %701 = vmatmul.f32.gmra.mxu0 %v302
  %v702 = vpop.f32.mrf.mxu0
  %v703 = vadd.f32 %v166, %v702
  %704 = vmatmul.f32.gmra.mxu0 %v305
  %v705 = vpop.f32.mrf.mxu0
  %v706 = vadd.f32 %v166, %v705
  %707 = vmatmul.f32.gmra.mxu0 %v308
  %v708 = vpop.f32.mrf.mxu0
  %v709 = vadd.f32 %v166, %v708
  %710 = vmatmul.f32.gmra.mxu0 %v311
  %v711 = vpop.f32.mrf.mxu0
  %v712 = vadd.f32 %v166, %v711
  %713 = vmatmul.f32.gmra.mxu0 %v314
  %v714 = vpop.f32.mrf.mxu0
  %v715 = vadd.f32 %v166, %v714
  %716 = vmatmul.f32.gmra.mxu0 %v317
  %v717 = vpop.f32.mrf.mxu0
  %v718 = vadd.f32 %v166, %v717
  %719 = vmatmul.f32.gmra.mxu0 %v320
  %v720 = vpop.f32.mrf.mxu0
  %v721 = vadd.f32 %v166, %v720
  %722 = vmatmul.f32.gmra.mxu0 %v323
  %v723 = vpop.f32.mrf.mxu0
  %v724 = vadd.f32 %v166, %v723
  %725 = vmatmul.f32.gmra.mxu0 %v326
  %v726 = vpop.f32.mrf.mxu0
  %v727 = vadd.f32 %v166, %v726
  %728 = vmatmul.f32.gmra.mxu0 %v329
  %v729 = vpop.f32.mrf.mxu0
  %v730 = vadd.f32 %v166, %v729
  %731 = vmatmul.f32.gmra.mxu0 %v332
  %v732 = vpop.f32.mrf.mxu0
  %v733 = vadd.f32 %v166, %v732
  %734 = vmatmul.f32.gmra.mxu0 %v335
  %v735 = vpop.f32.mrf.mxu0
  %v736 = vadd.f32 %v166, %v735
  %737 = vmatmul.f32.gmra.mxu0 %v338
  %v738 = vpop.f32.mrf.mxu0
  %v739 = vadd.f32 %v166, %v738
  %740 = vmatmul.f32.gmra.mxu0 %v341
  %v741 = vpop.f32.mrf.mxu0
  %v742 = vadd.f32 %v166, %v741
  %743 = vmatmul.f32.gmra.mxu0 %v344
  %v744 = vpop.f32.mrf.mxu0
  %v745 = vadd.f32 %v166, %v744
  %746 = vmatmul.f32.gmra.mxu0 %v347
  %v747 = vpop.f32.mrf.mxu0
  %v748 = vadd.f32 %v166, %v747
  %749 = vmatmul.f32.gmra.mxu0 %v350
  %v750 = vpop.f32.mrf.mxu0
  %v751 = vadd.f32 %v166, %v750
  %752 = vmatmul.f32.gmra.mxu0 %v353
  %v753 = vpop.f32.mrf.mxu0
  %v754 = vadd.f32 %v166, %v753
  %755 = vmatmul.f32.gmra.mxu0 %v356
  %v756 = vpop.f32.mrf.mxu0
  %v757 = vadd.f32 %v166, %v756
  %758 = vmatmul.f32.gmra.mxu0 %v359
  %v759 = vpop.f32.mrf.mxu0
  %v760 = vadd.f32 %v166, %v759
  %761 = vmatmul.f32.gmra.mxu0 %v362
  %v762 = vpop.f32.mrf.mxu0
  %v763 = vadd.f32 %v166, %v762
  %764 = vmatmul.f32.gmra.mxu0 %v365
  %v765 = vpop.f32.mrf.mxu0
  %v766 = vadd.f32 %v166, %v765
  %767 = vmatmul.f32.gmra.mxu0 %v368
  %v768 = vpop.f32.mrf.mxu0
  %v769 = vadd.f32 %v166, %v768
  %770 = vmatmul.f32.gmra.mxu0 %v371
  %v771 = vpop.f32.mrf.mxu0
  %v772 = vadd.f32 %v166, %v771
  %773 = vmatmul.f32.gmra.mxu0 %v374
  %v774 = vpop.f32.mrf.mxu0
  %v775 = vadd.f32 %v166, %v774
  %776 = vmatmul.f32.gmra.mxu0 %v377
  %v777 = vpop.f32.mrf.mxu0
  %v778 = vadd.f32 %v166, %v777
  %779 = vmatmul.f32.gmra.mxu0 %v380
  %v780 = vpop.f32.mrf.mxu0
  %v781 = vadd.f32 %v166, %v780
  %782 = vmatmul.f32.gmra.mxu0 %v383
  %v783 = vpop.f32.mrf.mxu0
  %v784 = vadd.f32 %v166, %v783
  %785 = vmatmul.f32.gmra.mxu0 %v386
  %v786 = vpop.f32.mrf.mxu0
  %v787 = vadd.f32 %v166, %v786
  %788 = vmatmul.f32.gmra.mxu0 %v389
  %v789 = vpop.f32.mrf.mxu0
  %v790 = vadd.f32 %v166, %v789
  %791 = vmatmul.f32.gmra.mxu0 %v392
  %v792 = vpop.f32.mrf.mxu0
  %v793 = vadd.f32 %v166, %v792
  %794 = vmatmul.f32.gmra.mxu0 %v395
  %v795 = vpop.f32.mrf.mxu0
  %v796 = vadd.f32 %v166, %v795
  %797 = vmatmul.f32.gmra.mxu0 %v398
  %v798 = vpop.f32.mrf.mxu0
  %v799 = vadd.f32 %v166, %v798
  %800 = vmatmul.f32.gmra.mxu0 %v401
  %v801 = vpop.f32.mrf.mxu0
  %v802 = vadd.f32 %v166, %v801
  %803 = vmatmul.f32.gmra.mxu0 %v404
  %v804 = vpop.f32.mrf.mxu0
  %v805 = vadd.f32 %v166, %v804
  %806 = vmatmul.f32.gmra.mxu0 %v407
  %v807 = vpop.f32.mrf.mxu0
  %v808 = vadd.f32 %v166, %v807
  %809 = vmatmul.f32.gmra.mxu0 %v410
  %v810 = vpop.f32.mrf.mxu0
  %v811 = vadd.f32 %v166, %v810
  %812 = vmatmul.f32.gmra.mxu0 %v413
  %v813 = vpop.f32.mrf.mxu0
  %v814 = vadd.f32 %v166, %v813
  %815 = vmatmul.f32.gmra.mxu0 %v416
  %v816 = vpop.f32.mrf.mxu0
  %v817 = vadd.f32 %v166, %v816
  %818 = vmatmul.f32.gmra.mxu0 %v419
  %v819 = vpop.f32.mrf.mxu0
  %v820 = vadd.f32 %v166, %v819
  %821 = vmatmul.f32.gmra.mxu0 %v422
  %v822 = vpop.f32.mrf.mxu0
  %v823 = vadd.f32 %v166, %v822
  %824 = vmatmul.f32.gmra.mxu0 %v425
  %v825 = vpop.f32.mrf.mxu0
  %v826 = vadd.f32 %v166, %v825
  %827 = vmatmul.f32.gmra.mxu0 %v428
  %v828 = vpop.f32.mrf.mxu0
  %v829 = vadd.f32 %v166, %v828
  %830 = vmatmul.f32.gmra.mxu0 %v431
  %v831 = vpop.f32.mrf.mxu0
  %v832 = vadd.f32 %v166, %v831
  %833 = vmatmul.f32.gmra.mxu0 %v434
  %v834 = vpop.f32.mrf.mxu0
  %v835 = vadd.f32 %v166, %v834
  %836 = vmatmul.f32.gmra.mxu0 %v437
  %v837 = vpop.f32.mrf.mxu0
  %v838 = vadd.f32 %v166, %v837
  %839 = vmatmul.f32.gmra.mxu0 %v440
  %v840 = vpop.f32.mrf.mxu0
  %v841 = vadd.f32 %v166, %v840
  %842 = vmatmul.f32.gmra.mxu0 %v443
  %v843 = vpop.f32.mrf.mxu0
  %v844 = vadd.f32 %v166, %v843
  %845 = vmatmul.f32.gmra.mxu0 %v446
  %v846 = vpop.f32.mrf.mxu0
  %v847 = vadd.f32 %v166, %v846
  %848 = vmatmul.f32.gmra.mxu0 %v449
  %v849 = vpop.f32.mrf.mxu0
  %v850 = vadd.f32 %v166, %v849
  %851 = vmatmul.f32.gmra.mxu0 %v452
  %v852 = vpop.f32.mrf.mxu0
  %v853 = vadd.f32 %v166, %v852
  %854 = vmatmul.f32.gmra.mxu0 %v455
  %v855 = vpop.f32.mrf.mxu0
  %v856 = vadd.f32 %v166, %v855
  %857 = vmatmul.f32.gmra.mxu0 %v458
  %v858 = vpop.f32.mrf.mxu0
  %v859 = vadd.f32 %v166, %v858
  %860 = vmatmul.f32.gmra.mxu0 %v461
  %v861 = vpop.f32.mrf.mxu0
  %v862 = vadd.f32 %v166, %v861
  %863 = vmatmul.f32.gmra.mxu0 %v464
  %v864 = vpop.f32.mrf.mxu0
  %v865 = vadd.f32 %v166, %v864
  %866 = vmatmul.f32.gmra.mxu0 %v467
  %v867 = vpop.f32.mrf.mxu0
  %v868 = vadd.f32 %v166, %v867
  %869 = vmatmul.f32.gmra.mxu0 %v470
  %v870 = vpop.f32.mrf.mxu0
  %v871 = vadd.f32 %v166, %v870
  %872 = vmatmul.f32.gmra.mxu0 %v473
  %v873 = vpop.f32.mrf.mxu0
  %v874 = vadd.f32 %v166, %v873
  %875 = vmatmul.f32.gmra.mxu0 %v476
  %v876 = vpop.f32.mrf.mxu0
  %v877 = vadd.f32 %v166, %v876
  %878 = vmatmul.f32.gmra.mxu0 %v479
  %v879 = vpop.f32.mrf.mxu0
  %v880 = vadd.f32 %v166, %v879
  %881 = vmatmul.f32.gmra.mxu0 %v482
  %v882 = vpop.f32.mrf.mxu0
  %v883 = vadd.f32 %v166, %v882
  %884 = vmatmul.f32.gmra.mxu0 %v485
  %v885 = vpop.f32.mrf.mxu0
  %v886 = vadd.f32 %v166, %v885
  %887 = vmatmul.f32.gmra.mxu0 %v488
  %v888 = vpop.f32.mrf.mxu0
  %v889 = vadd.f32 %v166, %v888
  %890 = vmatmul.f32.gmra.mxu0 %v491
  %v891 = vpop.f32.mrf.mxu0
  %v892 = vadd.f32 %v166, %v891
  %893 = vmatmul.f32.gmra.mxu0 %v494
  %v894 = vpop.f32.mrf.mxu0
  %v895 = vadd.f32 %v166, %v894
  %896 = vmatmul.f32.gmra.mxu0 %v497
  %v897 = vpop.f32.mrf.mxu0
  %v898 = vadd.f32 %v166, %v897
  %899 = vmatmul.f32.gmra.mxu0 %v500
  %v900 = vpop.f32.mrf.mxu0
  %v901 = vadd.f32 %v166, %v900
  %902 = vmatmul.f32.gmra.mxu0 %v503
  %v903 = vpop.f32.mrf.mxu0
  %v904 = vadd.f32 %v166, %v903
  %905 = vmatmul.f32.gmra.mxu0 %v506
  %v906 = vpop.f32.mrf.mxu0
  %v907 = vadd.f32 %v166, %v906
  %908 = vmatmul.f32.gmra.mxu0 %v509
  %v909 = vpop.f32.mrf.mxu0
  %v910 = vadd.f32 %v166, %v909
  %911 = vmatmul.f32.gmra.mxu0 %v512
  %v912 = vpop.f32.mrf.mxu0
  %v913 = vadd.f32 %v166, %v912
  %914 = vmatmul.f32.gmra.mxu0 %v515
  %v915 = vpop.f32.mrf.mxu0
  %v916 = vadd.f32 %v166, %v915
  %917 = vmatmul.f32.gmra.mxu0 %v518
  %v918 = vpop.f32.mrf.mxu0
  %v919 = vadd.f32 %v166, %v918
  %920 = vmatmul.f32.gmra.mxu0 %v521
  %v921 = vpop.f32.mrf.mxu0
  %v922 = vadd.f32 %v166, %v921
  %923 = vmatmul.f32.gmra.mxu0 %v524
  %v924 = vpop.f32.mrf.mxu0
  %v925 = vadd.f32 %v166, %v924
  %926 = vmatmul.f32.gmra.mxu0 %v527
  %v927 = vpop.f32.mrf.mxu0
  %v928 = vadd.f32 %v166, %v927
  %929 = vmatmul.f32.gmra.mxu0 %v530
  %v930 = vpop.f32.mrf.mxu0
  %v931 = vadd.f32 %v166, %v930
  %932 = vmatmul.f32.gmra.mxu0 %v533
  %v933 = vpop.f32.mrf.mxu0
  %v934 = vadd.f32 %v166, %v933
  %935 = vmatmul.f32.gmra.mxu0 %v536
  %v936 = vpop.f32.mrf.mxu0
  %v937 = vadd.f32 %v166, %v936
  %938 = vmatmul.f32.gmra.mxu0 %v539
  %v939 = vpop.f32.mrf.mxu0
  %v940 = vadd.f32 %v166, %v939
  %941 = vmatmul.f32.gmra.mxu0 %v542
  %v942 = vpop.f32.mrf.mxu0
  %v943 = vadd.f32 %v166, %v942
  %944 = vmatmul.f32.gmra.mxu0 %v545
  %v945 = vpop.f32.mrf.mxu0
  %v946 = vadd.f32 %v166, %v945
  %947 = vmatmul.f32.gmra.mxu0 %v548
  %v948 = vpop.f32.mrf.mxu0
  %v949 = vadd.f32 %v166, %v948
  %950 = vmatmul.f32.gmra.mxu0 %v551
  %v951 = vpop.f32.mrf.mxu0
  %v952 = vadd.f32 %v166, %v951
  %953 = vdwg.mxu0
  %v954 = vmax.f32 %v571, 0.0
  %v955 = vmax.f32 %v574, 0.0
  %v956 = vmax.f32 %v577, 0.0
  %v957 = vmax.f32 %v580, 0.0
  %v958 = vmax.f32 %v583, 0.0
  %v959 = vmax.f32 %v586, 0.0
  %v960 = vmax.f32 %v589, 0.0
  %v961 = vmax.f32 %v592, 0.0
  %v962 = vmax.f32 %v595, 0.0
  %v963 = vmax.f32 %v598, 0.0
  %v964 = vmax.f32 %v601, 0.0
  %v965 = vmax.f32 %v604, 0.0
  %v966 = vmax.f32 %v607, 0.0
  %v967 = vmax.f32 %v610, 0.0
  %v968 = vmax.f32 %v613, 0.0
  %v969 = vmax.f32 %v616, 0.0
  %v970 = vmax.f32 %v619, 0.0
  %v971 = vmax.f32 %v622, 0.0
  %v972 = vmax.f32 %v625, 0.0
  %v973 = vmax.f32 %v628, 0.0
  %v974 = vmax.f32 %v631, 0.0
  %v975 = vmax.f32 %v634, 0.0
  %v976 = vmax.f32 %v637, 0.0
  %v977 = vmax.f32 %v640, 0.0
  %v978 = vmax.f32 %v643, 0.0
  %v979 = vmax.f32 %v646, 0.0
  %v980 = vmax.f32 %v649, 0.0
  %v981 = vmax.f32 %v652, 0.0
  %v982 = vmax.f32 %v655, 0.0
  %v983 = vmax.f32 %v658, 0.0
  %v984 = vmax.f32 %v661, 0.0
  %v985 = vmax.f32 %v664, 0.0
  %v986 = vmax.f32 %v667, 0.0
  %v987 = vmax.f32 %v670, 0.0
  %v988 = vmax.f32 %v673, 0.0
  %v989 = vmax.f32 %v676, 0.0
  %v990 = vmax.f32 %v679, 0.0
  %v991 = vmax.f32 %v682, 0.0
  %v992 = vmax.f32 %v685, 0.0
  %v993 = vmax.f32 %v688, 0.0
  %v994 = vmax.f32 %v691, 0.0
  %v995 = vmax.f32 %v694, 0.0
  %v996 = vmax.f32 %v697, 0.0
  %v997 = vmax.f32 %v700, 0.0
  %v998 = vmax.f32 %v703, 0.0
  %v999 = vmax.f32 %v706, 0.0
  %v1000 = vmax.f32 %v709, 0.0
  %v1001 = vmax.f32 %v712, 0.0
  %v1002 = vmax.f32 %v715, 0.0
  %v1003 = vmax.f32 %v718, 0.0
  %v1004 = vmax.f32 %v721, 0.0
  %v1005 = vmax.f32 %v724, 0.0
  %v1006 = vmax.f32 %v727, 0.0
  %v1007 = vmax.f32 %v730, 0.0
  %v1008 = vmax.f32 %v733, 0.0
  %v1009 = vmax.f32 %v736, 0.0
  %v1010 = vmax.f32 %v739, 0.0
  %v1011 = vmax.f32 %v742, 0.0
  %v1012 = vmax.f32 %v745, 0.0
  %v1013 = vmax.f32 %v748, 0.0
  %v1014 = vmax.f32 %v751, 0.0
  %v1015 = vmax.f32 %v754, 0.0
  %v1016 = vmax.f32 %v757, 0.0
  %v1017 = vmax.f32 %v760, 0.0
  %v1018 = vmax.f32 %v763, 0.0
  %v1019 = vmax.f32 %v766, 0.0
  %v1020 = vmax.f32 %v769, 0.0
  %v1021 = vmax.f32 %v772, 0.0
  %v1022 = vmax.f32 %v775, 0.0
  %v1023 = vmax.f32 %v778, 0.0
  %v1024 = vmax.f32 %v781, 0.0
  %v1025 = vmax.f32 %v784, 0.0
  %v1026 = vmax.f32 %v787, 0.0
  %v1027 = vmax.f32 %v790, 0.0
  %v1028 = vmax.f32 %v793, 0.0
  %v1029 = vmax.f32 %v796, 0.0
  %v1030 = vmax.f32 %v799, 0.0
  %v1031 = vmax.f32 %v802, 0.0
  %v1032 = vmax.f32 %v805, 0.0
  %v1033 = vmax.f32 %v808, 0.0
  %v1034 = vmax.f32 %v811, 0.0
  %v1035 = vmax.f32 %v814, 0.0
  %v1036 = vmax.f32 %v817, 0.0
  %v1037 = vmax.f32 %v820, 0.0
  %v1038 = vmax.f32 %v823, 0.0
  %v1039 = vmax.f32 %v826, 0.0
  %v1040 = vmax.f32 %v829, 0.0
  %v1041 = vmax.f32 %v832, 0.0
  %v1042 = vmax.f32 %v835, 0.0
  %v1043 = vmax.f32 %v838, 0.0
  %v1044 = vmax.f32 %v841, 0.0
  %v1045 = vmax.f32 %v844, 0.0
  %v1046 = vmax.f32 %v847, 0.0
  %v1047 = vmax.f32 %v850, 0.0
  %v1048 = vmax.f32 %v853, 0.0
  %v1049 = vmax.f32 %v856, 0.0
  %v1050 = vmax.f32 %v859, 0.0
  %v1051 = vmax.f32 %v862, 0.0
  %v1052 = vmax.f32 %v865, 0.0
  %v1053 = vmax.f32 %v868, 0.0
  %v1054 = vmax.f32 %v871, 0.0
  %v1055 = vmax.f32 %v874, 0.0
  %v1056 = vmax.f32 %v877, 0.0
  %v1057 = vmax.f32 %v880, 0.0
  %v1058 = vmax.f32 %v883, 0.0
  %v1059 = vmax.f32 %v886, 0.0
  %v1060 = vmax.f32 %v889, 0.0
  %v1061 = vmax.f32 %v892, 0.0
  %v1062 = vmax.f32 %v895, 0.0
  %v1063 = vmax.f32 %v898, 0.0
  %v1064 = vmax.f32 %v901, 0.0
  %v1065 = vmax.f32 %v904, 0.0
  %v1066 = vmax.f32 %v907, 0.0
  %v1067 = vmax.f32 %v910, 0.0
  %v1068 = vmax.f32 %v913, 0.0
  %v1069 = vmax.f32 %v916, 0.0
  %v1070 = vmax.f32 %v919, 0.0
  %v1071 = vmax.f32 %v922, 0.0
  %v1072 = vmax.f32 %v925, 0.0
  %v1073 = vmax.f32 %v928, 0.0
  %v1074 = vmax.f32 %v931, 0.0
  %v1075 = vmax.f32 %v934, 0.0
  %v1076 = vmax.f32 %v937, 0.0
  %v1077 = vmax.f32 %v940, 0.0
  %v1078 = vmax.f32 %v943, 0.0
  %v1079 = vmax.f32 %v946, 0.0
  %v1080 = vmax.f32 %v949, 0.0
  %v1081 = vmax.f32 %v952, 0.0
  %v1082 = vld [vmem:[%s3] sm:$0xff]
  %v1083 = vld [vmem:[%s3 + $0x8] sm:$0xff]
  %v1084 = vld [vmem:[%s3 + $0x10] sm:$0xff]
  %v1085 = vld [vmem:[%s3 + $0x18] sm:$0xff]
  %v1086 = vld [vmem:[%s3 + $0x20] sm:$0xff]
  %v1087 = vld [vmem:[%s3 + $0x28] sm:$0xff]
  %v1088 = vld [vmem:[%s3 + $0x30] sm:$0xff]
  %v1089 = vld [vmem:[%s3 + $0x38] sm:$0xff]
  %v1090 = vld [vmem:[%s4] sm:$0x1]
  %v1092 = vperm.slane %v1090, 0
  %vm1094 = vcmask 523264
  %v1096 = vsel %vm1094, %v954, 0
  %v1099 = vsel %vm1094, %v955, 0
  %v1102 = vsel %vm1094, %v956, 0
  %v1105 = vsel %vm1094, %v957, 0
  %v1108 = vsel %vm1094, %v958, 0
  %v1111 = vsel %vm1094, %v959, 0
  %v1114 = vsel %vm1094, %v960, 0
  %v1117 = vsel %vm1094, %v961, 0
  %v1120 = vsel %vm1094, %v962, 0
  %v1123 = vsel %vm1094, %v963, 0
  %v1126 = vsel %vm1094, %v964, 0
  %v1129 = vsel %vm1094, %v965, 0
  %v1132 = vsel %vm1094, %v966, 0
  %v1135 = vsel %vm1094, %v967, 0
  %v1138 = vsel %vm1094, %v968, 0
  %v1141 = vsel %vm1094, %v969, 0
  %v1144 = vsel %vm1094, %v970, 0
  %v1147 = vsel %vm1094, %v971, 0
  %v1150 = vsel %vm1094, %v972, 0
  %v1153 = vsel %vm1094, %v973, 0
  %v1156 = vsel %vm1094, %v974, 0
  %v1159 = vsel %vm1094, %v975, 0
  %v1162 = vsel %vm1094, %v976, 0
  %v1165 = vsel %vm1094, %v977, 0
  %v1168 = vsel %vm1094, %v978, 0
  %v1171 = vsel %vm1094, %v979, 0
  %v1174 = vsel %vm1094, %v980, 0
  %v1177 = vsel %vm1094, %v981, 0
  %v1180 = vsel %vm1094, %v982, 0
  %v1183 = vsel %vm1094, %v983, 0
  %v1186 = vsel %vm1094, %v984, 0
  %v1189 = vsel %vm1094, %v985, 0
  %v1192 = vsel %vm1094, %v986, 0
  %v1195 = vsel %vm1094, %v987, 0
  %v1198 = vsel %vm1094, %v988, 0
  %v1201 = vsel %vm1094, %v989, 0
  %v1204 = vsel %vm1094, %v990, 0
  %v1207 = vsel %vm1094, %v991, 0
  %v1210 = vsel %vm1094, %v992, 0
  %v1213 = vsel %vm1094, %v993, 0
  %v1216 = vsel %vm1094, %v994, 0
  %v1219 = vsel %vm1094, %v995, 0
  %v1222 = vsel %vm1094, %v996, 0
  %v1225 = vsel %vm1094, %v997, 0
  %v1228 = vsel %vm1094, %v998, 0
  %v1231 = vsel %vm1094, %v999, 0
  %v1234 = vsel %vm1094, %v1000, 0
  %v1237 = vsel %vm1094, %v1001, 0
  %v1240 = vsel %vm1094, %v1002, 0
  %v1243 = vsel %vm1094, %v1003, 0
  %v1246 = vsel %vm1094, %v1004, 0
  %v1249 = vsel %vm1094, %v1005, 0
  %v1252 = vsel %vm1094, %v1006, 0
  %v1255 = vsel %vm1094, %v1007, 0
  %v1258 = vsel %vm1094, %v1008, 0
  %v1261 = vsel %vm1094, %v1009, 0
  %v1264 = vsel %vm1094, %v1010, 0
  %v1267 = vsel %vm1094, %v1011, 0
  %v1270 = vsel %vm1094, %v1012, 0
  %v1273 = vsel %vm1094, %v1013, 0
  %v1276 = vsel %vm1094, %v1014, 0
  %v1279 = vsel %vm1094, %v1015, 0
  %v1282 = vsel %vm1094, %v1016, 0
  %v1285 = vsel %vm1094, %v1017, 0
  %v1288 = vsel %vm1094, %v1018, 0
  %v1291 = vsel %vm1094, %v1019, 0
  %v1294 = vsel %vm1094, %v1020, 0
  %v1297 = vsel %vm1094, %v1021, 0
  %v1300 = vsel %vm1094, %v1022, 0
  %v1303 = vsel %vm1094, %v1023, 0
  %v1306 = vsel %vm1094, %v1024, 0
  %v1309 = vsel %vm1094, %v1025, 0
  %v1312 = vsel %vm1094, %v1026, 0
  %v1315 = vsel %vm1094, %v1027, 0
  %v1318 = vsel %vm1094, %v1028, 0
  %v1321 = vsel %vm1094, %v1029, 0
  %v1324 = vsel %vm1094, %v1030, 0
  %v1327 = vsel %vm1094, %v1031, 0
  %v1330 = vsel %vm1094, %v1032, 0
  %v1333 = vsel %vm1094, %v1033, 0
  %v1336 = vsel %vm1094, %v1034, 0
  %v1339 = vsel %vm1094, %v1035, 0
  %v1342 = vsel %vm1094, %v1036, 0
  %v1345 = vsel %vm1094, %v1037, 0
  %v1348 = vsel %vm1094, %v1038, 0
  %v1351 = vsel %vm1094, %v1039, 0
  %v1354 = vsel %vm1094, %v1040, 0
  %v1357 = vsel %vm1094, %v1041, 0
  %v1360 = vsel %vm1094, %v1042, 0
  %v1363 = vsel %vm1094, %v1043, 0
  %v1366 = vsel %vm1094, %v1044, 0
  %v1369 = vsel %vm1094, %v1045, 0
  %v1372 = vsel %vm1094, %v1046, 0
  %v1375 = vsel %vm1094, %v1047, 0
  %v1378 = vsel %vm1094, %v1048, 0
  %v1381 = vsel %vm1094, %v1049, 0
  %v1384 = vsel %vm1094, %v1050, 0
  %v1387 = vsel %vm1094, %v1051, 0
  %v1390 = vsel %vm1094, %v1052, 0
  %v1393 = vsel %vm1094, %v1053, 0
  %v1396 = vsel %vm1094, %v1054, 0
  %v1399 = vsel %vm1094, %v1055, 0
  %v1402 = vsel %vm1094, %v1056, 0
  %v1405 = vsel %vm1094, %v1057, 0
  %v1408 = vsel %vm1094, %v1058, 0
  %v1411 = vsel %vm1094, %v1059, 0
  %v1414 = vsel %vm1094, %v1060, 0
  %v1417 = vsel %vm1094, %v1061, 0
  %v1420 = vsel %vm1094, %v1062, 0
  %v1423 = vsel %vm1094, %v1063, 0
  %v1426 = vsel %vm1094, %v1064, 0
  %v1429 = vsel %vm1094, %v1065, 0
  %v1432 = vsel %vm1094, %v1066, 0
  %v1435 = vsel %vm1094, %v1067, 0
  %v1438 = vsel %vm1094, %v1068, 0
  %v1441 = vsel %vm1094, %v1069, 0
  %v1444 = vsel %vm1094, %v1070, 0
  %v1447 = vsel %vm1094, %v1071, 0
  %v1450 = vsel %vm1094, %v1072, 0
  %v1453 = vsel %vm1094, %v1073, 0
  %v1456 = vsel %vm1094, %v1074, 0
  %v1459 = vsel %vm1094, %v1075, 0
  %v1462 = vsel %vm1094, %v1076, 0
  %v1465 = vsel %vm1094, %v1077, 0
  %v1468 = vsel %vm1094, %v1078, 0
  %v1471 = vsel %vm1094, %v1079, 0
  %v1474 = vsel %vm1094, %v1080, 0
  %v1477 = vsel %vm1094, %v1081, 0
  %1479 = vmatpush.msra.mxu0 0.0
  %1480 = vmatpush.msra.mxu0 0.0
  %1481 = vmatpush.msra.mxu0 0.0
  %1482 = vmatpush.msra.mxu0 0.0
  %1483 = vmatpush.msra.mxu0 0.0
  %1484 = vmatpush.msra.mxu0 0.0
  %1485 = vmatpush.msra.mxu0 0.0
  %1486 = vmatpush.msra.mxu0 0.0
  %1487 = vmatpush.msra.mxu0 %v1089
  %1488 = vmatpush.msra.mxu0 %v1088
  %1489 = vmatpush.msra.mxu0 %v1087
  %1490 = vmatpush.msra.mxu0 %v1086
  %1491 = vmatpush.msra.mxu0 %v1085
  %1492 = vmatpush.msra.mxu0 %v1084
  %1493 = vmatpush.msra.mxu0 %v1083
  %1494 = vmatpush.msra.mxu0 %v1082
  %1495 = vmatmul.f32.gmra.mxu0 %v1096
  %v1496 = vpop.f32.mrf.mxu0
  %v1497 = vadd.f32 %v1092, %v1496
  %1498 = vmatmul.f32.gmra.mxu0 %v1099
  %v1499 = vpop.f32.mrf.mxu0
  %v1500 = vadd.f32 %v1092, %v1499
  %1501 = vmatmul.f32.gmra.mxu0 %v1102
  %v1502 = vpop.f32.mrf.mxu0
  %v1503 = vadd.f32 %v1092, %v1502
  %1504 = vmatmul.f32.gmra.mxu0 %v1105
  %v1505 = vpop.f32.mrf.mxu0
  %v1506 = vadd.f32 %v1092, %v1505
  %1507 = vmatmul.f32.gmra.mxu0 %v1108
  %v1508 = vpop.f32.mrf.mxu0
  %v1509 = vadd.f32 %v1092, %v1508
  %1510 = vmatmul.f32.gmra.mxu0 %v1111
  %v1511 = vpop.f32.mrf.mxu0
  %v1512 = vadd.f32 %v1092, %v1511
  %1513 = vmatmul.f32.gmra.mxu0 %v1114
  %v1514 = vpop.f32.mrf.mxu0
  %v1515 = vadd.f32 %v1092, %v1514
  %1516 = vmatmul.f32.gmra.mxu0 %v1117
  %v1517 = vpop.f32.mrf.mxu0
  %v1518 = vadd.f32 %v1092, %v1517
  %1519 = vmatmul.f32.gmra.mxu0 %v1120
  %v1520 = vpop.f32.mrf.mxu0
  %v1521 = vadd.f32 %v1092, %v1520
  %1522 = vmatmul.f32.gmra.mxu0 %v1123
  %v1523 = vpop.f32.mrf.mxu0
  %v1524 = vadd.f32 %v1092, %v1523
  %1525 = vmatmul.f32.gmra.mxu0 %v1126
  %v1526 = vpop.f32.mrf.mxu0
  %v1527 = vadd.f32 %v1092, %v1526
  %1528 = vmatmul.f32.gmra.mxu0 %v1129
  %v1529 = vpop.f32.mrf.mxu0
  %v1530 = vadd.f32 %v1092, %v1529
  %1531 = vmatmul.f32.gmra.mxu0 %v1132
  %v1532 = vpop.f32.mrf.mxu0
  %v1533 = vadd.f32 %v1092, %v1532
  %1534 = vmatmul.f32.gmra.mxu0 %v1135
  %v1535 = vpop.f32.mrf.mxu0
  %v1536 = vadd.f32 %v1092, %v1535
  %1537 = vmatmul.f32.gmra.mxu0 %v1138
  %v1538 = vpop.f32.mrf.mxu0
  %v1539 = vadd.f32 %v1092, %v1538
  %1540 = vmatmul.f32.gmra.mxu0 %v1141
  %v1541 = vpop.f32.mrf.mxu0
  %v1542 = vadd.f32 %v1092, %v1541
  %1543 = vmatmul.f32.gmra.mxu0 %v1144
  %v1544 = vpop.f32.mrf.mxu0
  %v1545 = vadd.f32 %v1092, %v1544
  %1546 = vmatmul.f32.gmra.mxu0 %v1147
  %v1547 = vpop.f32.mrf.mxu0
  %v1548 = vadd.f32 %v1092, %v1547
  %1549 = vmatmul.f32.gmra.mxu0 %v1150
  %v1550 = vpop.f32.mrf.mxu0
  %v1551 = vadd.f32 %v1092, %v1550
  %1552 = vmatmul.f32.gmra.mxu0 %v1153
  %v1553 = vpop.f32.mrf.mxu0
  %v1554 = vadd.f32 %v1092, %v1553
  %1555 = vmatmul.f32.gmra.mxu0 %v1156
  %v1556 = vpop.f32.mrf.mxu0
  %v1557 = vadd.f32 %v1092, %v1556
  %1558 = vmatmul.f32.gmra.mxu0 %v1159
  %v1559 = vpop.f32.mrf.mxu0
  %v1560 = vadd.f32 %v1092, %v1559
  %1561 = vmatmul.f32.gmra.mxu0 %v1162
  %v1562 = vpop.f32.mrf.mxu0
  %v1563 = vadd.f32 %v1092, %v1562
  %1564 = vmatmul.f32.gmra.mxu0 %v1165
  %v1565 = vpop.f32.mrf.mxu0
  %v1566 = vadd.f32 %v1092, %v1565
  %1567 = vmatmul.f32.gmra.mxu0 %v1168
  %v1568 = vpop.f32.mrf.mxu0
  %v1569 = vadd.f32 %v1092, %v1568
  %1570 = vmatmul.f32.gmra.mxu0 %v1171
  %v1571 = vpop.f32.mrf.mxu0
  %v1572 = vadd.f32 %v1092, %v1571
  %1573 = vmatmul.f32.gmra.mxu0 %v1174
  %v1574 = vpop.f32.mrf.mxu0
  %v1575 = vadd.f32 %v1092, %v1574
  %1576 = vmatmul.f32.gmra.mxu0 %v1177
  %v1577 = vpop.f32.mrf.mxu0
  %v1578 = vadd.f32 %v1092, %v1577
  %1579 = vmatmul.f32.gmra.mxu0 %v1180
  %v1580 = vpop.f32.mrf.mxu0
  %v1581 = vadd.f32 %v1092, %v1580
  %1582 = vmatmul.f32.gmra.mxu0 %v1183
  %v1583 = vpop.f32.mrf.mxu0
  %v1584 = vadd.f32 %v1092, %v1583
  %1585 = vmatmul.f32.gmra.mxu0 %v1186
  %v1586 = vpop.f32.mrf.mxu0
  %v1587 = vadd.f32 %v1092, %v1586
  %1588 = vmatmul.f32.gmra.mxu0 %v1189
  %v1589 = vpop.f32.mrf.mxu0
  %v1590 = vadd.f32 %v1092, %v1589
  %1591 = vmatmul.f32.gmra.mxu0 %v1192
  %v1592 = vpop.f32.mrf.mxu0
  %v1593 = vadd.f32 %v1092, %v1592
  %1594 = vmatmul.f32.gmra.mxu0 %v1195
  %v1595 = vpop.f32.mrf.mxu0
  %v1596 = vadd.f32 %v1092, %v1595
  %1597 = vmatmul.f32.gmra.mxu0 %v1198
  %v1598 = vpop.f32.mrf.mxu0
  %v1599 = vadd.f32 %v1092, %v1598
  %1600 = vmatmul.f32.gmra.mxu0 %v1201
  %v1601 = vpop.f32.mrf.mxu0
  %v1602 = vadd.f32 %v1092, %v1601
  %1603 = vmatmul.f32.gmra.mxu0 %v1204
  %v1604 = vpop.f32.mrf.mxu0
  %v1605 = vadd.f32 %v1092, %v1604
  %1606 = vmatmul.f32.gmra.mxu0 %v1207
  %v1607 = vpop.f32.mrf.mxu0
  %v1608 = vadd.f32 %v1092, %v1607
  %1609 = vmatmul.f32.gmra.mxu0 %v1210
  %v1610 = vpop.f32.mrf.mxu0
  %v1611 = vadd.f32 %v1092, %v1610
  %1612 = vmatmul.f32.gmra.mxu0 %v1213
  %v1613 = vpop.f32.mrf.mxu0
  %v1614 = vadd.f32 %v1092, %v1613
  %1615 = vmatmul.f32.gmra.mxu0 %v1216
  %v1616 = vpop.f32.mrf.mxu0
  %v1617 = vadd.f32 %v1092, %v1616
  %1618 = vmatmul.f32.gmra.mxu0 %v1219
  %v1619 = vpop.f32.mrf.mxu0
  %v1620 = vadd.f32 %v1092, %v1619
  %1621 = vmatmul.f32.gmra.mxu0 %v1222
  %v1622 = vpop.f32.mrf.mxu0
  %v1623 = vadd.f32 %v1092, %v1622
  %1624 = vmatmul.f32.gmra.mxu0 %v1225
  %v1625 = vpop.f32.mrf.mxu0
  %v1626 = vadd.f32 %v1092, %v1625
  %1627 = vmatmul.f32.gmra.mxu0 %v1228
  %v1628 = vpop.f32.mrf.mxu0
  %v1629 = vadd.f32 %v1092, %v1628
  %1630 = vmatmul.f32.gmra.mxu0 %v1231
  %v1631 = vpop.f32.mrf.mxu0
  %v1632 = vadd.f32 %v1092, %v1631
  %1633 = vmatmul.f32.gmra.mxu0 %v1234
  %v1634 = vpop.f32.mrf.mxu0
  %v1635 = vadd.f32 %v1092, %v1634
  %1636 = vmatmul.f32.gmra.mxu0 %v1237
  %v1637 = vpop.f32.mrf.mxu0
  %v1638 = vadd.f32 %v1092, %v1637
  %1639 = vmatmul.f32.gmra.mxu0 %v1240
  %v1640 = vpop.f32.mrf.mxu0
  %v1641 = vadd.f32 %v1092, %v1640
  %1642 = vmatmul.f32.gmra.mxu0 %v1243
  %v1643 = vpop.f32.mrf.mxu0
  %v1644 = vadd.f32 %v1092, %v1643
  %1645 = vmatmul.f32.gmra.mxu0 %v1246
  %v1646 = vpop.f32.mrf.mxu0
  %v1647 = vadd.f32 %v1092, %v1646
  %1648 = vmatmul.f32.gmra.mxu0 %v1249
  %v1649 = vpop.f32.mrf.mxu0
  %v1650 = vadd.f32 %v1092, %v1649
  %1651 = vmatmul.f32.gmra.mxu0 %v1252
  %v1652 = vpop.f32.mrf.mxu0
  %v1653 = vadd.f32 %v1092, %v1652
  %1654 = vmatmul.f32.gmra.mxu0 %v1255
  %v1655 = vpop.f32.mrf.mxu0
  %v1656 = vadd.f32 %v1092, %v1655
  %1657 = vmatmul.f32.gmra.mxu0 %v1258
  %v1658 = vpop.f32.mrf.mxu0
  %v1659 = vadd.f32 %v1092, %v1658
  %1660 = vmatmul.f32.gmra.mxu0 %v1261
  %v1661 = vpop.f32.mrf.mxu0
  %v1662 = vadd.f32 %v1092, %v1661
  %1663 = vmatmul.f32.gmra.mxu0 %v1264
  %v1664 = vpop.f32.mrf.mxu0
  %v1665 = vadd.f32 %v1092, %v1664
  %1666 = vmatmul.f32.gmra.mxu0 %v1267
  %v1667 = vpop.f32.mrf.mxu0
  %v1668 = vadd.f32 %v1092, %v1667
  %1669 = vmatmul.f32.gmra.mxu0 %v1270
  %v1670 = vpop.f32.mrf.mxu0
  %v1671 = vadd.f32 %v1092, %v1670
  %1672 = vmatmul.f32.gmra.mxu0 %v1273
  %v1673 = vpop.f32.mrf.mxu0
  %v1674 = vadd.f32 %v1092, %v1673
  %1675 = vmatmul.f32.gmra.mxu0 %v1276
  %v1676 = vpop.f32.mrf.mxu0
  %v1677 = vadd.f32 %v1092, %v1676
  %1678 = vmatmul.f32.gmra.mxu0 %v1279
  %v1679 = vpop.f32.mrf.mxu0
  %v1680 = vadd.f32 %v1092, %v1679
  %1681 = vmatmul.f32.gmra.mxu0 %v1282
  %v1682 = vpop.f32.mrf.mxu0
  %v1683 = vadd.f32 %v1092, %v1682
  %1684 = vmatmul.f32.gmra.mxu0 %v1285
  %v1685 = vpop.f32.mrf.mxu0
  %v1686 = vadd.f32 %v1092, %v1685
  %1687 = vmatmul.f32.gmra.mxu0 %v1288
  %v1688 = vpop.f32.mrf.mxu0
  %v1689 = vadd.f32 %v1092, %v1688
  %1690 = vmatmul.f32.gmra.mxu0 %v1291
  %v1691 = vpop.f32.mrf.mxu0
  %v1692 = vadd.f32 %v1092, %v1691
  %1693 = vmatmul.f32.gmra.mxu0 %v1294
  %v1694 = vpop.f32.mrf.mxu0
  %v1695 = vadd.f32 %v1092, %v1694
  %1696 = vmatmul.f32.gmra.mxu0 %v1297
  %v1697 = vpop.f32.mrf.mxu0
  %v1698 = vadd.f32 %v1092, %v1697
  %1699 = vmatmul.f32.gmra.mxu0 %v1300
  %v1700 = vpop.f32.mrf.mxu0
  %v1701 = vadd.f32 %v1092, %v1700
  %1702 = vmatmul.f32.gmra.mxu0 %v1303
  %v1703 = vpop.f32.mrf.mxu0
  %v1704 = vadd.f32 %v1092, %v1703
  %1705 = vmatmul.f32.gmra.mxu0 %v1306
  %v1706 = vpop.f32.mrf.mxu0
  %v1707 = vadd.f32 %v1092, %v1706
  %1708 = vmatmul.f32.gmra.mxu0 %v1309
  %v1709 = vpop.f32.mrf.mxu0
  %v1710 = vadd.f32 %v1092, %v1709
  %1711 = vmatmul.f32.gmra.mxu0 %v1312
  %v1712 = vpop.f32.mrf.mxu0
  %v1713 = vadd.f32 %v1092, %v1712
  %1714 = vmatmul.f32.gmra.mxu0 %v1315
  %v1715 = vpop.f32.mrf.mxu0
  %v1716 = vadd.f32 %v1092, %v1715
  %1717 = vmatmul.f32.gmra.mxu0 %v1318
  %v1718 = vpop.f32.mrf.mxu0
  %v1719 = vadd.f32 %v1092, %v1718
  %1720 = vmatmul.f32.gmra.mxu0 %v1321
  %v1721 = vpop.f32.mrf.mxu0
  %v1722 = vadd.f32 %v1092, %v1721
  %1723 = vmatmul.f32.gmra.mxu0 %v1324
  %v1724 = vpop.f32.mrf.mxu0
  %v1725 = vadd.f32 %v1092, %v1724
  %1726 = vmatmul.f32.gmra.mxu0 %v1327
  %v1727 = vpop.f32.mrf.mxu0
  %v1728 = vadd.f32 %v1092, %v1727
  %1729 = vmatmul.f32.gmra.mxu0 %v1330
  %v1730 = vpop.f32.mrf.mxu0
  %v1731 = vadd.f32 %v1092, %v1730
  %1732 = vmatmul.f32.gmra.mxu0 %v1333
  %v1733 = vpop.f32.mrf.mxu0
  %v1734 = vadd.f32 %v1092, %v1733
  %1735 = vmatmul.f32.gmra.mxu0 %v1336
  %v1736 = vpop.f32.mrf.mxu0
  %v1737 = vadd.f32 %v1092, %v1736
  %1738 = vmatmul.f32.gmra.mxu0 %v1339
  %v1739 = vpop.f32.mrf.mxu0
  %v1740 = vadd.f32 %v1092, %v1739
  %1741 = vmatmul.f32.gmra.mxu0 %v1342
  %v1742 = vpop.f32.mrf.mxu0
  %v1743 = vadd.f32 %v1092, %v1742
  %1744 = vmatmul.f32.gmra.mxu0 %v1345
  %v1745 = vpop.f32.mrf.mxu0
  %v1746 = vadd.f32 %v1092, %v1745
  %1747 = vmatmul.f32.gmra.mxu0 %v1348
  %v1748 = vpop.f32.mrf.mxu0
  %v1749 = vadd.f32 %v1092, %v1748
  %1750 = vmatmul.f32.gmra.mxu0 %v1351
  %v1751 = vpop.f32.mrf.mxu0
  %v1752 = vadd.f32 %v1092, %v1751
  %1753 = vmatmul.f32.gmra.mxu0 %v1354
  %v1754 = vpop.f32.mrf.mxu0
  %v1755 = vadd.f32 %v1092, %v1754
  %1756 = vmatmul.f32.gmra.mxu0 %v1357
  %v1757 = vpop.f32.mrf.mxu0
  %v1758 = vadd.f32 %v1092, %v1757
  %1759 = vmatmul.f32.gmra.mxu0 %v1360
  %v1760 = vpop.f32.mrf.mxu0
  %v1761 = vadd.f32 %v1092, %v1760
  %1762 = vmatmul.f32.gmra.mxu0 %v1363
  %v1763 = vpop.f32.mrf.mxu0
  %v1764 = vadd.f32 %v1092, %v1763
  %1765 = vmatmul.f32.gmra.mxu0 %v1366
  %v1766 = vpop.f32.mrf.mxu0
  %v1767 = vadd.f32 %v1092, %v1766
  %1768 = vmatmul.f32.gmra.mxu0 %v1369
  %v1769 = vpop.f32.mrf.mxu0
  %v1770 = vadd.f32 %v1092, %v1769
  %1771 = vmatmul.f32.gmra.mxu0 %v1372
  %v1772 = vpop.f32.mrf.mxu0
  %v1773 = vadd.f32 %v1092, %v1772
  %1774 = vmatmul.f32.gmra.mxu0 %v1375
  %v1775 = vpop.f32.mrf.mxu0
  %v1776 = vadd.f32 %v1092, %v1775
  %1777 = vmatmul.f32.gmra.mxu0 %v1378
  %v1778 = vpop.f32.mrf.mxu0
  %v1779 = vadd.f32 %v1092, %v1778
  %1780 = vmatmul.f32.gmra.mxu0 %v1381
  %v1781 = vpop.f32.mrf.mxu0
  %v1782 = vadd.f32 %v1092, %v1781
  %1783 = vmatmul.f32.gmra.mxu0 %v1384
  %v1784 = vpop.f32.mrf.mxu0
  %v1785 = vadd.f32 %v1092, %v1784
  %1786 = vmatmul.f32.gmra.mxu0 %v1387
  %v1787 = vpop.f32.mrf.mxu0
  %v1788 = vadd.f32 %v1092, %v1787
  %1789 = vmatmul.f32.gmra.mxu0 %v1390
  %v1790 = vpop.f32.mrf.mxu0
  %v1791 = vadd.f32 %v1092, %v1790
  %1792 = vmatmul.f32.gmra.mxu0 %v1393
  %v1793 = vpop.f32.mrf.mxu0
  %v1794 = vadd.f32 %v1092, %v1793
  %1795 = vmatmul.f32.gmra.mxu0 %v1396
  %v1796 = vpop.f32.mrf.mxu0
  %v1797 = vadd.f32 %v1092, %v1796
  %1798 = vmatmul.f32.gmra.mxu0 %v1399
  %v1799 = vpop.f32.mrf.mxu0
  %v1800 = vadd.f32 %v1092, %v1799
  %1801 = vmatmul.f32.gmra.mxu0 %v1402
  %v1802 = vpop.f32.mrf.mxu0
  %v1803 = vadd.f32 %v1092, %v1802
  %1804 = vmatmul.f32.gmra.mxu0 %v1405
  %v1805 = vpop.f32.mrf.mxu0
  %v1806 = vadd.f32 %v1092, %v1805
  %1807 = vmatmul.f32.gmra.mxu0 %v1408
  %v1808 = vpop.f32.mrf.mxu0
  %v1809 = vadd.f32 %v1092, %v1808
  %1810 = vmatmul.f32.gmra.mxu0 %v1411
  %v1811 = vpop.f32.mrf.mxu0
  %v1812 = vadd.f32 %v1092, %v1811
  %1813 = vmatmul.f32.gmra.mxu0 %v1414
  %v1814 = vpop.f32.mrf.mxu0
  %v1815 = vadd.f32 %v1092, %v1814
  %1816 = vmatmul.f32.gmra.mxu0 %v1417
  %v1817 = vpop.f32.mrf.mxu0
  %v1818 = vadd.f32 %v1092, %v1817
  %1819 = vmatmul.f32.gmra.mxu0 %v1420
  %v1820 = vpop.f32.mrf.mxu0
  %v1821 = vadd.f32 %v1092, %v1820
  %1822 = vmatmul.f32.gmra.mxu0 %v1423
  %v1823 = vpop.f32.mrf.mxu0
  %v1824 = vadd.f32 %v1092, %v1823
  %1825 = vmatmul.f32.gmra.mxu0 %v1426
  %v1826 = vpop.f32.mrf.mxu0
  %v1827 = vadd.f32 %v1092, %v1826
  %1828 = vmatmul.f32.gmra.mxu0 %v1429
  %v1829 = vpop.f32.mrf.mxu0
  %v1830 = vadd.f32 %v1092, %v1829
  %1831 = vmatmul.f32.gmra.mxu0 %v1432
  %v1832 = vpop.f32.mrf.mxu0
  %v1833 = vadd.f32 %v1092, %v1832
  %1834 = vmatmul.f32.gmra.mxu0 %v1435
  %v1835 = vpop.f32.mrf.mxu0
  %v1836 = vadd.f32 %v1092, %v1835
  %1837 = vmatmul.f32.gmra.mxu0 %v1438
  %v1838 = vpop.f32.mrf.mxu0
  %v1839 = vadd.f32 %v1092, %v1838
  %1840 = vmatmul.f32.gmra.mxu0 %v1441
  %v1841 = vpop.f32.mrf.mxu0
  %v1842 = vadd.f32 %v1092, %v1841
  %1843 = vmatmul.f32.gmra.mxu0 %v1444
  %v1844 = vpop.f32.mrf.mxu0
  %v1845 = vadd.f32 %v1092, %v1844
  %1846 = vmatmul.f32.gmra.mxu0 %v1447
  %v1847 = vpop.f32.mrf.mxu0
  %v1848 = vadd.f32 %v1092, %v1847
  %1849 = vmatmul.f32.gmra.mxu0 %v1450
  %v1850 = vpop.f32.mrf.mxu0
  %v1851 = vadd.f32 %v1092, %v1850
  %1852 = vmatmul.f32.gmra.mxu0 %v1453
  %v1853 = vpop.f32.mrf.mxu0
  %v1854 = vadd.f32 %v1092, %v1853
  %1855 = vmatmul.f32.gmra.mxu0 %v1456
  %v1856 = vpop.f32.mrf.mxu0
  %v1857 = vadd.f32 %v1092, %v1856
  %1858 = vmatmul.f32.gmra.mxu0 %v1459
  %v1859 = vpop.f32.mrf.mxu0
  %v1860 = vadd.f32 %v1092, %v1859
  %1861 = vmatmul.f32.gmra.mxu0 %v1462
  %v1862 = vpop.f32.mrf.mxu0
  %v1863 = vadd.f32 %v1092, %v1862
  %1864 = vmatmul.f32.gmra.mxu0 %v1465
  %v1865 = vpop.f32.mrf.mxu0
  %v1866 = vadd.f32 %v1092, %v1865
  %1867 = vmatmul.f32.gmra.mxu0 %v1468
  %v1868 = vpop.f32.mrf.mxu0
  %v1869 = vadd.f32 %v1092, %v1868
  %1870 = vmatmul.f32.gmra.mxu0 %v1471
  %v1871 = vpop.f32.mrf.mxu0
  %v1872 = vadd.f32 %v1092, %v1871
  %1873 = vmatmul.f32.gmra.mxu0 %v1474
  %v1874 = vpop.f32.mrf.mxu0
  %v1875 = vadd.f32 %v1092, %v1874
  %1876 = vmatmul.f32.gmra.mxu0 %v1477
  %v1877 = vpop.f32.mrf.mxu0
  %v1878 = vadd.f32 %v1092, %v1877
  %1879 = vdwg.mxu0
  %v1880 = vmax.f32 %v1497, 0.0
  %v1881 = vmax.f32 %v1500, 0.0
  %v1882 = vmax.f32 %v1503, 0.0
  %v1883 = vmax.f32 %v1506, 0.0
  %v1884 = vmax.f32 %v1509, 0.0
  %v1885 = vmax.f32 %v1512, 0.0
  %v1886 = vmax.f32 %v1515, 0.0
  %v1887 = vmax.f32 %v1518, 0.0
  %v1888 = vmax.f32 %v1521, 0.0
  %v1889 = vmax.f32 %v1524, 0.0
  %v1890 = vmax.f32 %v1527, 0.0
  %v1891 = vmax.f32 %v1530, 0.0
  %v1892 = vmax.f32 %v1533, 0.0
  %v1893 = vmax.f32 %v1536, 0.0
  %v1894 = vmax.f32 %v1539, 0.0
  %v1895 = vmax.f32 %v1542, 0.0
  %v1896 = vmax.f32 %v1545, 0.0
  %v1897 = vmax.f32 %v1548, 0.0
  %v1898 = vmax.f32 %v1551, 0.0
  %v1899 = vmax.f32 %v1554, 0.0
  %v1900 = vmax.f32 %v1557, 0.0
  %v1901 = vmax.f32 %v1560, 0.0
  %v1902 = vmax.f32 %v1563, 0.0
  %v1903 = vmax.f32 %v1566, 0.0
  %v1904 = vmax.f32 %v1569, 0.0
  %v1905 = vmax.f32 %v1572, 0.0
  %v1906 = vmax.f32 %v1575, 0.0
  %v1907 = vmax.f32 %v1578, 0.0
  %v1908 = vmax.f32 %v1581, 0.0
  %v1909 = vmax.f32 %v1584, 0.0
  %v1910 = vmax.f32 %v1587, 0.0
  %v1911 = vmax.f32 %v1590, 0.0
  %v1912 = vmax.f32 %v1593, 0.0
  %v1913 = vmax.f32 %v1596, 0.0
  %v1914 = vmax.f32 %v1599, 0.0
  %v1915 = vmax.f32 %v1602, 0.0
  %v1916 = vmax.f32 %v1605, 0.0
  %v1917 = vmax.f32 %v1608, 0.0
  %v1918 = vmax.f32 %v1611, 0.0
  %v1919 = vmax.f32 %v1614, 0.0
  %v1920 = vmax.f32 %v1617, 0.0
  %v1921 = vmax.f32 %v1620, 0.0
  %v1922 = vmax.f32 %v1623, 0.0
  %v1923 = vmax.f32 %v1626, 0.0
  %v1924 = vmax.f32 %v1629, 0.0
  %v1925 = vmax.f32 %v1632, 0.0
  %v1926 = vmax.f32 %v1635, 0.0
  %v1927 = vmax.f32 %v1638, 0.0
  %v1928 = vmax.f32 %v1641, 0.0
  %v1929 = vmax.f32 %v1644, 0.0
  %v1930 = vmax.f32 %v1647, 0.0
  %v1931 = vmax.f32 %v1650, 0.0
  %v1932 = vmax.f32 %v1653, 0.0
  %v1933 = vmax.f32 %v1656, 0.0
  %v1934 = vmax.f32 %v1659, 0.0
  %v1935 = vmax.f32 %v1662, 0.0
  %v1936 = vmax.f32 %v1665, 0.0
  %v1937 = vmax.f32 %v1668, 0.0
  %v1938 = vmax.f32 %v1671, 0.0
  %v1939 = vmax.f32 %v1674, 0.0
  %v1940 = vmax.f32 %v1677, 0.0
  %v1941 = vmax.f32 %v1680, 0.0
  %v1942 = vmax.f32 %v1683, 0.0
  %v1943 = vmax.f32 %v1686, 0.0
  %v1944 = vmax.f32 %v1689, 0.0
  %v1945 = vmax.f32 %v1692, 0.0
  %v1946 = vmax.f32 %v1695, 0.0
  %v1947 = vmax.f32 %v1698, 0.0
  %v1948 = vmax.f32 %v1701, 0.0
  %v1949 = vmax.f32 %v1704, 0.0
  %v1950 = vmax.f32 %v1707, 0.0
  %v1951 = vmax.f32 %v1710, 0.0
  %v1952 = vmax.f32 %v1713, 0.0
  %v1953 = vmax.f32 %v1716, 0.0
  %v1954 = vmax.f32 %v1719, 0.0
  %v1955 = vmax.f32 %v1722, 0.0
  %v1956 = vmax.f32 %v1725, 0.0
  %v1957 = vmax.f32 %v1728, 0.0
  %v1958 = vmax.f32 %v1731, 0.0
  %v1959 = vmax.f32 %v1734, 0.0
  %v1960 = vmax.f32 %v1737, 0.0
  %v1961 = vmax.f32 %v1740, 0.0
  %v1962 = vmax.f32 %v1743, 0.0
  %v1963 = vmax.f32 %v1746, 0.0
  %v1964 = vmax.f32 %v1749, 0.0
  %v1965 = vmax.f32 %v1752, 0.0
  %v1966 = vmax.f32 %v1755, 0.0
  %v1967 = vmax.f32 %v1758, 0.0
  %v1968 = vmax.f32 %v1761, 0.0
  %v1969 = vmax.f32 %v1764, 0.0
  %v1970 = vmax.f32 %v1767, 0.0
  %v1971 = vmax.f32 %v1770, 0.0
  %v1972 = vmax.f32 %v1773, 0.0
  %v1973 = vmax.f32 %v1776, 0.0
  %v1974 = vmax.f32 %v1779, 0.0
  %v1975 = vmax.f32 %v1782, 0.0
  %v1976 = vmax.f32 %v1785, 0.0
  %v1977 = vmax.f32 %v1788, 0.0
  %v1978 = vmax.f32 %v1791, 0.0
  %v1979 = vmax.f32 %v1794, 0.0
  %v1980 = vmax.f32 %v1797, 0.0
  %v1981 = vmax.f32 %v1800, 0.0
  %v1982 = vmax.f32 %v1803, 0.0
  %v1983 = vmax.f32 %v1806, 0.0
  %v1984 = vmax.f32 %v1809, 0.0
  %v1985 = vmax.f32 %v1812, 0.0
  %v1986 = vmax.f32 %v1815, 0.0
  %v1987 = vmax.f32 %v1818, 0.0
  %v1988 = vmax.f32 %v1821, 0.0
  %v1989 = vmax.f32 %v1824, 0.0
  %v1990 = vmax.f32 %v1827, 0.0
  %v1991 = vmax.f32 %v1830, 0.0
  %v1992 = vmax.f32 %v1833, 0.0
  %v1993 = vmax.f32 %v1836, 0.0
  %v1994 = vmax.f32 %v1839, 0.0
  %v1995 = vmax.f32 %v1842, 0.0
  %v1996 = vmax.f32 %v1845, 0.0
  %v1997 = vmax.f32 %v1848, 0.0
  %v1998 = vmax.f32 %v1851, 0.0
  %v1999 = vmax.f32 %v1854, 0.0
  %v2000 = vmax.f32 %v1857, 0.0
  %v2001 = vmax.f32 %v1860, 0.0
  %v2002 = vmax.f32 %v1863, 0.0
  %v2003 = vmax.f32 %v1866, 0.0
  %v2004 = vmax.f32 %v1869, 0.0
  %v2005 = vmax.f32 %v1872, 0.0
  %v2006 = vmax.f32 %v1875, 0.0
  %v2007 = vmax.f32 %v1878, 0.0
  %v2008 = vld [vmem:[%s5] sm:$0xff]
  %v2009 = vld [vmem:[%s5 + $0x8] sm:$0xff]
  %v2010 = vld [vmem:[%s5 + $0x10] sm:$0xff]
  %v2011 = vld [vmem:[%s5 + $0x18] sm:$0xff]
  %v2012 = vld [vmem:[%s5 + $0x20] sm:$0xff]
  %v2013 = vld [vmem:[%s5 + $0x28] sm:$0xff]
  %v2014 = vld [vmem:[%s5 + $0x30] sm:$0xff]
  %v2015 = vld [vmem:[%s5 + $0x38] sm:$0xff]
  %v2016 = vld [vmem:[%s6] sm:$0x1]
  %v2018 = vperm.slane %v2016, 0
  %v2021 = vsel %vm1094, %v1880, 0
  %v2024 = vsel %vm1094, %v1881, 0
  %v2027 = vsel %vm1094, %v1882, 0
  %v2030 = vsel %vm1094, %v1883, 0
  %v2033 = vsel %vm1094, %v1884, 0
  %v2036 = vsel %vm1094, %v1885, 0
  %v2039 = vsel %vm1094, %v1886, 0
  %v2042 = vsel %vm1094, %v1887, 0
  %v2045 = vsel %vm1094, %v1888, 0
  %v2048 = vsel %vm1094, %v1889, 0
  %v2051 = vsel %vm1094, %v1890, 0
  %v2054 = vsel %vm1094, %v1891, 0
  %v2057 = vsel %vm1094, %v1892, 0
  %v2060 = vsel %vm1094, %v1893, 0
  %v2063 = vsel %vm1094, %v1894, 0
  %v2066 = vsel %vm1094, %v1895, 0
  %v2069 = vsel %vm1094, %v1896, 0
  %v2072 = vsel %vm1094, %v1897, 0
  %v2075 = vsel %vm1094, %v1898, 0
  %v2078 = vsel %vm1094, %v1899, 0
  %v2081 = vsel %vm1094, %v1900, 0
  %v2084 = vsel %vm1094, %v1901, 0
  %v2087 = vsel %vm1094, %v1902, 0
  %v2090 = vsel %vm1094, %v1903, 0
  %v2093 = vsel %vm1094, %v1904, 0
  %v2096 = vsel %vm1094, %v1905, 0
  %v2099 = vsel %vm1094, %v1906, 0
  %v2102 = vsel %vm1094, %v1907, 0
  %v2105 = vsel %vm1094, %v1908, 0
  %v2108 = vsel %vm1094, %v1909, 0
  %v2111 = vsel %vm1094, %v1910, 0
  %v2114 = vsel %vm1094, %v1911, 0
  %v2117 = vsel %vm1094, %v1912, 0
  %v2120 = vsel %vm1094, %v1913, 0
  %v2123 = vsel %vm1094, %v1914, 0
  %v2126 = vsel %vm1094, %v1915, 0
  %v2129 = vsel %vm1094, %v1916, 0
  %v2132 = vsel %vm1094, %v1917, 0
  %v2135 = vsel %vm1094, %v1918, 0
  %v2138 = vsel %vm1094, %v1919, 0
  %v2141 = vsel %vm1094, %v1920, 0
  %v2144 = vsel %vm1094, %v1921, 0
  %v2147 = vsel %vm1094, %v1922, 0
  %v2150 = vsel %vm1094, %v1923, 0
  %v2153 = vsel %vm1094, %v1924, 0
  %v2156 = vsel %vm1094, %v1925, 0
  %v2159 = vsel %vm1094, %v1926, 0
  %v2162 = vsel %vm1094, %v1927, 0
  %v2165 = vsel %vm1094, %v1928, 0
  %v2168 = vsel %vm1094, %v1929, 0
  %v2171 = vsel %vm1094, %v1930, 0
  %v2174 = vsel %vm1094, %v1931, 0
  %v2177 = vsel %vm1094, %v1932, 0
  %v2180 = vsel %vm1094, %v1933, 0
  %v2183 = vsel %vm1094, %v1934, 0
  %v2186 = vsel %vm1094, %v1935, 0
  %v2189 = vsel %vm1094, %v1936, 0
  %v2192 = vsel %vm1094, %v1937, 0
  %v2195 = vsel %vm1094, %v1938, 0
  %v2198 = vsel %vm1094, %v1939, 0
  %v2201 = vsel %vm1094, %v1940, 0
  %v2204 = vsel %vm1094, %v1941, 0
  %v2207 = vsel %vm1094, %v1942, 0
  %v2210 = vsel %vm1094, %v1943, 0
  %v2213 = vsel %vm1094, %v1944, 0
  %v2216 = vsel %vm1094, %v1945, 0
  %v2219 = vsel %vm1094, %v1946, 0
  %v2222 = vsel %vm1094, %v1947, 0
  %v2225 = vsel %vm1094, %v1948, 0
  %v2228 = vsel %vm1094, %v1949, 0
  %v2231 = vsel %vm1094, %v1950, 0
  %v2234 = vsel %vm1094, %v1951, 0
  %v2237 = vsel %vm1094, %v1952, 0
  %v2240 = vsel %vm1094, %v1953, 0
  %v2243 = vsel %vm1094, %v1954, 0
  %v2246 = vsel %vm1094, %v1955, 0
  %v2249 = vsel %vm1094, %v1956, 0
  %v2252 = vsel %vm1094, %v1957, 0
  %v2255 = vsel %vm1094, %v1958, 0
  %v2258 = vsel %vm1094, %v1959, 0
  %v2261 = vsel %vm1094, %v1960, 0
  %v2264 = vsel %vm1094, %v1961, 0
  %v2267 = vsel %vm1094, %v1962, 0
  %v2270 = vsel %vm1094, %v1963, 0
  %v2273 = vsel %vm1094, %v1964, 0
  %v2276 = vsel %vm1094, %v1965, 0
  %v2279 = vsel %vm1094, %v1966, 0
  %v2282 = vsel %vm1094, %v1967, 0
  %v2285 = vsel %vm1094, %v1968, 0
  %v2288 = vsel %vm1094, %v1969, 0
  %v2291 = vsel %vm1094, %v1970, 0
  %v2294 = vsel %vm1094, %v1971, 0
  %v2297 = vsel %vm1094, %v1972, 0
  %v2300 = vsel %vm1094, %v1973, 0
  %v2303 = vsel %vm1094, %v1974, 0
  %v2306 = vsel %vm1094, %v1975, 0
  %v2309 = vsel %vm1094, %v1976, 0
  %v2312 = vsel %vm1094, %v1977, 0
  %v2315 = vsel %vm1094, %v1978, 0
  %v2318 = vsel %vm1094, %v1979, 0
  %v2321 = vsel %vm1094, %v1980, 0
  %v2324 = vsel %vm1094, %v1981, 0
  %v2327 = vsel %vm1094, %v1982, 0
  %v2330 = vsel %vm1094, %v1983, 0
  %v2333 = vsel %vm1094, %v1984, 0
  %v2336 = vsel %vm1094, %v1985, 0
  %v2339 = vsel %vm1094, %v1986, 0
  %v2342 = vsel %vm1094, %v1987, 0
  %v2345 = vsel %vm1094, %v1988, 0
  %v2348 = vsel %vm1094, %v1989, 0
  %v2351 = vsel %vm1094, %v1990, 0
  %v2354 = vsel %vm1094, %v1991, 0
  %v2357 = vsel %vm1094, %v1992, 0
  %v2360 = vsel %vm1094, %v1993, 0
  %v2363 = vsel %vm1094, %v1994, 0
  %v2366 = vsel %vm1094, %v1995, 0
  %v2369 = vsel %vm1094, %v1996, 0
  %v2372 = vsel %vm1094, %v1997, 0
  %v2375 = vsel %vm1094, %v1998, 0
  %v2378 = vsel %vm1094, %v1999, 0
  %v2381 = vsel %vm1094, %v2000, 0
  %v2384 = vsel %vm1094, %v2001, 0
  %v2387 = vsel %vm1094, %v2002, 0
  %v2390 = vsel %vm1094, %v2003, 0
  %v2393 = vsel %vm1094, %v2004, 0
  %v2396 = vsel %vm1094, %v2005, 0
  %v2399 = vsel %vm1094, %v2006, 0
  %v2402 = vsel %vm1094, %v2007, 0
  %2404 = vmatpush.msra.mxu0 0.0
  %2405 = vmatpush.msra.mxu0 0.0
  %2406 = vmatpush.msra.mxu0 0.0
  %2407 = vmatpush.msra.mxu0 0.0
  %2408 = vmatpush.msra.mxu0 0.0
  %2409 = vmatpush.msra.mxu0 0.0
  %2410 = vmatpush.msra.mxu0 0.0
  %2411 = vmatpush.msra.mxu0 0.0
  %2412 = vmatpush.msra.mxu0 %v2015
  %2413 = vmatpush.msra.mxu0 %v2014
  %2414 = vmatpush.msra.mxu0 %v2013
  %2415 = vmatpush.msra.mxu0 %v2012
  %2416 = vmatpush.msra.mxu0 %v2011
  %2417 = vmatpush.msra.mxu0 %v2010
  %2418 = vmatpush.msra.mxu0 %v2009
  %2419 = vmatpush.msra.mxu0 %v2008
  %2420 = vmatmul.f32.gmra.mxu0 %v2021
  %v2421 = vpop.f32.mrf.mxu0
  %v2422 = vadd.f32 %v2018, %v2421
  %2423 = vmatmul.f32.gmra.mxu0 %v2024
  %v2424 = vpop.f32.mrf.mxu0
  %v2425 = vadd.f32 %v2018, %v2424
  %2426 = vmatmul.f32.gmra.mxu0 %v2027
  %v2427 = vpop.f32.mrf.mxu0
  %v2428 = vadd.f32 %v2018, %v2427
  %2429 = vmatmul.f32.gmra.mxu0 %v2030
  %v2430 = vpop.f32.mrf.mxu0
  %v2431 = vadd.f32 %v2018, %v2430
  %2432 = vmatmul.f32.gmra.mxu0 %v2033
  %v2433 = vpop.f32.mrf.mxu0
  %v2434 = vadd.f32 %v2018, %v2433
  %2435 = vmatmul.f32.gmra.mxu0 %v2036
  %v2436 = vpop.f32.mrf.mxu0
  %v2437 = vadd.f32 %v2018, %v2436
  %2438 = vmatmul.f32.gmra.mxu0 %v2039
  %v2439 = vpop.f32.mrf.mxu0
  %v2440 = vadd.f32 %v2018, %v2439
  %2441 = vmatmul.f32.gmra.mxu0 %v2042
  %v2442 = vpop.f32.mrf.mxu0
  %v2443 = vadd.f32 %v2018, %v2442
  %2444 = vmatmul.f32.gmra.mxu0 %v2045
  %v2445 = vpop.f32.mrf.mxu0
  %v2446 = vadd.f32 %v2018, %v2445
  %2447 = vmatmul.f32.gmra.mxu0 %v2048
  %v2448 = vpop.f32.mrf.mxu0
  %v2449 = vadd.f32 %v2018, %v2448
  %2450 = vmatmul.f32.gmra.mxu0 %v2051
  %v2451 = vpop.f32.mrf.mxu0
  %v2452 = vadd.f32 %v2018, %v2451
  %2453 = vmatmul.f32.gmra.mxu0 %v2054
  %v2454 = vpop.f32.mrf.mxu0
  %v2455 = vadd.f32 %v2018, %v2454
  %2456 = vmatmul.f32.gmra.mxu0 %v2057
  %v2457 = vpop.f32.mrf.mxu0
  %v2458 = vadd.f32 %v2018, %v2457
  %2459 = vmatmul.f32.gmra.mxu0 %v2060
  %v2460 = vpop.f32.mrf.mxu0
  %v2461 = vadd.f32 %v2018, %v2460
  %2462 = vmatmul.f32.gmra.mxu0 %v2063
  %v2463 = vpop.f32.mrf.mxu0
  %v2464 = vadd.f32 %v2018, %v2463
  %2465 = vmatmul.f32.gmra.mxu0 %v2066
  %v2466 = vpop.f32.mrf.mxu0
  %v2467 = vadd.f32 %v2018, %v2466
  %2468 = vmatmul.f32.gmra.mxu0 %v2069
  %v2469 = vpop.f32.mrf.mxu0
  %v2470 = vadd.f32 %v2018, %v2469
  %2471 = vmatmul.f32.gmra.mxu0 %v2072
  %v2472 = vpop.f32.mrf.mxu0
  %v2473 = vadd.f32 %v2018, %v2472
  %2474 = vmatmul.f32.gmra.mxu0 %v2075
  %v2475 = vpop.f32.mrf.mxu0
  %v2476 = vadd.f32 %v2018, %v2475
  %2477 = vmatmul.f32.gmra.mxu0 %v2078
  %v2478 = vpop.f32.mrf.mxu0
  %v2479 = vadd.f32 %v2018, %v2478
  %2480 = vmatmul.f32.gmra.mxu0 %v2081
  %v2481 = vpop.f32.mrf.mxu0
  %v2482 = vadd.f32 %v2018, %v2481
  %2483 = vmatmul.f32.gmra.mxu0 %v2084
  %v2484 = vpop.f32.mrf.mxu0
  %v2485 = vadd.f32 %v2018, %v2484
  %2486 = vmatmul.f32.gmra.mxu0 %v2087
  %v2487 = vpop.f32.mrf.mxu0
  %v2488 = vadd.f32 %v2018, %v2487
  %2489 = vmatmul.f32.gmra.mxu0 %v2090
  %v2490 = vpop.f32.mrf.mxu0
  %v2491 = vadd.f32 %v2018, %v2490
  %2492 = vmatmul.f32.gmra.mxu0 %v2093
  %v2493 = vpop.f32.mrf.mxu0
  %v2494 = vadd.f32 %v2018, %v2493
  %2495 = vmatmul.f32.gmra.mxu0 %v2096
  %v2496 = vpop.f32.mrf.mxu0
  %v2497 = vadd.f32 %v2018, %v2496
  %2498 = vmatmul.f32.gmra.mxu0 %v2099
  %v2499 = vpop.f32.mrf.mxu0
  %v2500 = vadd.f32 %v2018, %v2499
  %2501 = vmatmul.f32.gmra.mxu0 %v2102
  %v2502 = vpop.f32.mrf.mxu0
  %v2503 = vadd.f32 %v2018, %v2502
  %2504 = vmatmul.f32.gmra.mxu0 %v2105
  %v2505 = vpop.f32.mrf.mxu0
  %v2506 = vadd.f32 %v2018, %v2505
  %2507 = vmatmul.f32.gmra.mxu0 %v2108
  %v2508 = vpop.f32.mrf.mxu0
  %v2509 = vadd.f32 %v2018, %v2508
  %2510 = vmatmul.f32.gmra.mxu0 %v2111
  %v2511 = vpop.f32.mrf.mxu0
  %v2512 = vadd.f32 %v2018, %v2511
  %2513 = vmatmul.f32.gmra.mxu0 %v2114
  %v2514 = vpop.f32.mrf.mxu0
  %v2515 = vadd.f32 %v2018, %v2514
  %2516 = vmatmul.f32.gmra.mxu0 %v2117
  %v2517 = vpop.f32.mrf.mxu0
  %v2518 = vadd.f32 %v2018, %v2517
  %2519 = vmatmul.f32.gmra.mxu0 %v2120
  %v2520 = vpop.f32.mrf.mxu0
  %v2521 = vadd.f32 %v2018, %v2520
  %2522 = vmatmul.f32.gmra.mxu0 %v2123
  %v2523 = vpop.f32.mrf.mxu0
  %v2524 = vadd.f32 %v2018, %v2523
  %2525 = vmatmul.f32.gmra.mxu0 %v2126
  %v2526 = vpop.f32.mrf.mxu0
  %v2527 = vadd.f32 %v2018, %v2526
  %2528 = vmatmul.f32.gmra.mxu0 %v2129
  %v2529 = vpop.f32.mrf.mxu0
  %v2530 = vadd.f32 %v2018, %v2529
  %2531 = vmatmul.f32.gmra.mxu0 %v2132
  %v2532 = vpop.f32.mrf.mxu0
  %v2533 = vadd.f32 %v2018, %v2532
  %2534 = vmatmul.f32.gmra.mxu0 %v2135
  %v2535 = vpop.f32.mrf.mxu0
  %v2536 = vadd.f32 %v2018, %v2535
  %2537 = vmatmul.f32.gmra.mxu0 %v2138
  %v2538 = vpop.f32.mrf.mxu0
  %v2539 = vadd.f32 %v2018, %v2538
  %2540 = vmatmul.f32.gmra.mxu0 %v2141
  %v2541 = vpop.f32.mrf.mxu0
  %v2542 = vadd.f32 %v2018, %v2541
  %2543 = vmatmul.f32.gmra.mxu0 %v2144
  %v2544 = vpop.f32.mrf.mxu0
  %v2545 = vadd.f32 %v2018, %v2544
  %2546 = vmatmul.f32.gmra.mxu0 %v2147
  %v2547 = vpop.f32.mrf.mxu0
  %v2548 = vadd.f32 %v2018, %v2547
  %2549 = vmatmul.f32.gmra.mxu0 %v2150
  %v2550 = vpop.f32.mrf.mxu0
  %v2551 = vadd.f32 %v2018, %v2550
  %2552 = vmatmul.f32.gmra.mxu0 %v2153
  %v2553 = vpop.f32.mrf.mxu0
  %v2554 = vadd.f32 %v2018, %v2553
  %2555 = vmatmul.f32.gmra.mxu0 %v2156
  %v2556 = vpop.f32.mrf.mxu0
  %v2557 = vadd.f32 %v2018, %v2556
  %2558 = vmatmul.f32.gmra.mxu0 %v2159
  %v2559 = vpop.f32.mrf.mxu0
  %v2560 = vadd.f32 %v2018, %v2559
  %2561 = vmatmul.f32.gmra.mxu0 %v2162
  %v2562 = vpop.f32.mrf.mxu0
  %v2563 = vadd.f32 %v2018, %v2562
  %2564 = vmatmul.f32.gmra.mxu0 %v2165
  %v2565 = vpop.f32.mrf.mxu0
  %v2566 = vadd.f32 %v2018, %v2565
  %2567 = vmatmul.f32.gmra.mxu0 %v2168
  %v2568 = vpop.f32.mrf.mxu0
  %v2569 = vadd.f32 %v2018, %v2568
  %2570 = vmatmul.f32.gmra.mxu0 %v2171
  %v2571 = vpop.f32.mrf.mxu0
  %v2572 = vadd.f32 %v2018, %v2571
  %2573 = vmatmul.f32.gmra.mxu0 %v2174
  %v2574 = vpop.f32.mrf.mxu0
  %v2575 = vadd.f32 %v2018, %v2574
  %2576 = vmatmul.f32.gmra.mxu0 %v2177
  %v2577 = vpop.f32.mrf.mxu0
  %v2578 = vadd.f32 %v2018, %v2577
  %2579 = vmatmul.f32.gmra.mxu0 %v2180
  %v2580 = vpop.f32.mrf.mxu0
  %v2581 = vadd.f32 %v2018, %v2580
  %2582 = vmatmul.f32.gmra.mxu0 %v2183
  %v2583 = vpop.f32.mrf.mxu0
  %v2584 = vadd.f32 %v2018, %v2583
  %2585 = vmatmul.f32.gmra.mxu0 %v2186
  %v2586 = vpop.f32.mrf.mxu0
  %v2587 = vadd.f32 %v2018, %v2586
  %2588 = vmatmul.f32.gmra.mxu0 %v2189
  %v2589 = vpop.f32.mrf.mxu0
  %v2590 = vadd.f32 %v2018, %v2589
  %2591 = vmatmul.f32.gmra.mxu0 %v2192
  %v2592 = vpop.f32.mrf.mxu0
  %v2593 = vadd.f32 %v2018, %v2592
  %2594 = vmatmul.f32.gmra.mxu0 %v2195
  %v2595 = vpop.f32.mrf.mxu0
  %v2596 = vadd.f32 %v2018, %v2595
  %2597 = vmatmul.f32.gmra.mxu0 %v2198
  %v2598 = vpop.f32.mrf.mxu0
  %v2599 = vadd.f32 %v2018, %v2598
  %2600 = vmatmul.f32.gmra.mxu0 %v2201
  %v2601 = vpop.f32.mrf.mxu0
  %v2602 = vadd.f32 %v2018, %v2601
  %2603 = vmatmul.f32.gmra.mxu0 %v2204
  %v2604 = vpop.f32.mrf.mxu0
  %v2605 = vadd.f32 %v2018, %v2604
  %2606 = vmatmul.f32.gmra.mxu0 %v2207
  %v2607 = vpop.f32.mrf.mxu0
  %v2608 = vadd.f32 %v2018, %v2607
  %2609 = vmatmul.f32.gmra.mxu0 %v2210
  %v2610 = vpop.f32.mrf.mxu0
  %v2611 = vadd.f32 %v2018, %v2610
  %2612 = vmatmul.f32.gmra.mxu0 %v2213
  %v2613 = vpop.f32.mrf.mxu0
  %v2614 = vadd.f32 %v2018, %v2613
  %2615 = vmatmul.f32.gmra.mxu0 %v2216
  %v2616 = vpop.f32.mrf.mxu0
  %v2617 = vadd.f32 %v2018, %v2616
  %2618 = vmatmul.f32.gmra.mxu0 %v2219
  %v2619 = vpop.f32.mrf.mxu0
  %v2620 = vadd.f32 %v2018, %v2619
  %2621 = vmatmul.f32.gmra.mxu0 %v2222
  %v2622 = vpop.f32.mrf.mxu0
  %v2623 = vadd.f32 %v2018, %v2622
  %2624 = vmatmul.f32.gmra.mxu0 %v2225
  %v2625 = vpop.f32.mrf.mxu0
  %v2626 = vadd.f32 %v2018, %v2625
  %2627 = vmatmul.f32.gmra.mxu0 %v2228
  %v2628 = vpop.f32.mrf.mxu0
  %v2629 = vadd.f32 %v2018, %v2628
  %2630 = vmatmul.f32.gmra.mxu0 %v2231
  %v2631 = vpop.f32.mrf.mxu0
  %v2632 = vadd.f32 %v2018, %v2631
  %2633 = vmatmul.f32.gmra.mxu0 %v2234
  %v2634 = vpop.f32.mrf.mxu0
  %v2635 = vadd.f32 %v2018, %v2634
  %2636 = vmatmul.f32.gmra.mxu0 %v2237
  %v2637 = vpop.f32.mrf.mxu0
  %v2638 = vadd.f32 %v2018, %v2637
  %2639 = vmatmul.f32.gmra.mxu0 %v2240
  %v2640 = vpop.f32.mrf.mxu0
  %v2641 = vadd.f32 %v2018, %v2640
  %2642 = vmatmul.f32.gmra.mxu0 %v2243
  %v2643 = vpop.f32.mrf.mxu0
  %v2644 = vadd.f32 %v2018, %v2643
  %2645 = vmatmul.f32.gmra.mxu0 %v2246
  %v2646 = vpop.f32.mrf.mxu0
  %v2647 = vadd.f32 %v2018, %v2646
  %2648 = vmatmul.f32.gmra.mxu0 %v2249
  %v2649 = vpop.f32.mrf.mxu0
  %v2650 = vadd.f32 %v2018, %v2649
  %2651 = vmatmul.f32.gmra.mxu0 %v2252
  %v2652 = vpop.f32.mrf.mxu0
  %v2653 = vadd.f32 %v2018, %v2652
  %2654 = vmatmul.f32.gmra.mxu0 %v2255
  %v2655 = vpop.f32.mrf.mxu0
  %v2656 = vadd.f32 %v2018, %v2655
  %2657 = vmatmul.f32.gmra.mxu0 %v2258
  %v2658 = vpop.f32.mrf.mxu0
  %v2659 = vadd.f32 %v2018, %v2658
  %2660 = vmatmul.f32.gmra.mxu0 %v2261
  %v2661 = vpop.f32.mrf.mxu0
  %v2662 = vadd.f32 %v2018, %v2661
  %2663 = vmatmul.f32.gmra.mxu0 %v2264
  %v2664 = vpop.f32.mrf.mxu0
  %v2665 = vadd.f32 %v2018, %v2664
  %2666 = vmatmul.f32.gmra.mxu0 %v2267
  %v2667 = vpop.f32.mrf.mxu0
  %v2668 = vadd.f32 %v2018, %v2667
  %2669 = vmatmul.f32.gmra.mxu0 %v2270
  %v2670 = vpop.f32.mrf.mxu0
  %v2671 = vadd.f32 %v2018, %v2670
  %2672 = vmatmul.f32.gmra.mxu0 %v2273
  %v2673 = vpop.f32.mrf.mxu0
  %v2674 = vadd.f32 %v2018, %v2673
  %2675 = vmatmul.f32.gmra.mxu0 %v2276
  %v2676 = vpop.f32.mrf.mxu0
  %v2677 = vadd.f32 %v2018, %v2676
  %2678 = vmatmul.f32.gmra.mxu0 %v2279
  %v2679 = vpop.f32.mrf.mxu0
  %v2680 = vadd.f32 %v2018, %v2679
  %2681 = vmatmul.f32.gmra.mxu0 %v2282
  %v2682 = vpop.f32.mrf.mxu0
  %v2683 = vadd.f32 %v2018, %v2682
  %2684 = vmatmul.f32.gmra.mxu0 %v2285
  %v2685 = vpop.f32.mrf.mxu0
  %v2686 = vadd.f32 %v2018, %v2685
  %2687 = vmatmul.f32.gmra.mxu0 %v2288
  %v2688 = vpop.f32.mrf.mxu0
  %v2689 = vadd.f32 %v2018, %v2688
  %2690 = vmatmul.f32.gmra.mxu0 %v2291
  %v2691 = vpop.f32.mrf.mxu0
  %v2692 = vadd.f32 %v2018, %v2691
  %2693 = vmatmul.f32.gmra.mxu0 %v2294
  %v2694 = vpop.f32.mrf.mxu0
  %v2695 = vadd.f32 %v2018, %v2694
  %2696 = vmatmul.f32.gmra.mxu0 %v2297
  %v2697 = vpop.f32.mrf.mxu0
  %v2698 = vadd.f32 %v2018, %v2697
  %2699 = vmatmul.f32.gmra.mxu0 %v2300
  %v2700 = vpop.f32.mrf.mxu0
  %v2701 = vadd.f32 %v2018, %v2700
  %2702 = vmatmul.f32.gmra.mxu0 %v2303
  %v2703 = vpop.f32.mrf.mxu0
  %v2704 = vadd.f32 %v2018, %v2703
  %2705 = vmatmul.f32.gmra.mxu0 %v2306
  %v2706 = vpop.f32.mrf.mxu0
  %v2707 = vadd.f32 %v2018, %v2706
  %2708 = vmatmul.f32.gmra.mxu0 %v2309
  %v2709 = vpop.f32.mrf.mxu0
  %v2710 = vadd.f32 %v2018, %v2709
  %2711 = vmatmul.f32.gmra.mxu0 %v2312
  %v2712 = vpop.f32.mrf.mxu0
  %v2713 = vadd.f32 %v2018, %v2712
  %2714 = vmatmul.f32.gmra.mxu0 %v2315
  %v2715 = vpop.f32.mrf.mxu0
  %v2716 = vadd.f32 %v2018, %v2715
  %2717 = vmatmul.f32.gmra.mxu0 %v2318
  %v2718 = vpop.f32.mrf.mxu0
  %v2719 = vadd.f32 %v2018, %v2718
  %2720 = vmatmul.f32.gmra.mxu0 %v2321
  %v2721 = vpop.f32.mrf.mxu0
  %v2722 = vadd.f32 %v2018, %v2721
  %2723 = vmatmul.f32.gmra.mxu0 %v2324
  %v2724 = vpop.f32.mrf.mxu0
  %v2725 = vadd.f32 %v2018, %v2724
  %2726 = vmatmul.f32.gmra.mxu0 %v2327
  %v2727 = vpop.f32.mrf.mxu0
  %v2728 = vadd.f32 %v2018, %v2727
  %2729 = vmatmul.f32.gmra.mxu0 %v2330
  %v2730 = vpop.f32.mrf.mxu0
  %v2731 = vadd.f32 %v2018, %v2730
  %2732 = vmatmul.f32.gmra.mxu0 %v2333
  %v2733 = vpop.f32.mrf.mxu0
  %v2734 = vadd.f32 %v2018, %v2733
  %2735 = vmatmul.f32.gmra.mxu0 %v2336
  %v2736 = vpop.f32.mrf.mxu0
  %v2737 = vadd.f32 %v2018, %v2736
  %2738 = vmatmul.f32.gmra.mxu0 %v2339
  %v2739 = vpop.f32.mrf.mxu0
  %v2740 = vadd.f32 %v2018, %v2739
  %2741 = vmatmul.f32.gmra.mxu0 %v2342
  %v2742 = vpop.f32.mrf.mxu0
  %v2743 = vadd.f32 %v2018, %v2742
  %2744 = vmatmul.f32.gmra.mxu0 %v2345
  %v2745 = vpop.f32.mrf.mxu0
  %v2746 = vadd.f32 %v2018, %v2745
  %2747 = vmatmul.f32.gmra.mxu0 %v2348
  %v2748 = vpop.f32.mrf.mxu0
  %v2749 = vadd.f32 %v2018, %v2748
  %2750 = vmatmul.f32.gmra.mxu0 %v2351
  %v2751 = vpop.f32.mrf.mxu0
  %v2752 = vadd.f32 %v2018, %v2751
  %2753 = vmatmul.f32.gmra.mxu0 %v2354
  %v2754 = vpop.f32.mrf.mxu0
  %v2755 = vadd.f32 %v2018, %v2754
  %2756 = vmatmul.f32.gmra.mxu0 %v2357
  %v2757 = vpop.f32.mrf.mxu0
  %v2758 = vadd.f32 %v2018, %v2757
  %2759 = vmatmul.f32.gmra.mxu0 %v2360
  %v2760 = vpop.f32.mrf.mxu0
  %v2761 = vadd.f32 %v2018, %v2760
  %2762 = vmatmul.f32.gmra.mxu0 %v2363
  %v2763 = vpop.f32.mrf.mxu0
  %v2764 = vadd.f32 %v2018, %v2763
  %2765 = vmatmul.f32.gmra.mxu0 %v2366
  %v2766 = vpop.f32.mrf.mxu0
  %v2767 = vadd.f32 %v2018, %v2766
  %2768 = vmatmul.f32.gmra.mxu0 %v2369
  %v2769 = vpop.f32.mrf.mxu0
  %v2770 = vadd.f32 %v2018, %v2769
  %2771 = vmatmul.f32.gmra.mxu0 %v2372
  %v2772 = vpop.f32.mrf.mxu0
  %v2773 = vadd.f32 %v2018, %v2772
  %2774 = vmatmul.f32.gmra.mxu0 %v2375
  %v2775 = vpop.f32.mrf.mxu0
  %v2776 = vadd.f32 %v2018, %v2775
  %2777 = vmatmul.f32.gmra.mxu0 %v2378
  %v2778 = vpop.f32.mrf.mxu0
  %v2779 = vadd.f32 %v2018, %v2778
  %2780 = vmatmul.f32.gmra.mxu0 %v2381
  %v2781 = vpop.f32.mrf.mxu0
  %v2782 = vadd.f32 %v2018, %v2781
  %2783 = vmatmul.f32.gmra.mxu0 %v2384
  %v2784 = vpop.f32.mrf.mxu0
  %v2785 = vadd.f32 %v2018, %v2784
  %2786 = vmatmul.f32.gmra.mxu0 %v2387
  %v2787 = vpop.f32.mrf.mxu0
  %v2788 = vadd.f32 %v2018, %v2787
  %2789 = vmatmul.f32.gmra.mxu0 %v2390
  %v2790 = vpop.f32.mrf.mxu0
  %v2791 = vadd.f32 %v2018, %v2790
  %2792 = vmatmul.f32.gmra.mxu0 %v2393
  %v2793 = vpop.f32.mrf.mxu0
  %v2794 = vadd.f32 %v2018, %v2793
  %2795 = vmatmul.f32.gmra.mxu0 %v2396
  %v2796 = vpop.f32.mrf.mxu0
  %v2797 = vadd.f32 %v2018, %v2796
  %2798 = vmatmul.f32.gmra.mxu0 %v2399
  %v2799 = vpop.f32.mrf.mxu0
  %v2800 = vadd.f32 %v2018, %v2799
  %2801 = vmatmul.f32.gmra.mxu0 %v2402
  %v2802 = vpop.f32.mrf.mxu0
  %v2803 = vadd.f32 %v2018, %v2802
  %2804 = vdwg.mxu0
  %v2805 = vmax.f32 %v2422, 0.0
  %v2806 = vmax.f32 %v2425, 0.0
  %v2807 = vmax.f32 %v2428, 0.0
  %v2808 = vmax.f32 %v2431, 0.0
  %v2809 = vmax.f32 %v2434, 0.0
  %v2810 = vmax.f32 %v2437, 0.0
  %v2811 = vmax.f32 %v2440, 0.0
  %v2812 = vmax.f32 %v2443, 0.0
  %v2813 = vmax.f32 %v2446, 0.0
  %v2814 = vmax.f32 %v2449, 0.0
  %v2815 = vmax.f32 %v2452, 0.0
  %v2816 = vmax.f32 %v2455, 0.0
  %v2817 = vmax.f32 %v2458, 0.0
  %v2818 = vmax.f32 %v2461, 0.0
  %v2819 = vmax.f32 %v2464, 0.0
  %v2820 = vmax.f32 %v2467, 0.0
  %v2821 = vmax.f32 %v2470, 0.0
  %v2822 = vmax.f32 %v2473, 0.0
  %v2823 = vmax.f32 %v2476, 0.0
  %v2824 = vmax.f32 %v2479, 0.0
  %v2825 = vmax.f32 %v2482, 0.0
  %v2826 = vmax.f32 %v2485, 0.0
  %v2827 = vmax.f32 %v2488, 0.0
  %v2828 = vmax.f32 %v2491, 0.0
  %v2829 = vmax.f32 %v2494, 0.0
  %v2830 = vmax.f32 %v2497, 0.0
  %v2831 = vmax.f32 %v2500, 0.0
  %v2832 = vmax.f32 %v2503, 0.0
  %v2833 = vmax.f32 %v2506, 0.0
  %v2834 = vmax.f32 %v2509, 0.0
  %v2835 = vmax.f32 %v2512, 0.0
  %v2836 = vmax.f32 %v2515, 0.0
  %v2837 = vmax.f32 %v2518, 0.0
  %v2838 = vmax.f32 %v2521, 0.0
  %v2839 = vmax.f32 %v2524, 0.0
  %v2840 = vmax.f32 %v2527, 0.0
  %v2841 = vmax.f32 %v2530, 0.0
  %v2842 = vmax.f32 %v2533, 0.0
  %v2843 = vmax.f32 %v2536, 0.0
  %v2844 = vmax.f32 %v2539, 0.0
  %v2845 = vmax.f32 %v2542, 0.0
  %v2846 = vmax.f32 %v2545, 0.0
  %v2847 = vmax.f32 %v2548, 0.0
  %v2848 = vmax.f32 %v2551, 0.0
  %v2849 = vmax.f32 %v2554, 0.0
  %v2850 = vmax.f32 %v2557, 0.0
  %v2851 = vmax.f32 %v2560, 0.0
  %v2852 = vmax.f32 %v2563, 0.0
  %v2853 = vmax.f32 %v2566, 0.0
  %v2854 = vmax.f32 %v2569, 0.0
  %v2855 = vmax.f32 %v2572, 0.0
  %v2856 = vmax.f32 %v2575, 0.0
  %v2857 = vmax.f32 %v2578, 0.0
  %v2858 = vmax.f32 %v2581, 0.0
  %v2859 = vmax.f32 %v2584, 0.0
  %v2860 = vmax.f32 %v2587, 0.0
  %v2861 = vmax.f32 %v2590, 0.0
  %v2862 = vmax.f32 %v2593, 0.0
  %v2863 = vmax.f32 %v2596, 0.0
  %v2864 = vmax.f32 %v2599, 0.0
  %v2865 = vmax.f32 %v2602, 0.0
  %v2866 = vmax.f32 %v2605, 0.0
  %v2867 = vmax.f32 %v2608, 0.0
  %v2868 = vmax.f32 %v2611, 0.0
  %v2869 = vmax.f32 %v2614, 0.0
  %v2870 = vmax.f32 %v2617, 0.0
  %v2871 = vmax.f32 %v2620, 0.0
  %v2872 = vmax.f32 %v2623, 0.0
  %v2873 = vmax.f32 %v2626, 0.0
  %v2874 = vmax.f32 %v2629, 0.0
  %v2875 = vmax.f32 %v2632, 0.0
  %v2876 = vmax.f32 %v2635, 0.0
  %v2877 = vmax.f32 %v2638, 0.0
  %v2878 = vmax.f32 %v2641, 0.0
  %v2879 = vmax.f32 %v2644, 0.0
  %v2880 = vmax.f32 %v2647, 0.0
  %v2881 = vmax.f32 %v2650, 0.0
  %v2882 = vmax.f32 %v2653, 0.0
  %v2883 = vmax.f32 %v2656, 0.0
  %v2884 = vmax.f32 %v2659, 0.0
  %v2885 = vmax.f32 %v2662, 0.0
  %v2886 = vmax.f32 %v2665, 0.0
  %v2887 = vmax.f32 %v2668, 0.0
  %v2888 = vmax.f32 %v2671, 0.0
  %v2889 = vmax.f32 %v2674, 0.0
  %v2890 = vmax.f32 %v2677, 0.0
  %v2891 = vmax.f32 %v2680, 0.0
  %v2892 = vmax.f32 %v2683, 0.0
  %v2893 = vmax.f32 %v2686, 0.0
  %v2894 = vmax.f32 %v2689, 0.0
  %v2895 = vmax.f32 %v2692, 0.0
  %v2896 = vmax.f32 %v2695, 0.0
  %v2897 = vmax.f32 %v2698, 0.0
  %v2898 = vmax.f32 %v2701, 0.0
  %v2899 = vmax.f32 %v2704, 0.0
  %v2900 = vmax.f32 %v2707, 0.0
  %v2901 = vmax.f32 %v2710, 0.0
  %v2902 = vmax.f32 %v2713, 0.0
  %v2903 = vmax.f32 %v2716, 0.0
  %v2904 = vmax.f32 %v2719, 0.0
  %v2905 = vmax.f32 %v2722, 0.0
  %v2906 = vmax.f32 %v2725, 0.0
  %v2907 = vmax.f32 %v2728, 0.0
  %v2908 = vmax.f32 %v2731, 0.0
  %v2909 = vmax.f32 %v2734, 0.0
  %v2910 = vmax.f32 %v2737, 0.0
  %v2911 = vmax.f32 %v2740, 0.0
  %v2912 = vmax.f32 %v2743, 0.0
  %v2913 = vmax.f32 %v2746, 0.0
  %v2914 = vmax.f32 %v2749, 0.0
  %v2915 = vmax.f32 %v2752, 0.0
  %v2916 = vmax.f32 %v2755, 0.0
  %v2917 = vmax.f32 %v2758, 0.0
  %v2918 = vmax.f32 %v2761, 0.0
  %v2919 = vmax.f32 %v2764, 0.0
  %v2920 = vmax.f32 %v2767, 0.0
  %v2921 = vmax.f32 %v2770, 0.0
  %v2922 = vmax.f32 %v2773, 0.0
  %v2923 = vmax.f32 %v2776, 0.0
  %v2924 = vmax.f32 %v2779, 0.0
  %v2925 = vmax.f32 %v2782, 0.0
  %v2926 = vmax.f32 %v2785, 0.0
  %v2927 = vmax.f32 %v2788, 0.0
  %v2928 = vmax.f32 %v2791, 0.0
  %v2929 = vmax.f32 %v2794, 0.0
  %v2930 = vmax.f32 %v2797, 0.0
  %v2931 = vmax.f32 %v2800, 0.0
  %v2932 = vmax.f32 %v2803, 0.0
  %v2933 = vld [vmem:[%s7] sm:$0xff]
  %v2934 = vld [vmem:[%s7 + $0x8] sm:$0xff]
  %v2935 = vld [vmem:[%s7 + $0x10] sm:$0xff]
  %v2936 = vld [vmem:[%s7 + $0x18] sm:$0xff]
  %v2937 = vld [vmem:[%s8] sm:$0x1]
  %v2939 = vperm.slane %v2937, 0
  %v2942 = vsel %vm168, %v2805, 0
  %v2945 = vsel %vm168, %v2806, 0
  %v2948 = vsel %vm168, %v2807, 0
  %v2951 = vsel %vm168, %v2808, 0
  %v2954 = vsel %vm168, %v2809, 0
  %v2957 = vsel %vm168, %v2810, 0
  %v2960 = vsel %vm168, %v2811, 0
  %v2963 = vsel %vm168, %v2812, 0
  %v2966 = vsel %vm168, %v2813, 0
  %v2969 = vsel %vm168, %v2814, 0
  %v2972 = vsel %vm168, %v2815, 0
  %v2975 = vsel %vm168, %v2816, 0
  %v2978 = vsel %vm168, %v2817, 0
  %v2981 = vsel %vm168, %v2818, 0
  %v2984 = vsel %vm168, %v2819, 0
  %v2987 = vsel %vm168, %v2820, 0
  %v2990 = vsel %vm168, %v2821, 0
  %v2993 = vsel %vm168, %v2822, 0
  %v2996 = vsel %vm168, %v2823, 0
  %v2999 = vsel %vm168, %v2824, 0
  %v3002 = vsel %vm168, %v2825, 0
  %v3005 = vsel %vm168, %v2826, 0
  %v3008 = vsel %vm168, %v2827, 0
  %v3011 = vsel %vm168, %v2828, 0
  %v3014 = vsel %vm168, %v2829, 0
  %v3017 = vsel %vm168, %v2830, 0
  %v3020 = vsel %vm168, %v2831, 0
  %v3023 = vsel %vm168, %v2832, 0
  %v3026 = vsel %vm168, %v2833, 0
  %v3029 = vsel %vm168, %v2834, 0
  %v3032 = vsel %vm168, %v2835, 0
  %v3035 = vsel %vm168, %v2836, 0
  %v3038 = vsel %vm168, %v2837, 0
  %v3041 = vsel %vm168, %v2838, 0
  %v3044 = vsel %vm168, %v2839, 0
  %v3047 = vsel %vm168, %v2840, 0
  %v3050 = vsel %vm168, %v2841, 0
  %v3053 = vsel %vm168, %v2842, 0
  %v3056 = vsel %vm168, %v2843, 0
  %v3059 = vsel %vm168, %v2844, 0
  %v3062 = vsel %vm168, %v2845, 0
  %v3065 = vsel %vm168, %v2846, 0
  %v3068 = vsel %vm168, %v2847, 0
  %v3071 = vsel %vm168, %v2848, 0
  %v3074 = vsel %vm168, %v2849, 0
  %v3077 = vsel %vm168, %v2850, 0
  %v3080 = vsel %vm168, %v2851, 0
  %v3083 = vsel %vm168, %v2852, 0
  %v3086 = vsel %vm168, %v2853, 0
  %v3089 = vsel %vm168, %v2854, 0
  %v3092 = vsel %vm168, %v2855, 0
  %v3095 = vsel %vm168, %v2856, 0
  %v3098 = vsel %vm168, %v2857, 0
  %v3101 = vsel %vm168, %v2858, 0
  %v3104 = vsel %vm168, %v2859, 0
  %v3107 = vsel %vm168, %v2860, 0
  %v3110 = vsel %vm168, %v2861, 0
  %v3113 = vsel %vm168, %v2862, 0
  %v3116 = vsel %vm168, %v2863, 0
  %v3119 = vsel %vm168, %v2864, 0
  %v3122 = vsel %vm168, %v2865, 0
  %v3125 = vsel %vm168, %v2866, 0
  %v3128 = vsel %vm168, %v2867, 0
  %v3131 = vsel %vm168, %v2868, 0
  %v3134 = vsel %vm168, %v2869, 0
  %v3137 = vsel %vm168, %v2870, 0
  %v3140 = vsel %vm168, %v2871, 0
  %v3143 = vsel %vm168, %v2872, 0
  %v3146 = vsel %vm168, %v2873, 0
  %v3149 = vsel %vm168, %v2874, 0
  %v3152 = vsel %vm168, %v2875, 0
  %v3155 = vsel %vm168, %v2876, 0
  %v3158 = vsel %vm168, %v2877, 0
  %v3161 = vsel %vm168, %v2878, 0
  %v3164 = vsel %vm168, %v2879, 0
  %v3167 = vsel %vm168, %v2880, 0
  %v3170 = vsel %vm168, %v2881, 0
  %v3173 = vsel %vm168, %v2882, 0
  %v3176 = vsel %vm168, %v2883, 0
  %v3179 = vsel %vm168, %v2884, 0
  %v3182 = vsel %vm168, %v2885, 0
  %v3185 = vsel %vm168, %v2886, 0
  %v3188 = vsel %vm168, %v2887, 0
  %v3191 = vsel %vm168, %v2888, 0
  %v3194 = vsel %vm168, %v2889, 0
  %v3197 = vsel %vm168, %v2890, 0
  %v3200 = vsel %vm168, %v2891, 0
  %v3203 = vsel %vm168, %v2892, 0
  %v3206 = vsel %vm168, %v2893, 0
  %v3209 = vsel %vm168, %v2894, 0
  %v3212 = vsel %vm168, %v2895, 0
  %v3215 = vsel %vm168, %v2896, 0
  %v3218 = vsel %vm168, %v2897, 0
  %v3221 = vsel %vm168, %v2898, 0
  %v3224 = vsel %vm168, %v2899, 0
  %v3227 = vsel %vm168, %v2900, 0
  %v3230 = vsel %vm168, %v2901, 0
  %v3233 = vsel %vm168, %v2902, 0
  %v3236 = vsel %vm168, %v2903, 0
  %v3239 = vsel %vm168, %v2904, 0
  %v3242 = vsel %vm168, %v2905, 0
  %v3245 = vsel %vm168, %v2906, 0
  %v3248 = vsel %vm168, %v2907, 0
  %v3251 = vsel %vm168, %v2908, 0
  %v3254 = vsel %vm168, %v2909, 0
  %v3257 = vsel %vm168, %v2910, 0
  %v3260 = vsel %vm168, %v2911, 0
  %v3263 = vsel %vm168, %v2912, 0
  %v3266 = vsel %vm168, %v2913, 0
  %v3269 = vsel %vm168, %v2914, 0
  %v3272 = vsel %vm168, %v2915, 0
  %v3275 = vsel %vm168, %v2916, 0
  %v3278 = vsel %vm168, %v2917, 0
  %v3281 = vsel %vm168, %v2918, 0
  %v3284 = vsel %vm168, %v2919, 0
  %v3287 = vsel %vm168, %v2920, 0
  %v3290 = vsel %vm168, %v2921, 0
  %v3293 = vsel %vm168, %v2922, 0
  %v3296 = vsel %vm168, %v2923, 0
  %v3299 = vsel %vm168, %v2924, 0
  %v3302 = vsel %vm168, %v2925, 0
  %v3305 = vsel %vm168, %v2926, 0
  %v3308 = vsel %vm168, %v2927, 0
  %v3311 = vsel %vm168, %v2928, 0
  %v3314 = vsel %vm168, %v2929, 0
  %v3317 = vsel %vm168, %v2930, 0
  %v3320 = vsel %vm168, %v2931, 0
  %v3323 = vsel %vm168, %v2932, 0
  %3325 = vmatpush.msra.mxu0 0.0
  %3326 = vmatpush.msra.mxu0 0.0
  %3327 = vmatpush.msra.mxu0 0.0
  %3328 = vmatpush.msra.mxu0 0.0
  %3329 = vmatpush.msra.mxu0 0.0
  %3330 = vmatpush.msra.mxu0 0.0
  %3331 = vmatpush.msra.mxu0 0.0
  %3332 = vmatpush.msra.mxu0 0.0
  %3333 = vmatpush.msra.mxu0 0.0
  %3334 = vmatpush.msra.mxu0 0.0
  %3335 = vmatpush.msra.mxu0 0.0
  %3336 = vmatpush.msra.mxu0 0.0
  %3337 = vmatpush.msra.mxu0 %v2936
  %3338 = vmatpush.msra.mxu0 %v2935
  %3339 = vmatpush.msra.mxu0 %v2934
  %3340 = vmatpush.msra.mxu0 %v2933
  %3341 = vmatmul.f32.gmra.mxu0 %v2942
  %v3342 = vpop.f32.mrf.mxu0
  %v3343 = vadd.f32 %v2939, %v3342
  %3344 = vmatmul.f32.gmra.mxu0 %v2945
  %v3345 = vpop.f32.mrf.mxu0
  %v3346 = vadd.f32 %v2939, %v3345
  %3347 = vmatmul.f32.gmra.mxu0 %v2948
  %v3348 = vpop.f32.mrf.mxu0
  %v3349 = vadd.f32 %v2939, %v3348
  %3350 = vmatmul.f32.gmra.mxu0 %v2951
  %v3351 = vpop.f32.mrf.mxu0
  %v3352 = vadd.f32 %v2939, %v3351
  %3353 = vmatmul.f32.gmra.mxu0 %v2954
  %v3354 = vpop.f32.mrf.mxu0
  %v3355 = vadd.f32 %v2939, %v3354
  %3356 = vmatmul.f32.gmra.mxu0 %v2957
  %v3357 = vpop.f32.mrf.mxu0
  %v3358 = vadd.f32 %v2939, %v3357
  %3359 = vmatmul.f32.gmra.mxu0 %v2960
  %v3360 = vpop.f32.mrf.mxu0
  %v3361 = vadd.f32 %v2939, %v3360
  %3362 = vmatmul.f32.gmra.mxu0 %v2963
  %v3363 = vpop.f32.mrf.mxu0
  %v3364 = vadd.f32 %v2939, %v3363
  %3365 = vmatmul.f32.gmra.mxu0 %v2966
  %v3366 = vpop.f32.mrf.mxu0
  %v3367 = vadd.f32 %v2939, %v3366
  %3368 = vmatmul.f32.gmra.mxu0 %v2969
  %v3369 = vpop.f32.mrf.mxu0
  %v3370 = vadd.f32 %v2939, %v3369
  %3371 = vmatmul.f32.gmra.mxu0 %v2972
  %v3372 = vpop.f32.mrf.mxu0
  %v3373 = vadd.f32 %v2939, %v3372
  %3374 = vmatmul.f32.gmra.mxu0 %v2975
  %v3375 = vpop.f32.mrf.mxu0
  %v3376 = vadd.f32 %v2939, %v3375
  %3377 = vmatmul.f32.gmra.mxu0 %v2978
  %v3378 = vpop.f32.mrf.mxu0
  %v3379 = vadd.f32 %v2939, %v3378
  %3380 = vmatmul.f32.gmra.mxu0 %v2981
  %v3381 = vpop.f32.mrf.mxu0
  %v3382 = vadd.f32 %v2939, %v3381
  %3383 = vmatmul.f32.gmra.mxu0 %v2984
  %v3384 = vpop.f32.mrf.mxu0
  %v3385 = vadd.f32 %v2939, %v3384
  %3386 = vmatmul.f32.gmra.mxu0 %v2987
  %v3387 = vpop.f32.mrf.mxu0
  %v3388 = vadd.f32 %v2939, %v3387
  %3389 = vmatmul.f32.gmra.mxu0 %v2990
  %v3390 = vpop.f32.mrf.mxu0
  %v3391 = vadd.f32 %v2939, %v3390
  %3392 = vmatmul.f32.gmra.mxu0 %v2993
  %v3393 = vpop.f32.mrf.mxu0
  %v3394 = vadd.f32 %v2939, %v3393
  %3395 = vmatmul.f32.gmra.mxu0 %v2996
  %v3396 = vpop.f32.mrf.mxu0
  %v3397 = vadd.f32 %v2939, %v3396
  %3398 = vmatmul.f32.gmra.mxu0 %v2999
  %v3399 = vpop.f32.mrf.mxu0
  %v3400 = vadd.f32 %v2939, %v3399
  %3401 = vmatmul.f32.gmra.mxu0 %v3002
  %v3402 = vpop.f32.mrf.mxu0
  %v3403 = vadd.f32 %v2939, %v3402
  %3404 = vmatmul.f32.gmra.mxu0 %v3005
  %v3405 = vpop.f32.mrf.mxu0
  %v3406 = vadd.f32 %v2939, %v3405
  %3407 = vmatmul.f32.gmra.mxu0 %v3008
  %v3408 = vpop.f32.mrf.mxu0
  %v3409 = vadd.f32 %v2939, %v3408
  %3410 = vmatmul.f32.gmra.mxu0 %v3011
  %v3411 = vpop.f32.mrf.mxu0
  %v3412 = vadd.f32 %v2939, %v3411
  %3413 = vmatmul.f32.gmra.mxu0 %v3014
  %v3414 = vpop.f32.mrf.mxu0
  %v3415 = vadd.f32 %v2939, %v3414
  %3416 = vmatmul.f32.gmra.mxu0 %v3017
  %v3417 = vpop.f32.mrf.mxu0
  %v3418 = vadd.f32 %v2939, %v3417
  %3419 = vmatmul.f32.gmra.mxu0 %v3020
  %v3420 = vpop.f32.mrf.mxu0
  %v3421 = vadd.f32 %v2939, %v3420
  %3422 = vmatmul.f32.gmra.mxu0 %v3023
  %v3423 = vpop.f32.mrf.mxu0
  %v3424 = vadd.f32 %v2939, %v3423
  %3425 = vmatmul.f32.gmra.mxu0 %v3026
  %v3426 = vpop.f32.mrf.mxu0
  %v3427 = vadd.f32 %v2939, %v3426
  %3428 = vmatmul.f32.gmra.mxu0 %v3029
  %v3429 = vpop.f32.mrf.mxu0
  %v3430 = vadd.f32 %v2939, %v3429
  %3431 = vmatmul.f32.gmra.mxu0 %v3032
  %v3432 = vpop.f32.mrf.mxu0
  %v3433 = vadd.f32 %v2939, %v3432
  %3434 = vmatmul.f32.gmra.mxu0 %v3035
  %v3435 = vpop.f32.mrf.mxu0
  %v3436 = vadd.f32 %v2939, %v3435
  %3437 = vmatmul.f32.gmra.mxu0 %v3038
  %v3438 = vpop.f32.mrf.mxu0
  %v3439 = vadd.f32 %v2939, %v3438
  %3440 = vmatmul.f32.gmra.mxu0 %v3041
  %v3441 = vpop.f32.mrf.mxu0
  %v3442 = vadd.f32 %v2939, %v3441
  %3443 = vmatmul.f32.gmra.mxu0 %v3044
  %v3444 = vpop.f32.mrf.mxu0
  %v3445 = vadd.f32 %v2939, %v3444
  %3446 = vmatmul.f32.gmra.mxu0 %v3047
  %v3447 = vpop.f32.mrf.mxu0
  %v3448 = vadd.f32 %v2939, %v3447
  %3449 = vmatmul.f32.gmra.mxu0 %v3050
  %v3450 = vpop.f32.mrf.mxu0
  %v3451 = vadd.f32 %v2939, %v3450
  %3452 = vmatmul.f32.gmra.mxu0 %v3053
  %v3453 = vpop.f32.mrf.mxu0
  %v3454 = vadd.f32 %v2939, %v3453
  %3455 = vmatmul.f32.gmra.mxu0 %v3056
  %v3456 = vpop.f32.mrf.mxu0
  %v3457 = vadd.f32 %v2939, %v3456
  %3458 = vmatmul.f32.gmra.mxu0 %v3059
  %v3459 = vpop.f32.mrf.mxu0
  %v3460 = vadd.f32 %v2939, %v3459
  %3461 = vmatmul.f32.gmra.mxu0 %v3062
  %v3462 = vpop.f32.mrf.mxu0
  %v3463 = vadd.f32 %v2939, %v3462
  %3464 = vmatmul.f32.gmra.mxu0 %v3065
  %v3465 = vpop.f32.mrf.mxu0
  %v3466 = vadd.f32 %v2939, %v3465
  %3467 = vmatmul.f32.gmra.mxu0 %v3068
  %v3468 = vpop.f32.mrf.mxu0
  %v3469 = vadd.f32 %v2939, %v3468
  %3470 = vmatmul.f32.gmra.mxu0 %v3071
  %v3471 = vpop.f32.mrf.mxu0
  %v3472 = vadd.f32 %v2939, %v3471
  %3473 = vmatmul.f32.gmra.mxu0 %v3074
  %v3474 = vpop.f32.mrf.mxu0
  %v3475 = vadd.f32 %v2939, %v3474
  %3476 = vmatmul.f32.gmra.mxu0 %v3077
  %v3477 = vpop.f32.mrf.mxu0
  %v3478 = vadd.f32 %v2939, %v3477
  %3479 = vmatmul.f32.gmra.mxu0 %v3080
  %v3480 = vpop.f32.mrf.mxu0
  %v3481 = vadd.f32 %v2939, %v3480
  %3482 = vmatmul.f32.gmra.mxu0 %v3083
  %v3483 = vpop.f32.mrf.mxu0
  %v3484 = vadd.f32 %v2939, %v3483
  %3485 = vmatmul.f32.gmra.mxu0 %v3086
  %v3486 = vpop.f32.mrf.mxu0
  %v3487 = vadd.f32 %v2939, %v3486
  %3488 = vmatmul.f32.gmra.mxu0 %v3089
  %v3489 = vpop.f32.mrf.mxu0
  %v3490 = vadd.f32 %v2939, %v3489
  %3491 = vmatmul.f32.gmra.mxu0 %v3092
  %v3492 = vpop.f32.mrf.mxu0
  %v3493 = vadd.f32 %v2939, %v3492
  %3494 = vmatmul.f32.gmra.mxu0 %v3095
  %v3495 = vpop.f32.mrf.mxu0
  %v3496 = vadd.f32 %v2939, %v3495
  %3497 = vmatmul.f32.gmra.mxu0 %v3098
  %v3498 = vpop.f32.mrf.mxu0
  %v3499 = vadd.f32 %v2939, %v3498
  %3500 = vmatmul.f32.gmra.mxu0 %v3101
  %v3501 = vpop.f32.mrf.mxu0
  %v3502 = vadd.f32 %v2939, %v3501
  %3503 = vmatmul.f32.gmra.mxu0 %v3104
  %v3504 = vpop.f32.mrf.mxu0
  %v3505 = vadd.f32 %v2939, %v3504
  %3506 = vmatmul.f32.gmra.mxu0 %v3107
  %v3507 = vpop.f32.mrf.mxu0
  %v3508 = vadd.f32 %v2939, %v3507
  %3509 = vmatmul.f32.gmra.mxu0 %v3110
  %v3510 = vpop.f32.mrf.mxu0
  %v3511 = vadd.f32 %v2939, %v3510
  %3512 = vmatmul.f32.gmra.mxu0 %v3113
  %v3513 = vpop.f32.mrf.mxu0
  %v3514 = vadd.f32 %v2939, %v3513
  %3515 = vmatmul.f32.gmra.mxu0 %v3116
  %v3516 = vpop.f32.mrf.mxu0
  %v3517 = vadd.f32 %v2939, %v3516
  %3518 = vmatmul.f32.gmra.mxu0 %v3119
  %v3519 = vpop.f32.mrf.mxu0
  %v3520 = vadd.f32 %v2939, %v3519
  %3521 = vmatmul.f32.gmra.mxu0 %v3122
  %v3522 = vpop.f32.mrf.mxu0
  %v3523 = vadd.f32 %v2939, %v3522
  %3524 = vmatmul.f32.gmra.mxu0 %v3125
  %v3525 = vpop.f32.mrf.mxu0
  %v3526 = vadd.f32 %v2939, %v3525
  %3527 = vmatmul.f32.gmra.mxu0 %v3128
  %v3528 = vpop.f32.mrf.mxu0
  %v3529 = vadd.f32 %v2939, %v3528
  %3530 = vmatmul.f32.gmra.mxu0 %v3131
  %v3531 = vpop.f32.mrf.mxu0
  %v3532 = vadd.f32 %v2939, %v3531
  %3533 = vmatmul.f32.gmra.mxu0 %v3134
  %v3534 = vpop.f32.mrf.mxu0
  %v3535 = vadd.f32 %v2939, %v3534
  %3536 = vmatmul.f32.gmra.mxu0 %v3137
  %v3537 = vpop.f32.mrf.mxu0
  %v3538 = vadd.f32 %v2939, %v3537
  %3539 = vmatmul.f32.gmra.mxu0 %v3140
  %v3540 = vpop.f32.mrf.mxu0
  %v3541 = vadd.f32 %v2939, %v3540
  %3542 = vmatmul.f32.gmra.mxu0 %v3143
  %v3543 = vpop.f32.mrf.mxu0
  %v3544 = vadd.f32 %v2939, %v3543
  %3545 = vmatmul.f32.gmra.mxu0 %v3146
  %v3546 = vpop.f32.mrf.mxu0
  %v3547 = vadd.f32 %v2939, %v3546
  %3548 = vmatmul.f32.gmra.mxu0 %v3149
  %v3549 = vpop.f32.mrf.mxu0
  %v3550 = vadd.f32 %v2939, %v3549
  %3551 = vmatmul.f32.gmra.mxu0 %v3152
  %v3552 = vpop.f32.mrf.mxu0
  %v3553 = vadd.f32 %v2939, %v3552
  %3554 = vmatmul.f32.gmra.mxu0 %v3155
  %v3555 = vpop.f32.mrf.mxu0
  %v3556 = vadd.f32 %v2939, %v3555
  %3557 = vmatmul.f32.gmra.mxu0 %v3158
  %v3558 = vpop.f32.mrf.mxu0
  %v3559 = vadd.f32 %v2939, %v3558
  %3560 = vmatmul.f32.gmra.mxu0 %v3161
  %v3561 = vpop.f32.mrf.mxu0
  %v3562 = vadd.f32 %v2939, %v3561
  %3563 = vmatmul.f32.gmra.mxu0 %v3164
  %v3564 = vpop.f32.mrf.mxu0
  %v3565 = vadd.f32 %v2939, %v3564
  %3566 = vmatmul.f32.gmra.mxu0 %v3167
  %v3567 = vpop.f32.mrf.mxu0
  %v3568 = vadd.f32 %v2939, %v3567
  %3569 = vmatmul.f32.gmra.mxu0 %v3170
  %v3570 = vpop.f32.mrf.mxu0
  %v3571 = vadd.f32 %v2939, %v3570
  %3572 = vmatmul.f32.gmra.mxu0 %v3173
  %v3573 = vpop.f32.mrf.mxu0
  %v3574 = vadd.f32 %v2939, %v3573
  %3575 = vmatmul.f32.gmra.mxu0 %v3176
  %v3576 = vpop.f32.mrf.mxu0
  %v3577 = vadd.f32 %v2939, %v3576
  %3578 = vmatmul.f32.gmra.mxu0 %v3179
  %v3579 = vpop.f32.mrf.mxu0
  %v3580 = vadd.f32 %v2939, %v3579
  %3581 = vmatmul.f32.gmra.mxu0 %v3182
  %v3582 = vpop.f32.mrf.mxu0
  %v3583 = vadd.f32 %v2939, %v3582
  %3584 = vmatmul.f32.gmra.mxu0 %v3185
  %v3585 = vpop.f32.mrf.mxu0
  %v3586 = vadd.f32 %v2939, %v3585
  %3587 = vmatmul.f32.gmra.mxu0 %v3188
  %v3588 = vpop.f32.mrf.mxu0
  %v3589 = vadd.f32 %v2939, %v3588
  %3590 = vmatmul.f32.gmra.mxu0 %v3191
  %v3591 = vpop.f32.mrf.mxu0
  %v3592 = vadd.f32 %v2939, %v3591
  %3593 = vmatmul.f32.gmra.mxu0 %v3194
  %v3594 = vpop.f32.mrf.mxu0
  %v3595 = vadd.f32 %v2939, %v3594
  %3596 = vmatmul.f32.gmra.mxu0 %v3197
  %v3597 = vpop.f32.mrf.mxu0
  %v3598 = vadd.f32 %v2939, %v3597
  %3599 = vmatmul.f32.gmra.mxu0 %v3200
  %v3600 = vpop.f32.mrf.mxu0
  %v3601 = vadd.f32 %v2939, %v3600
  %3602 = vmatmul.f32.gmra.mxu0 %v3203
  %v3603 = vpop.f32.mrf.mxu0
  %v3604 = vadd.f32 %v2939, %v3603
  %3605 = vmatmul.f32.gmra.mxu0 %v3206
  %v3606 = vpop.f32.mrf.mxu0
  %v3607 = vadd.f32 %v2939, %v3606
  %3608 = vmatmul.f32.gmra.mxu0 %v3209
  %v3609 = vpop.f32.mrf.mxu0
  %v3610 = vadd.f32 %v2939, %v3609
  %3611 = vmatmul.f32.gmra.mxu0 %v3212
  %v3612 = vpop.f32.mrf.mxu0
  %v3613 = vadd.f32 %v2939, %v3612
  %3614 = vmatmul.f32.gmra.mxu0 %v3215
  %v3615 = vpop.f32.mrf.mxu0
  %v3616 = vadd.f32 %v2939, %v3615
  %3617 = vmatmul.f32.gmra.mxu0 %v3218
  %v3618 = vpop.f32.mrf.mxu0
  %v3619 = vadd.f32 %v2939, %v3618
  %3620 = vmatmul.f32.gmra.mxu0 %v3221
  %v3621 = vpop.f32.mrf.mxu0
  %v3622 = vadd.f32 %v2939, %v3621
  %3623 = vmatmul.f32.gmra.mxu0 %v3224
  %v3624 = vpop.f32.mrf.mxu0
  %v3625 = vadd.f32 %v2939, %v3624
  %3626 = vmatmul.f32.gmra.mxu0 %v3227
  %v3627 = vpop.f32.mrf.mxu0
  %v3628 = vadd.f32 %v2939, %v3627
  %3629 = vmatmul.f32.gmra.mxu0 %v3230
  %v3630 = vpop.f32.mrf.mxu0
  %v3631 = vadd.f32 %v2939, %v3630
  %3632 = vmatmul.f32.gmra.mxu0 %v3233
  %v3633 = vpop.f32.mrf.mxu0
  %v3634 = vadd.f32 %v2939, %v3633
  %3635 = vmatmul.f32.gmra.mxu0 %v3236
  %v3636 = vpop.f32.mrf.mxu0
  %v3637 = vadd.f32 %v2939, %v3636
  %3638 = vmatmul.f32.gmra.mxu0 %v3239
  %v3639 = vpop.f32.mrf.mxu0
  %v3640 = vadd.f32 %v2939, %v3639
  %3641 = vmatmul.f32.gmra.mxu0 %v3242
  %v3642 = vpop.f32.mrf.mxu0
  %v3643 = vadd.f32 %v2939, %v3642
  %3644 = vmatmul.f32.gmra.mxu0 %v3245
  %v3645 = vpop.f32.mrf.mxu0
  %v3646 = vadd.f32 %v2939, %v3645
  %3647 = vmatmul.f32.gmra.mxu0 %v3248
  %v3648 = vpop.f32.mrf.mxu0
  %v3649 = vadd.f32 %v2939, %v3648
  %3650 = vmatmul.f32.gmra.mxu0 %v3251
  %v3651 = vpop.f32.mrf.mxu0
  %v3652 = vadd.f32 %v2939, %v3651
  %3653 = vmatmul.f32.gmra.mxu0 %v3254
  %v3654 = vpop.f32.mrf.mxu0
  %v3655 = vadd.f32 %v2939, %v3654
  %3656 = vmatmul.f32.gmra.mxu0 %v3257
  %v3657 = vpop.f32.mrf.mxu0
  %v3658 = vadd.f32 %v2939, %v3657
  %3659 = vmatmul.f32.gmra.mxu0 %v3260
  %v3660 = vpop.f32.mrf.mxu0
  %v3661 = vadd.f32 %v2939, %v3660
  %3662 = vmatmul.f32.gmra.mxu0 %v3263
  %v3663 = vpop.f32.mrf.mxu0
  %v3664 = vadd.f32 %v2939, %v3663
  %3665 = vmatmul.f32.gmra.mxu0 %v3266
  %v3666 = vpop.f32.mrf.mxu0
  %v3667 = vadd.f32 %v2939, %v3666
  %3668 = vmatmul.f32.gmra.mxu0 %v3269
  %v3669 = vpop.f32.mrf.mxu0
  %v3670 = vadd.f32 %v2939, %v3669
  %3671 = vmatmul.f32.gmra.mxu0 %v3272
  %v3672 = vpop.f32.mrf.mxu0
  %v3673 = vadd.f32 %v2939, %v3672
  %3674 = vmatmul.f32.gmra.mxu0 %v3275
  %v3675 = vpop.f32.mrf.mxu0
  %v3676 = vadd.f32 %v2939, %v3675
  %3677 = vmatmul.f32.gmra.mxu0 %v3278
  %v3678 = vpop.f32.mrf.mxu0
  %v3679 = vadd.f32 %v2939, %v3678
  %3680 = vmatmul.f32.gmra.mxu0 %v3281
  %v3681 = vpop.f32.mrf.mxu0
  %v3682 = vadd.f32 %v2939, %v3681
  %3683 = vmatmul.f32.gmra.mxu0 %v3284
  %v3684 = vpop.f32.mrf.mxu0
  %v3685 = vadd.f32 %v2939, %v3684
  %3686 = vmatmul.f32.gmra.mxu0 %v3287
  %v3687 = vpop.f32.mrf.mxu0
  %v3688 = vadd.f32 %v2939, %v3687
  %3689 = vmatmul.f32.gmra.mxu0 %v3290
  %v3690 = vpop.f32.mrf.mxu0
  %v3691 = vadd.f32 %v2939, %v3690
  %3692 = vmatmul.f32.gmra.mxu0 %v3293
  %v3693 = vpop.f32.mrf.mxu0
  %v3694 = vadd.f32 %v2939, %v3693
  %3695 = vmatmul.f32.gmra.mxu0 %v3296
  %v3696 = vpop.f32.mrf.mxu0
  %v3697 = vadd.f32 %v2939, %v3696
  %3698 = vmatmul.f32.gmra.mxu0 %v3299
  %v3699 = vpop.f32.mrf.mxu0
  %v3700 = vadd.f32 %v2939, %v3699
  %3701 = vmatmul.f32.gmra.mxu0 %v3302
  %v3702 = vpop.f32.mrf.mxu0
  %v3703 = vadd.f32 %v2939, %v3702
  %3704 = vmatmul.f32.gmra.mxu0 %v3305
  %v3705 = vpop.f32.mrf.mxu0
  %v3706 = vadd.f32 %v2939, %v3705
  %3707 = vmatmul.f32.gmra.mxu0 %v3308
  %v3708 = vpop.f32.mrf.mxu0
  %v3709 = vadd.f32 %v2939, %v3708
  %3710 = vmatmul.f32.gmra.mxu0 %v3311
  %v3711 = vpop.f32.mrf.mxu0
  %v3712 = vadd.f32 %v2939, %v3711
  %3713 = vmatmul.f32.gmra.mxu0 %v3314
  %v3714 = vpop.f32.mrf.mxu0
  %v3715 = vadd.f32 %v2939, %v3714
  %3716 = vmatmul.f32.gmra.mxu0 %v3317
  %v3717 = vpop.f32.mrf.mxu0
  %v3718 = vadd.f32 %v2939, %v3717
  %3719 = vmatmul.f32.gmra.mxu0 %v3320
  %v3720 = vpop.f32.mrf.mxu0
  %v3721 = vadd.f32 %v2939, %v3720
  %3722 = vmatmul.f32.gmra.mxu0 %v3323
  %v3723 = vpop.f32.mrf.mxu0
  %v3724 = vadd.f32 %v2939, %v3723
  %3725 = vdwg.mxu0
  %v3726 = vlaneseq
  %v3727 = vand.u32 %v3726, 127
  %v3728 = vmax.f32 %v3343, -20.0
  %v3729 = vmax.f32 %v3346, -20.0
  %v3730 = vmax.f32 %v3349, -20.0
  %v3731 = vmax.f32 %v3352, -20.0
  %v3732 = vmax.f32 %v3355, -20.0
  %v3733 = vmax.f32 %v3358, -20.0
  %v3734 = vmax.f32 %v3361, -20.0
  %v3735 = vmax.f32 %v3364, -20.0
  %v3736 = vmax.f32 %v3367, -20.0
  %v3737 = vmax.f32 %v3370, -20.0
  %v3738 = vmax.f32 %v3373, -20.0
  %v3739 = vmax.f32 %v3376, -20.0
  %v3740 = vmax.f32 %v3379, -20.0
  %v3741 = vmax.f32 %v3382, -20.0
  %v3742 = vmax.f32 %v3385, -20.0
  %v3743 = vmax.f32 %v3388, -20.0
  %v3744 = vmax.f32 %v3391, -20.0
  %v3745 = vmax.f32 %v3394, -20.0
  %v3746 = vmax.f32 %v3397, -20.0
  %v3747 = vmax.f32 %v3400, -20.0
  %v3748 = vmax.f32 %v3403, -20.0
  %v3749 = vmax.f32 %v3406, -20.0
  %v3750 = vmax.f32 %v3409, -20.0
  %v3751 = vmax.f32 %v3412, -20.0
  %v3752 = vmax.f32 %v3415, -20.0
  %v3753 = vmax.f32 %v3418, -20.0
  %v3754 = vmax.f32 %v3421, -20.0
  %v3755 = vmax.f32 %v3424, -20.0
  %v3756 = vmax.f32 %v3427, -20.0
  %v3757 = vmax.f32 %v3430, -20.0
  %v3758 = vmax.f32 %v3433, -20.0
  %v3759 = vmax.f32 %v3436, -20.0
  %v3760 = vmax.f32 %v3439, -20.0
  %v3761 = vmax.f32 %v3442, -20.0
  %v3762 = vmax.f32 %v3445, -20.0
  %v3763 = vmax.f32 %v3448, -20.0
  %v3764 = vmax.f32 %v3451, -20.0
  %v3765 = vmax.f32 %v3454, -20.0
  %v3766 = vmax.f32 %v3457, -20.0
  %v3767 = vmax.f32 %v3460, -20.0
  %v3768 = vmax.f32 %v3463, -20.0
  %v3769 = vmax.f32 %v3466, -20.0
  %v3770 = vmax.f32 %v3469, -20.0
  %v3771 = vmax.f32 %v3472, -20.0
  %v3772 = vmax.f32 %v3475, -20.0
  %v3773 = vmax.f32 %v3478, -20.0
  %v3774 = vmax.f32 %v3481, -20.0
  %v3775 = vmax.f32 %v3484, -20.0
  %v3776 = vmax.f32 %v3487, -20.0
  %v3777 = vmax.f32 %v3490, -20.0
  %v3778 = vmax.f32 %v3493, -20.0
  %v3779 = vmax.f32 %v3496, -20.0
  %v3780 = vmax.f32 %v3499, -20.0
  %v3781 = vmax.f32 %v3502, -20.0
  %v3782 = vmax.f32 %v3505, -20.0
  %v3783 = vmax.f32 %v3508, -20.0
  %v3784 = vmax.f32 %v3511, -20.0
  %v3785 = vmax.f32 %v3514, -20.0
  %v3786 = vmax.f32 %v3517, -20.0
  %v3787 = vmax.f32 %v3520, -20.0
  %v3788 = vmax.f32 %v3523, -20.0
  %v3789 = vmax.f32 %v3526, -20.0
  %v3790 = vmax.f32 %v3529, -20.0
  %v3791 = vmax.f32 %v3532, -20.0
  %v3792 = vmax.f32 %v3535, -20.0
  %v3793 = vmax.f32 %v3538, -20.0
  %v3794 = vmax.f32 %v3541, -20.0
  %v3795 = vmax.f32 %v3544, -20.0
  %v3796 = vmax.f32 %v3547, -20.0
  %v3797 = vmax.f32 %v3550, -20.0
  %v3798 = vmax.f32 %v3553, -20.0
  %v3799 = vmax.f32 %v3556, -20.0
  %v3800 = vmax.f32 %v3559, -20.0
  %v3801 = vmax.f32 %v3562, -20.0
  %v3802 = vmax.f32 %v3565, -20.0
  %v3803 = vmax.f32 %v3568, -20.0
  %v3804 = vmax.f32 %v3571, -20.0
  %v3805 = vmax.f32 %v3574, -20.0
  %v3806 = vmax.f32 %v3577, -20.0
  %v3807 = vmax.f32 %v3580, -20.0
  %v3808 = vmax.f32 %v3583, -20.0
  %v3809 = vmax.f32 %v3586, -20.0
  %v3810 = vmax.f32 %v3589, -20.0
  %v3811 = vmax.f32 %v3592, -20.0
  %v3812 = vmax.f32 %v3595, -20.0
  %v3813 = vmax.f32 %v3598, -20.0
  %v3814 = vmax.f32 %v3601, -20.0
  %v3815 = vmax.f32 %v3604, -20.0
  %v3816 = vmax.f32 %v3607, -20.0
  %v3817 = vmax.f32 %v3610, -20.0
  %v3818 = vmax.f32 %v3613, -20.0
  %v3819 = vmax.f32 %v3616, -20.0
  %v3820 = vmax.f32 %v3619, -20.0
  %v3821 = vmax.f32 %v3622, -20.0
  %v3822 = vmax.f32 %v3625, -20.0
  %v3823 = vmax.f32 %v3628, -20.0
  %v3824 = vmax.f32 %v3631, -20.0
  %v3825 = vmax.f32 %v3634, -20.0
  %v3826 = vmax.f32 %v3637, -20.0
  %v3827 = vmax.f32 %v3640, -20.0
  %v3828 = vmax.f32 %v3643, -20.0
  %v3829 = vmax.f32 %v3646, -20.0
  %v3830 = vmax.f32 %v3649, -20.0
  %v3831 = vmax.f32 %v3652, -20.0
  %v3832 = vmax.f32 %v3655, -20.0
  %v3833 = vmax.f32 %v3658, -20.0
  %v3834 = vmax.f32 %v3661, -20.0
  %v3835 = vmax.f32 %v3664, -20.0
  %v3836 = vmax.f32 %v3667, -20.0
  %v3837 = vmax.f32 %v3670, -20.0
  %v3838 = vmax.f32 %v3673, -20.0
  %v3839 = vmax.f32 %v3676, -20.0
  %v3840 = vmax.f32 %v3679, -20.0
  %v3841 = vmax.f32 %v3682, -20.0
  %v3842 = vmax.f32 %v3685, -20.0
  %v3843 = vmax.f32 %v3688, -20.0
  %v3844 = vmax.f32 %v3691, -20.0
  %v3845 = vmax.f32 %v3694, -20.0
  %v3846 = vmax.f32 %v3697, -20.0
  %v3847 = vmax.f32 %v3700, -20.0
  %v3848 = vmax.f32 %v3703, -20.0
  %v3849 = vmax.f32 %v3706, -20.0
  %v3850 = vmax.f32 %v3709, -20.0
  %v3851 = vmax.f32 %v3712, -20.0
  %v3852 = vmax.f32 %v3715, -20.0
  %v3853 = vmax.f32 %v3718, -20.0
  %v3854 = vmax.f32 %v3721, -20.0
  %v3855 = vmax.f32 %v3724, -20.0
  %v3856 = vmin.f32 %v3728, 2.0
  %v3857 = vmin.f32 %v3729, 2.0
  %v3858 = vmin.f32 %v3730, 2.0
  %v3859 = vmin.f32 %v3731, 2.0
  %v3860 = vmin.f32 %v3732, 2.0
  %v3861 = vmin.f32 %v3733, 2.0
  %v3862 = vmin.f32 %v3734, 2.0
  %v3863 = vmin.f32 %v3735, 2.0
  %v3864 = vmin.f32 %v3736, 2.0
  %v3865 = vmin.f32 %v3737, 2.0
  %v3866 = vmin.f32 %v3738, 2.0
  %v3867 = vmin.f32 %v3739, 2.0
  %v3868 = vmin.f32 %v3740, 2.0
  %v3869 = vmin.f32 %v3741, 2.0
  %v3870 = vmin.f32 %v3742, 2.0
  %v3871 = vmin.f32 %v3743, 2.0
  %v3872 = vmin.f32 %v3744, 2.0
  %v3873 = vmin.f32 %v3745, 2.0
  %v3874 = vmin.f32 %v3746, 2.0
  %v3875 = vmin.f32 %v3747, 2.0
  %v3876 = vmin.f32 %v3748, 2.0
  %v3877 = vmin.f32 %v3749, 2.0
  %v3878 = vmin.f32 %v3750, 2.0
  %v3879 = vmin.f32 %v3751, 2.0
  %v3880 = vmin.f32 %v3752, 2.0
  %v3881 = vmin.f32 %v3753, 2.0
  %v3882 = vmin.f32 %v3754, 2.0
  %v3883 = vmin.f32 %v3755, 2.0
  %v3884 = vmin.f32 %v3756, 2.0
  %v3885 = vmin.f32 %v3757, 2.0
  %v3886 = vmin.f32 %v3758, 2.0
  %v3887 = vmin.f32 %v3759, 2.0
  %v3888 = vmin.f32 %v3760, 2.0
  %v3889 = vmin.f32 %v3761, 2.0
  %v3890 = vmin.f32 %v3762, 2.0
  %v3891 = vmin.f32 %v3763, 2.0
  %v3892 = vmin.f32 %v3764, 2.0
  %v3893 = vmin.f32 %v3765, 2.0
  %v3894 = vmin.f32 %v3766, 2.0
  %v3895 = vmin.f32 %v3767, 2.0
  %v3896 = vmin.f32 %v3768, 2.0
  %v3897 = vmin.f32 %v3769, 2.0
  %v3898 = vmin.f32 %v3770, 2.0
  %v3899 = vmin.f32 %v3771, 2.0
  %v3900 = vmin.f32 %v3772, 2.0
  %v3901 = vmin.f32 %v3773, 2.0
  %v3902 = vmin.f32 %v3774, 2.0
  %v3903 = vmin.f32 %v3775, 2.0
  %v3904 = vmin.f32 %v3776, 2.0
  %v3905 = vmin.f32 %v3777, 2.0
  %v3906 = vmin.f32 %v3778, 2.0
  %v3907 = vmin.f32 %v3779, 2.0
  %v3908 = vmin.f32 %v3780, 2.0
  %v3909 = vmin.f32 %v3781, 2.0
  %v3910 = vmin.f32 %v3782, 2.0
  %v3911 = vmin.f32 %v3783, 2.0
  %v3912 = vmin.f32 %v3784, 2.0
  %v3913 = vmin.f32 %v3785, 2.0
  %v3914 = vmin.f32 %v3786, 2.0
  %v3915 = vmin.f32 %v3787, 2.0
  %v3916 = vmin.f32 %v3788, 2.0
  %v3917 = vmin.f32 %v3789, 2.0
  %v3918 = vmin.f32 %v3790, 2.0
  %v3919 = vmin.f32 %v3791, 2.0
  %v3920 = vmin.f32 %v3792, 2.0
  %v3921 = vmin.f32 %v3793, 2.0
  %v3922 = vmin.f32 %v3794, 2.0
  %v3923 = vmin.f32 %v3795, 2.0
  %v3924 = vmin.f32 %v3796, 2.0
  %v3925 = vmin.f32 %v3797, 2.0
  %v3926 = vmin.f32 %v3798, 2.0
  %v3927 = vmin.f32 %v3799, 2.0
  %v3928 = vmin.f32 %v3800, 2.0
  %v3929 = vmin.f32 %v3801, 2.0
  %v3930 = vmin.f32 %v3802, 2.0
  %v3931 = vmin.f32 %v3803, 2.0
  %v3932 = vmin.f32 %v3804, 2.0
  %v3933 = vmin.f32 %v3805, 2.0
  %v3934 = vmin.f32 %v3806, 2.0
  %v3935 = vmin.f32 %v3807, 2.0
  %v3936 = vmin.f32 %v3808, 2.0
  %v3937 = vmin.f32 %v3809, 2.0
  %v3938 = vmin.f32 %v3810, 2.0
  %v3939 = vmin.f32 %v3811, 2.0
  %v3940 = vmin.f32 %v3812, 2.0
  %v3941 = vmin.f32 %v3813, 2.0
  %v3942 = vmin.f32 %v3814, 2.0
  %v3943 = vmin.f32 %v3815, 2.0
  %v3944 = vmin.f32 %v3816, 2.0
  %v3945 = vmin.f32 %v3817, 2.0
  %v3946 = vmin.f32 %v3818, 2.0
  %v3947 = vmin.f32 %v3819, 2.0
  %v3948 = vmin.f32 %v3820, 2.0
  %v3949 = vmin.f32 %v3821, 2.0
  %v3950 = vmin.f32 %v3822, 2.0
  %v3951 = vmin.f32 %v3823, 2.0
  %v3952 = vmin.f32 %v3824, 2.0
  %v3953 = vmin.f32 %v3825, 2.0
  %v3954 = vmin.f32 %v3826, 2.0
  %v3955 = vmin.f32 %v3827, 2.0
  %v3956 = vmin.f32 %v3828, 2.0
  %v3957 = vmin.f32 %v3829, 2.0
  %v3958 = vmin.f32 %v3830, 2.0
  %v3959 = vmin.f32 %v3831, 2.0
  %v3960 = vmin.f32 %v3832, 2.0
  %v3961 = vmin.f32 %v3833, 2.0
  %v3962 = vmin.f32 %v3834, 2.0
  %v3963 = vmin.f32 %v3835, 2.0
  %v3964 = vmin.f32 %v3836, 2.0
  %v3965 = vmin.f32 %v3837, 2.0
  %v3966 = vmin.f32 %v3838, 2.0
  %v3967 = vmin.f32 %v3839, 2.0
  %v3968 = vmin.f32 %v3840, 2.0
  %v3969 = vmin.f32 %v3841, 2.0
  %v3970 = vmin.f32 %v3842, 2.0
  %v3971 = vmin.f32 %v3843, 2.0
  %v3972 = vmin.f32 %v3844, 2.0
  %v3973 = vmin.f32 %v3845, 2.0
  %v3974 = vmin.f32 %v3846, 2.0
  %v3975 = vmin.f32 %v3847, 2.0
  %v3976 = vmin.f32 %v3848, 2.0
  %v3977 = vmin.f32 %v3849, 2.0
  %v3978 = vmin.f32 %v3850, 2.0
  %v3979 = vmin.f32 %v3851, 2.0
  %v3980 = vmin.f32 %v3852, 2.0
  %v3981 = vmin.f32 %v3853, 2.0
  %v3982 = vmin.f32 %v3854, 2.0
  %v3983 = vmin.f32 %v3855, 2.0
  %v3984 = vmul.f32 %v3856, 1.442695
  %v3985 = vpow.pop %v3984
  %v3986 = vmul.f32 %v3857, 1.442695
  %v3987 = vpow.pop %v3986
  %v3988 = vmul.f32 %v3858, 1.442695
  %v3989 = vpow.pop %v3988
  %v3990 = vmul.f32 %v3859, 1.442695
  %v3991 = vpow.pop %v3990
  %v3992 = vmul.f32 %v3860, 1.442695
  %v3993 = vpow.pop %v3992
  %v3994 = vmul.f32 %v3861, 1.442695
  %v3995 = vpow.pop %v3994
  %v3996 = vmul.f32 %v3862, 1.442695
  %v3997 = vpow.pop %v3996
  %v3998 = vmul.f32 %v3863, 1.442695
  %v3999 = vpow.pop %v3998
  %v4000 = vmul.f32 %v3864, 1.442695
  %v4001 = vpow.pop %v4000
  %v4002 = vmul.f32 %v3865, 1.442695
  %v4003 = vpow.pop %v4002
  %v4004 = vmul.f32 %v3866, 1.442695
  %v4005 = vpow.pop %v4004
  %v4006 = vmul.f32 %v3867, 1.442695
  %v4007 = vpow.pop %v4006
  %v4008 = vmul.f32 %v3868, 1.442695
  %v4009 = vpow.pop %v4008
  %v4010 = vmul.f32 %v3869, 1.442695
  %v4011 = vpow.pop %v4010
  %v4012 = vmul.f32 %v3870, 1.442695
  %v4013 = vpow.pop %v4012
  %v4014 = vmul.f32 %v3871, 1.442695
  %v4015 = vpow.pop %v4014
  %v4016 = vmul.f32 %v3872, 1.442695
  %v4017 = vpow.pop %v4016
  %v4018 = vmul.f32 %v3873, 1.442695
  %v4019 = vpow.pop %v4018
  %v4020 = vmul.f32 %v3874, 1.442695
  %v4021 = vpow.pop %v4020
  %v4022 = vmul.f32 %v3875, 1.442695
  %v4023 = vpow.pop %v4022
  %v4024 = vmul.f32 %v3876, 1.442695
  %v4025 = vpow.pop %v4024
  %v4026 = vmul.f32 %v3877, 1.442695
  %v4027 = vpow.pop %v4026
  %v4028 = vmul.f32 %v3878, 1.442695
  %v4029 = vpow.pop %v4028
  %v4030 = vmul.f32 %v3879, 1.442695
  %v4031 = vpow.pop %v4030
  %v4032 = vmul.f32 %v3880, 1.442695
  %v4033 = vpow.pop %v4032
  %v4034 = vmul.f32 %v3881, 1.442695
  %v4035 = vpow.pop %v4034
  %v4036 = vmul.f32 %v3882, 1.442695
  %v4037 = vpow.pop %v4036
  %v4038 = vmul.f32 %v3883, 1.442695
  %v4039 = vpow.pop %v4038
  %v4040 = vmul.f32 %v3884, 1.442695
  %v4041 = vpow.pop %v4040
  %v4042 = vmul.f32 %v3885, 1.442695
  %v4043 = vpow.pop %v4042
  %v4044 = vmul.f32 %v3886, 1.442695
  %v4045 = vpow.pop %v4044
  %v4046 = vmul.f32 %v3887, 1.442695
  %v4047 = vpow.pop %v4046
  %v4048 = vmul.f32 %v3888, 1.442695
  %v4049 = vpow.pop %v4048
  %v4050 = vmul.f32 %v3889, 1.442695
  %v4051 = vpow.pop %v4050
  %v4052 = vmul.f32 %v3890, 1.442695
  %v4053 = vpow.pop %v4052
  %v4054 = vmul.f32 %v3891, 1.442695
  %v4055 = vpow.pop %v4054
  %v4056 = vmul.f32 %v3892, 1.442695
  %v4057 = vpow.pop %v4056
  %v4058 = vmul.f32 %v3893, 1.442695
  %v4059 = vpow.pop %v4058
  %v4060 = vmul.f32 %v3894, 1.442695
  %v4061 = vpow.pop %v4060
  %v4062 = vmul.f32 %v3895, 1.442695
  %v4063 = vpow.pop %v4062
  %v4064 = vmul.f32 %v3896, 1.442695
  %v4065 = vpow.pop %v4064
  %v4066 = vmul.f32 %v3897, 1.442695
  %v4067 = vpow.pop %v4066
  %v4068 = vmul.f32 %v3898, 1.442695
  %v4069 = vpow.pop %v4068
  %v4070 = vmul.f32 %v3899, 1.442695
  %v4071 = vpow.pop %v4070
  %v4072 = vmul.f32 %v3900, 1.442695
  %v4073 = vpow.pop %v4072
  %v4074 = vmul.f32 %v3901, 1.442695
  %v4075 = vpow.pop %v4074
  %v4076 = vmul.f32 %v3902, 1.442695
  %v4077 = vpow.pop %v4076
  %v4078 = vmul.f32 %v3903, 1.442695
  %v4079 = vpow.pop %v4078
  %v4080 = vmul.f32 %v3904, 1.442695
  %v4081 = vpow.pop %v4080
  %v4082 = vmul.f32 %v3905, 1.442695
  %v4083 = vpow.pop %v4082
  %v4084 = vmul.f32 %v3906, 1.442695
  %v4085 = vpow.pop %v4084
  %v4086 = vmul.f32 %v3907, 1.442695
  %v4087 = vpow.pop %v4086
  %v4088 = vmul.f32 %v3908, 1.442695
  %v4089 = vpow.pop %v4088
  %v4090 = vmul.f32 %v3909, 1.442695
  %v4091 = vpow.pop %v4090
  %v4092 = vmul.f32 %v3910, 1.442695
  %v4093 = vpow.pop %v4092
  %v4094 = vmul.f32 %v3911, 1.442695
  %v4095 = vpow.pop %v4094
  %v4096 = vmul.f32 %v3912, 1.442695
  %v4097 = vpow.pop %v4096
  %v4098 = vmul.f32 %v3913, 1.442695
  %v4099 = vpow.pop %v4098
  %v4100 = vmul.f32 %v3914, 1.442695
  %v4101 = vpow.pop %v4100
  %v4102 = vmul.f32 %v3915, 1.442695
  %v4103 = vpow.pop %v4102
  %v4104 = vmul.f32 %v3916, 1.442695
  %v4105 = vpow.pop %v4104
  %v4106 = vmul.f32 %v3917, 1.442695
  %v4107 = vpow.pop %v4106
  %v4108 = vmul.f32 %v3918, 1.442695
  %v4109 = vpow.pop %v4108
  %v4110 = vmul.f32 %v3919, 1.442695
  %v4111 = vpow.pop %v4110
  %v4112 = vmul.f32 %v3920, 1.442695
  %v4113 = vpow.pop %v4112
  %v4114 = vmul.f32 %v3921, 1.442695
  %v4115 = vpow.pop %v4114
  %v4116 = vmul.f32 %v3922, 1.442695
  %v4117 = vpow.pop %v4116
  %v4118 = vmul.f32 %v3923, 1.442695
  %v4119 = vpow.pop %v4118
  %v4120 = vmul.f32 %v3924, 1.442695
  %v4121 = vpow.pop %v4120
  %v4122 = vmul.f32 %v3925, 1.442695
  %v4123 = vpow.pop %v4122
  %v4124 = vmul.f32 %v3926, 1.442695
  %v4125 = vpow.pop %v4124
  %v4126 = vmul.f32 %v3927, 1.442695
  %v4127 = vpow.pop %v4126
  %v4128 = vmul.f32 %v3928, 1.442695
  %v4129 = vpow.pop %v4128
  %v4130 = vmul.f32 %v3929, 1.442695
  %v4131 = vpow.pop %v4130
  %v4132 = vmul.f32 %v3930, 1.442695
  %v4133 = vpow.pop %v4132
  %v4134 = vmul.f32 %v3931, 1.442695
  %v4135 = vpow.pop %v4134
  %v4136 = vmul.f32 %v3932, 1.442695
  %v4137 = vpow.pop %v4136
  %v4138 = vmul.f32 %v3933, 1.442695
  %v4139 = vpow.pop %v4138
  %v4140 = vmul.f32 %v3934, 1.442695
  %v4141 = vpow.pop %v4140
  %v4142 = vmul.f32 %v3935, 1.442695
  %v4143 = vpow.pop %v4142
  %v4144 = vmul.f32 %v3936, 1.442695
  %v4145 = vpow.pop %v4144
  %v4146 = vmul.f32 %v3937, 1.442695
  %v4147 = vpow.pop %v4146
  %v4148 = vmul.f32 %v3938, 1.442695
  %v4149 = vpow.pop %v4148
  %v4150 = vmul.f32 %v3939, 1.442695
  %v4151 = vpow.pop %v4150
  %v4152 = vmul.f32 %v3940, 1.442695
  %v4153 = vpow.pop %v4152
  %v4154 = vmul.f32 %v3941, 1.442695
  %v4155 = vpow.pop %v4154
  %v4156 = vmul.f32 %v3942, 1.442695
  %v4157 = vpow.pop %v4156
  %v4158 = vmul.f32 %v3943, 1.442695
  %v4159 = vpow.pop %v4158
  %v4160 = vmul.f32 %v3944, 1.442695
  %v4161 = vpow.pop %v4160
  %v4162 = vmul.f32 %v3945, 1.442695
  %v4163 = vpow.pop %v4162
  %v4164 = vmul.f32 %v3946, 1.442695
  %v4165 = vpow.pop %v4164
  %v4166 = vmul.f32 %v3947, 1.442695
  %v4167 = vpow.pop %v4166
  %v4168 = vmul.f32 %v3948, 1.442695
  %v4169 = vpow.pop %v4168
  %v4170 = vmul.f32 %v3949, 1.442695
  %v4171 = vpow.pop %v4170
  %v4172 = vmul.f32 %v3950, 1.442695
  %v4173 = vpow.pop %v4172
  %v4174 = vmul.f32 %v3951, 1.442695
  %v4175 = vpow.pop %v4174
  %v4176 = vmul.f32 %v3952, 1.442695
  %v4177 = vpow.pop %v4176
  %v4178 = vmul.f32 %v3953, 1.442695
  %v4179 = vpow.pop %v4178
  %v4180 = vmul.f32 %v3954, 1.442695
  %v4181 = vpow.pop %v4180
  %v4182 = vmul.f32 %v3955, 1.442695
  %v4183 = vpow.pop %v4182
  %v4184 = vmul.f32 %v3956, 1.442695
  %v4185 = vpow.pop %v4184
  %v4186 = vmul.f32 %v3957, 1.442695
  %v4187 = vpow.pop %v4186
  %v4188 = vmul.f32 %v3958, 1.442695
  %v4189 = vpow.pop %v4188
  %v4190 = vmul.f32 %v3959, 1.442695
  %v4191 = vpow.pop %v4190
  %v4192 = vmul.f32 %v3960, 1.442695
  %v4193 = vpow.pop %v4192
  %v4194 = vmul.f32 %v3961, 1.442695
  %v4195 = vpow.pop %v4194
  %v4196 = vmul.f32 %v3962, 1.442695
  %v4197 = vpow.pop %v4196
  %v4198 = vmul.f32 %v3963, 1.442695
  %v4199 = vpow.pop %v4198
  %v4200 = vmul.f32 %v3964, 1.442695
  %v4201 = vpow.pop %v4200
  %v4202 = vmul.f32 %v3965, 1.442695
  %v4203 = vpow.pop %v4202
  %v4204 = vmul.f32 %v3966, 1.442695
  %v4205 = vpow.pop %v4204
  %v4206 = vmul.f32 %v3967, 1.442695
  %v4207 = vpow.pop %v4206
  %v4208 = vmul.f32 %v3968, 1.442695
  %v4209 = vpow.pop %v4208
  %v4210 = vmul.f32 %v3969, 1.442695
  %v4211 = vpow.pop %v4210
  %v4212 = vmul.f32 %v3970, 1.442695
  %v4213 = vpow.pop %v4212
  %v4214 = vmul.f32 %v3971, 1.442695
  %v4215 = vpow.pop %v4214
  %v4216 = vmul.f32 %v3972, 1.442695
  %v4217 = vpow.pop %v4216
  %v4218 = vmul.f32 %v3973, 1.442695
  %v4219 = vpow.pop %v4218
  %v4220 = vmul.f32 %v3974, 1.442695
  %v4221 = vpow.pop %v4220
  %v4222 = vmul.f32 %v3975, 1.442695
  %v4223 = vpow.pop %v4222
  %v4224 = vmul.f32 %v3976, 1.442695
  %v4225 = vpow.pop %v4224
  %v4226 = vmul.f32 %v3977, 1.442695
  %v4227 = vpow.pop %v4226
  %v4228 = vmul.f32 %v3978, 1.442695
  %v4229 = vpow.pop %v4228
  %v4230 = vmul.f32 %v3979, 1.442695
  %v4231 = vpow.pop %v4230
  %v4232 = vmul.f32 %v3980, 1.442695
  %v4233 = vpow.pop %v4232
  %v4234 = vmul.f32 %v3981, 1.442695
  %v4235 = vpow.pop %v4234
  %v4236 = vmul.f32 %v3982, 1.442695
  %v4237 = vpow.pop %v4236
  %v4238 = vmul.f32 %v3983, 1.442695
  %v4239 = vpow.pop %v4238
  %vm4240 = vcmp.lt.s32.totalorder %v3727, 4
  %v4241 = vsel %vm4240, %v3343, %v3985
  %v4242 = vsel %vm4240, %v3346, %v3987
  %v4243 = vsel %vm4240, %v3349, %v3989
  %v4244 = vsel %vm4240, %v3352, %v3991
  %v4245 = vsel %vm4240, %v3355, %v3993
  %v4246 = vsel %vm4240, %v3358, %v3995
  %v4247 = vsel %vm4240, %v3361, %v3997
  %v4248 = vsel %vm4240, %v3364, %v3999
  %v4249 = vsel %vm4240, %v3367, %v4001
  %v4250 = vsel %vm4240, %v3370, %v4003
  %v4251 = vsel %vm4240, %v3373, %v4005
  %v4252 = vsel %vm4240, %v3376, %v4007
  %v4253 = vsel %vm4240, %v3379, %v4009
  %v4254 = vsel %vm4240, %v3382, %v4011
  %v4255 = vsel %vm4240, %v3385, %v4013
  %v4256 = vsel %vm4240, %v3388, %v4015
  %v4257 = vsel %vm4240, %v3391, %v4017
  %v4258 = vsel %vm4240, %v3394, %v4019
  %v4259 = vsel %vm4240, %v3397, %v4021
  %v4260 = vsel %vm4240, %v3400, %v4023
  %v4261 = vsel %vm4240, %v3403, %v4025
  %v4262 = vsel %vm4240, %v3406, %v4027
  %v4263 = vsel %vm4240, %v3409, %v4029
  %v4264 = vsel %vm4240, %v3412, %v4031
  %v4265 = vsel %vm4240, %v3415, %v4033
  %v4266 = vsel %vm4240, %v3418, %v4035
  %v4267 = vsel %vm4240, %v3421, %v4037
  %v4268 = vsel %vm4240, %v3424, %v4039
  %v4269 = vsel %vm4240, %v3427, %v4041
  %v4270 = vsel %vm4240, %v3430, %v4043
  %v4271 = vsel %vm4240, %v3433, %v4045
  %v4272 = vsel %vm4240, %v3436, %v4047
  %v4273 = vsel %vm4240, %v3439, %v4049
  %v4274 = vsel %vm4240, %v3442, %v4051
  %v4275 = vsel %vm4240, %v3445, %v4053
  %v4276 = vsel %vm4240, %v3448, %v4055
  %v4277 = vsel %vm4240, %v3451, %v4057
  %v4278 = vsel %vm4240, %v3454, %v4059
  %v4279 = vsel %vm4240, %v3457, %v4061
  %v4280 = vsel %vm4240, %v3460, %v4063
  %v4281 = vsel %vm4240, %v3463, %v4065
  %v4282 = vsel %vm4240, %v3466, %v4067
  %v4283 = vsel %vm4240, %v3469, %v4069
  %v4284 = vsel %vm4240, %v3472, %v4071
  %v4285 = vsel %vm4240, %v3475, %v4073
  %v4286 = vsel %vm4240, %v3478, %v4075
  %v4287 = vsel %vm4240, %v3481, %v4077
  %v4288 = vsel %vm4240, %v3484, %v4079
  %v4289 = vsel %vm4240, %v3487, %v4081
  %v4290 = vsel %vm4240, %v3490, %v4083
  %v4291 = vsel %vm4240, %v3493, %v4085
  %v4292 = vsel %vm4240, %v3496, %v4087
  %v4293 = vsel %vm4240, %v3499, %v4089
  %v4294 = vsel %vm4240, %v3502, %v4091
  %v4295 = vsel %vm4240, %v3505, %v4093
  %v4296 = vsel %vm4240, %v3508, %v4095
  %v4297 = vsel %vm4240, %v3511, %v4097
  %v4298 = vsel %vm4240, %v3514, %v4099
  %v4299 = vsel %vm4240, %v3517, %v4101
  %v4300 = vsel %vm4240, %v3520, %v4103
  %v4301 = vsel %vm4240, %v3523, %v4105
  %v4302 = vsel %vm4240, %v3526, %v4107
  %v4303 = vsel %vm4240, %v3529, %v4109
  %v4304 = vsel %vm4240, %v3532, %v4111
  %v4305 = vsel %vm4240, %v3535, %v4113
  %v4306 = vsel %vm4240, %v3538, %v4115
  %v4307 = vsel %vm4240, %v3541, %v4117
  %v4308 = vsel %vm4240, %v3544, %v4119
  %v4309 = vsel %vm4240, %v3547, %v4121
  %v4310 = vsel %vm4240, %v3550, %v4123
  %v4311 = vsel %vm4240, %v3553, %v4125
  %v4312 = vsel %vm4240, %v3556, %v4127
  %v4313 = vsel %vm4240, %v3559, %v4129
  %v4314 = vsel %vm4240, %v3562, %v4131
  %v4315 = vsel %vm4240, %v3565, %v4133
  %v4316 = vsel %vm4240, %v3568, %v4135
  %v4317 = vsel %vm4240, %v3571, %v4137
  %v4318 = vsel %vm4240, %v3574, %v4139
  %v4319 = vsel %vm4240, %v3577, %v4141
  %v4320 = vsel %vm4240, %v3580, %v4143
  %v4321 = vsel %vm4240, %v3583, %v4145
  %v4322 = vsel %vm4240, %v3586, %v4147
  %v4323 = vsel %vm4240, %v3589, %v4149
  %v4324 = vsel %vm4240, %v3592, %v4151
  %v4325 = vsel %vm4240, %v3595, %v4153
  %v4326 = vsel %vm4240, %v3598, %v4155
  %v4327 = vsel %vm4240, %v3601, %v4157
  %v4328 = vsel %vm4240, %v3604, %v4159
  %v4329 = vsel %vm4240, %v3607, %v4161
  %v4330 = vsel %vm4240, %v3610, %v4163
  %v4331 = vsel %vm4240, %v3613, %v4165
  %v4332 = vsel %vm4240, %v3616, %v4167
  %v4333 = vsel %vm4240, %v3619, %v4169
  %v4334 = vsel %vm4240, %v3622, %v4171
  %v4335 = vsel %vm4240, %v3625, %v4173
  %v4336 = vsel %vm4240, %v3628, %v4175
  %v4337 = vsel %vm4240, %v3631, %v4177
  %v4338 = vsel %vm4240, %v3634, %v4179
  %v4339 = vsel %vm4240, %v3637, %v4181
  %v4340 = vsel %vm4240, %v3640, %v4183
  %v4341 = vsel %vm4240, %v3643, %v4185
  %v4342 = vsel %vm4240, %v3646, %v4187
  %v4343 = vsel %vm4240, %v3649, %v4189
  %v4344 = vsel %vm4240, %v3652, %v4191
  %v4345 = vsel %vm4240, %v3655, %v4193
  %v4346 = vsel %vm4240, %v3658, %v4195
  %v4347 = vsel %vm4240, %v3661, %v4197
  %v4348 = vsel %vm4240, %v3664, %v4199
  %v4349 = vsel %vm4240, %v3667, %v4201
  %v4350 = vsel %vm4240, %v3670, %v4203
  %v4351 = vsel %vm4240, %v3673, %v4205
  %v4352 = vsel %vm4240, %v3676, %v4207
  %v4353 = vsel %vm4240, %v3679, %v4209
  %v4354 = vsel %vm4240, %v3682, %v4211
  %v4355 = vsel %vm4240, %v3685, %v4213
  %v4356 = vsel %vm4240, %v3688, %v4215
  %v4357 = vsel %vm4240, %v3691, %v4217
  %v4358 = vsel %vm4240, %v3694, %v4219
  %v4359 = vsel %vm4240, %v3697, %v4221
  %v4360 = vsel %vm4240, %v3700, %v4223
  %v4361 = vsel %vm4240, %v3703, %v4225
  %v4362 = vsel %vm4240, %v3706, %v4227
  %v4363 = vsel %vm4240, %v3709, %v4229
  %v4364 = vsel %vm4240, %v3712, %v4231
  %v4365 = vsel %vm4240, %v3715, %v4233
  %v4366 = vsel %vm4240, %v3718, %v4235
  %v4367 = vsel %vm4240, %v3721, %v4237
  %v4368 = vsel %vm4240, %v3724, %v4239
  %vm4369 = vcmask 64512
  %4370 = vst.msk [vmem:[%s9] sm:$0xff] %vm4369, %v4241
  %4371 = vst.msk [vmem:[%s9 + $0x8] sm:$0xff] %vm4369, %v4242
  %4372 = vst.msk [vmem:[%s9 + $0x10] sm:$0xff] %vm4369, %v4243
  %4373 = vst.msk [vmem:[%s9 + $0x18] sm:$0xff] %vm4369, %v4244
  %4374 = vst.msk [vmem:[%s9 + $0x20] sm:$0xff] %vm4369, %v4245
  %4375 = vst.msk [vmem:[%s9 + $0x28] sm:$0xff] %vm4369, %v4246
  %4376 = vst.msk [vmem:[%s9 + $0x30] sm:$0xff] %vm4369, %v4247
  %4377 = vst.msk [vmem:[%s9 + $0x38] sm:$0xff] %vm4369, %v4248
  %4378 = vst.msk [vmem:[%s9 + $0x40] sm:$0xff] %vm4369, %v4249
  %4379 = vst.msk [vmem:[%s9 + $0x48] sm:$0xff] %vm4369, %v4250
  %4380 = vst.msk [vmem:[%s9 + $0x50] sm:$0xff] %vm4369, %v4251
  %4381 = vst.msk [vmem:[%s9 + $0x58] sm:$0xff] %vm4369, %v4252
  %4382 = vst.msk [vmem:[%s9 + $0x60] sm:$0xff] %vm4369, %v4253
  %4383 = vst.msk [vmem:[%s9 + $0x68] sm:$0xff] %vm4369, %v4254
  %4384 = vst.msk [vmem:[%s9 + $0x70] sm:$0xff] %vm4369, %v4255
  %4385 = vst.msk [vmem:[%s9 + $0x78] sm:$0xff] %vm4369, %v4256
  %4386 = vst.msk [vmem:[%s9 + $0x80] sm:$0xff] %vm4369, %v4257
  %4387 = vst.msk [vmem:[%s9 + $0x88] sm:$0xff] %vm4369, %v4258
  %4388 = vst.msk [vmem:[%s9 + $0x90] sm:$0xff] %vm4369, %v4259
  %4389 = vst.msk [vmem:[%s9 + $0x98] sm:$0xff] %vm4369, %v4260
  %4390 = vst.msk [vmem:[%s9 + $0xa0] sm:$0xff] %vm4369, %v4261
  %4391 = vst.msk [vmem:[%s9 + $0xa8] sm:$0xff] %vm4369, %v4262
  %4392 = vst.msk [vmem:[%s9 + $0xb0] sm:$0xff] %vm4369, %v4263
  %4393 = vst.msk [vmem:[%s9 + $0xb8] sm:$0xff] %vm4369, %v4264
  %4394 = vst.msk [vmem:[%s9 + $0xc0] sm:$0xff] %vm4369, %v4265
  %4395 = vst.msk [vmem:[%s9 + $0xc8] sm:$0xff] %vm4369, %v4266
  %4396 = vst.msk [vmem:[%s9 + $0xd0] sm:$0xff] %vm4369, %v4267
  %4397 = vst.msk [vmem:[%s9 + $0xd8] sm:$0xff] %vm4369, %v4268
  %4398 = vst.msk [vmem:[%s9 + $0xe0] sm:$0xff] %vm4369, %v4269
  %4399 = vst.msk [vmem:[%s9 + $0xe8] sm:$0xff] %vm4369, %v4270
  %4400 = vst.msk [vmem:[%s9 + $0xf0] sm:$0xff] %vm4369, %v4271
  %4401 = vst.msk [vmem:[%s9 + $0xf8] sm:$0xff] %vm4369, %v4272
  %4402 = vst.msk [vmem:[%s9 + $0x100] sm:$0xff] %vm4369, %v4273
  %4403 = vst.msk [vmem:[%s9 + $0x108] sm:$0xff] %vm4369, %v4274
  %4404 = vst.msk [vmem:[%s9 + $0x110] sm:$0xff] %vm4369, %v4275
  %4405 = vst.msk [vmem:[%s9 + $0x118] sm:$0xff] %vm4369, %v4276
  %4406 = vst.msk [vmem:[%s9 + $0x120] sm:$0xff] %vm4369, %v4277
  %4407 = vst.msk [vmem:[%s9 + $0x128] sm:$0xff] %vm4369, %v4278
  %4408 = vst.msk [vmem:[%s9 + $0x130] sm:$0xff] %vm4369, %v4279
  %4409 = vst.msk [vmem:[%s9 + $0x138] sm:$0xff] %vm4369, %v4280
  %4410 = vst.msk [vmem:[%s9 + $0x140] sm:$0xff] %vm4369, %v4281
  %4411 = vst.msk [vmem:[%s9 + $0x148] sm:$0xff] %vm4369, %v4282
  %4412 = vst.msk [vmem:[%s9 + $0x150] sm:$0xff] %vm4369, %v4283
  %4413 = vst.msk [vmem:[%s9 + $0x158] sm:$0xff] %vm4369, %v4284
  %4414 = vst.msk [vmem:[%s9 + $0x160] sm:$0xff] %vm4369, %v4285
  %4415 = vst.msk [vmem:[%s9 + $0x168] sm:$0xff] %vm4369, %v4286
  %4416 = vst.msk [vmem:[%s9 + $0x170] sm:$0xff] %vm4369, %v4287
  %4417 = vst.msk [vmem:[%s9 + $0x178] sm:$0xff] %vm4369, %v4288
  %4418 = vst.msk [vmem:[%s9 + $0x180] sm:$0xff] %vm4369, %v4289
  %4419 = vst.msk [vmem:[%s9 + $0x188] sm:$0xff] %vm4369, %v4290
  %4420 = vst.msk [vmem:[%s9 + $0x190] sm:$0xff] %vm4369, %v4291
  %4421 = vst.msk [vmem:[%s9 + $0x198] sm:$0xff] %vm4369, %v4292
  %4422 = vst.msk [vmem:[%s9 + $0x1a0] sm:$0xff] %vm4369, %v4293
  %4423 = vst.msk [vmem:[%s9 + $0x1a8] sm:$0xff] %vm4369, %v4294
  %4424 = vst.msk [vmem:[%s9 + $0x1b0] sm:$0xff] %vm4369, %v4295
  %4425 = vst.msk [vmem:[%s9 + $0x1b8] sm:$0xff] %vm4369, %v4296
  %4426 = vst.msk [vmem:[%s9 + $0x1c0] sm:$0xff] %vm4369, %v4297
  %4427 = vst.msk [vmem:[%s9 + $0x1c8] sm:$0xff] %vm4369, %v4298
  %4428 = vst.msk [vmem:[%s9 + $0x1d0] sm:$0xff] %vm4369, %v4299
  %4429 = vst.msk [vmem:[%s9 + $0x1d8] sm:$0xff] %vm4369, %v4300
  %4430 = vst.msk [vmem:[%s9 + $0x1e0] sm:$0xff] %vm4369, %v4301
  %4431 = vst.msk [vmem:[%s9 + $0x1e8] sm:$0xff] %vm4369, %v4302
  %4432 = vst.msk [vmem:[%s9 + $0x1f0] sm:$0xff] %vm4369, %v4303
  %4433 = vst.msk [vmem:[%s9 + $0x1f8] sm:$0xff] %vm4369, %v4304
  %4434 = vst.msk [vmem:[%s9 + $0x200] sm:$0xff] %vm4369, %v4305
  %4435 = vst.msk [vmem:[%s9 + $0x208] sm:$0xff] %vm4369, %v4306
  %4436 = vst.msk [vmem:[%s9 + $0x210] sm:$0xff] %vm4369, %v4307
  %4437 = vst.msk [vmem:[%s9 + $0x218] sm:$0xff] %vm4369, %v4308
  %4438 = vst.msk [vmem:[%s9 + $0x220] sm:$0xff] %vm4369, %v4309
  %4439 = vst.msk [vmem:[%s9 + $0x228] sm:$0xff] %vm4369, %v4310
  %4440 = vst.msk [vmem:[%s9 + $0x230] sm:$0xff] %vm4369, %v4311
  %4441 = vst.msk [vmem:[%s9 + $0x238] sm:$0xff] %vm4369, %v4312
  %4442 = vst.msk [vmem:[%s9 + $0x240] sm:$0xff] %vm4369, %v4313
  %4443 = vst.msk [vmem:[%s9 + $0x248] sm:$0xff] %vm4369, %v4314
  %4444 = vst.msk [vmem:[%s9 + $0x250] sm:$0xff] %vm4369, %v4315
  %4445 = vst.msk [vmem:[%s9 + $0x258] sm:$0xff] %vm4369, %v4316
  %4446 = vst.msk [vmem:[%s9 + $0x260] sm:$0xff] %vm4369, %v4317
  %4447 = vst.msk [vmem:[%s9 + $0x268] sm:$0xff] %vm4369, %v4318
  %4448 = vst.msk [vmem:[%s9 + $0x270] sm:$0xff] %vm4369, %v4319
  %4449 = vst.msk [vmem:[%s9 + $0x278] sm:$0xff] %vm4369, %v4320
  %4450 = vst.msk [vmem:[%s9 + $0x280] sm:$0xff] %vm4369, %v4321
  %4451 = vst.msk [vmem:[%s9 + $0x288] sm:$0xff] %vm4369, %v4322
  %4452 = vst.msk [vmem:[%s9 + $0x290] sm:$0xff] %vm4369, %v4323
  %4453 = vst.msk [vmem:[%s9 + $0x298] sm:$0xff] %vm4369, %v4324
  %4454 = vst.msk [vmem:[%s9 + $0x2a0] sm:$0xff] %vm4369, %v4325
  %4455 = vst.msk [vmem:[%s9 + $0x2a8] sm:$0xff] %vm4369, %v4326
  %4456 = vst.msk [vmem:[%s9 + $0x2b0] sm:$0xff] %vm4369, %v4327
  %4457 = vst.msk [vmem:[%s9 + $0x2b8] sm:$0xff] %vm4369, %v4328
  %4458 = vst.msk [vmem:[%s9 + $0x2c0] sm:$0xff] %vm4369, %v4329
  %4459 = vst.msk [vmem:[%s9 + $0x2c8] sm:$0xff] %vm4369, %v4330
  %4460 = vst.msk [vmem:[%s9 + $0x2d0] sm:$0xff] %vm4369, %v4331
  %4461 = vst.msk [vmem:[%s9 + $0x2d8] sm:$0xff] %vm4369, %v4332
  %4462 = vst.msk [vmem:[%s9 + $0x2e0] sm:$0xff] %vm4369, %v4333
  %4463 = vst.msk [vmem:[%s9 + $0x2e8] sm:$0xff] %vm4369, %v4334
  %4464 = vst.msk [vmem:[%s9 + $0x2f0] sm:$0xff] %vm4369, %v4335
  %4465 = vst.msk [vmem:[%s9 + $0x2f8] sm:$0xff] %vm4369, %v4336
  %4466 = vst.msk [vmem:[%s9 + $0x300] sm:$0xff] %vm4369, %v4337
  %4467 = vst.msk [vmem:[%s9 + $0x308] sm:$0xff] %vm4369, %v4338
  %4468 = vst.msk [vmem:[%s9 + $0x310] sm:$0xff] %vm4369, %v4339
  %4469 = vst.msk [vmem:[%s9 + $0x318] sm:$0xff] %vm4369, %v4340
  %4470 = vst.msk [vmem:[%s9 + $0x320] sm:$0xff] %vm4369, %v4341
  %4471 = vst.msk [vmem:[%s9 + $0x328] sm:$0xff] %vm4369, %v4342
  %4472 = vst.msk [vmem:[%s9 + $0x330] sm:$0xff] %vm4369, %v4343
  %4473 = vst.msk [vmem:[%s9 + $0x338] sm:$0xff] %vm4369, %v4344
  %4474 = vst.msk [vmem:[%s9 + $0x340] sm:$0xff] %vm4369, %v4345
  %4475 = vst.msk [vmem:[%s9 + $0x348] sm:$0xff] %vm4369, %v4346
  %4476 = vst.msk [vmem:[%s9 + $0x350] sm:$0xff] %vm4369, %v4347
  %4477 = vst.msk [vmem:[%s9 + $0x358] sm:$0xff] %vm4369, %v4348
  %4478 = vst.msk [vmem:[%s9 + $0x360] sm:$0xff] %vm4369, %v4349
  %4479 = vst.msk [vmem:[%s9 + $0x368] sm:$0xff] %vm4369, %v4350
  %4480 = vst.msk [vmem:[%s9 + $0x370] sm:$0xff] %vm4369, %v4351
  %4481 = vst.msk [vmem:[%s9 + $0x378] sm:$0xff] %vm4369, %v4352
  %4482 = vst.msk [vmem:[%s9 + $0x380] sm:$0xff] %vm4369, %v4353
  %4483 = vst.msk [vmem:[%s9 + $0x388] sm:$0xff] %vm4369, %v4354
  %4484 = vst.msk [vmem:[%s9 + $0x390] sm:$0xff] %vm4369, %v4355
  %4485 = vst.msk [vmem:[%s9 + $0x398] sm:$0xff] %vm4369, %v4356
  %4486 = vst.msk [vmem:[%s9 + $0x3a0] sm:$0xff] %vm4369, %v4357
  %4487 = vst.msk [vmem:[%s9 + $0x3a8] sm:$0xff] %vm4369, %v4358
  %4488 = vst.msk [vmem:[%s9 + $0x3b0] sm:$0xff] %vm4369, %v4359
  %4489 = vst.msk [vmem:[%s9 + $0x3b8] sm:$0xff] %vm4369, %v4360
  %4490 = vst.msk [vmem:[%s9 + $0x3c0] sm:$0xff] %vm4369, %v4361
  %4491 = vst.msk [vmem:[%s9 + $0x3c8] sm:$0xff] %vm4369, %v4362
  %4492 = vst.msk [vmem:[%s9 + $0x3d0] sm:$0xff] %vm4369, %v4363
  %4493 = vst.msk [vmem:[%s9 + $0x3d8] sm:$0xff] %vm4369, %v4364
  %4494 = vst.msk [vmem:[%s9 + $0x3e0] sm:$0xff] %vm4369, %v4365
  %4495 = vst.msk [vmem:[%s9 + $0x3e8] sm:$0xff] %vm4369, %v4366
  %4496 = vst.msk [vmem:[%s9 + $0x3f0] sm:$0xff] %vm4369, %v4367
  %4497 = vst.msk [vmem:[%s9 + $0x3f8] sm:$0xff] %vm4369, %v4368
  // Predicated region
  $region38: #{policy_forward.1} parent=0 // pred_check
    _
  $region39: #{policy_forward.1} parent=0 // pred_check_branch
    %4499 = sbr.rel (0) target = $region41
  $region40: #{policy_forward.1} parent=0 // pred_region
    _
  $region41: #{policy_forward.1} parent=0 // pred_fallthru
    _
  // Predicated region
  $region42: #{policy_forward.1} parent=0 // pred_check
    _
  $region43: #{policy_forward.1} parent=0 // pred_check_branch
    %4501 = sbr.rel (0) target = $region45
  $region44: #{policy_forward.1} parent=0 // pred_region
    _
  $region45: #{policy_forward.1} parent=0 // pred_fallthru
    _

</llo_original>
